<compile_context>
chip_gen: v5e
topology: v5e:2x2
jax: 0.10.0
libtpu: 0.0.40
codegen_flags: <defaults>
</compile_context>

<pallas_src>
import math
import functools

import jax
import jax.numpy as jnp
from jax.experimental import pallas as pl
from jax.experimental.pallas import tpu as pltpu


def _round_up(x, m):
    return (x + m - 1) // m * m


# ---------------------------------------------------------------------------
# Pallas kernel
# ---------------------------------------------------------------------------
def _layer_norm_padded(x, w, b, true_h, eps=1e-5):
    """LayerNorm over the true (unpadded) feature width.

    Padded lanes of x are exactly zero, so sums over the padded width equal the
    true sums; divide by true_h.  Padded lanes of w/b are zero, so the output's
    padded lanes stay exactly zero.
    """
    inv_h = 1.0 / float(true_h)
    mu = jnp.sum(x, axis=-1, keepdims=True) * inv_h
    ex2 = jnp.sum(x * x, axis=-1, keepdims=True) * inv_h
    var = ex2 - mu * mu
    return (x - mu) * jax.lax.rsqrt(var + eps) * w + b


def _encoder_kernel(
    x_ref, pe_ref,
    wqkv_ref, bqkv_ref, wo_ref, bo_ref,
    w1_ref, b1_ref, w2_ref, b2_ref,
    ln1w_ref, ln1b_ref, ln2w_ref, ln2b_ref,
    o_ref,
    *, nhead, num_layers, true_h,
):
    Bt, S, H = x_ref.shape            # H == true_h (unpadded input width)
    Hp = o_ref.shape[-1]              # lane-dense padded width
    dh = true_h // nhead
    Nt = Bt * S

    # positional encoding (broadcast over the batch-tile axis), flatten tokens,
    # pad feature dim H -> Hp in-kernel (padded lanes stay exactly zero).
    x = (x_ref[...] + pe_ref[...]).reshape(Nt, H)              # f32
    if Hp > H:
        x = jnp.concatenate(
            [x, jnp.zeros((Nt, Hp - H), jnp.float32)], axis=-1)

    for l in range(num_layers):                                # static unroll (2)
        # ---- self attention ------------------------------------------------
        xb = x.astype(jnp.bfloat16)
        qkv = jnp.dot(xb, wqkv_ref[l], preferred_element_type=jnp.float32)
        # single bf16 cast right after the bias add (item 3)
        qkv = (qkv + bqkv_ref[l]).astype(jnp.bfloat16)         # (Nt, 3*Hp)

        # Q/K/V blocks are Hp-aligned (free lane slices); heads live at
        # natural dh offsets inside [0:H) of each block.
        q = qkv[:, 0 * Hp:1 * Hp].reshape(Bt, S, Hp)
        k = qkv[:, 1 * Hp:2 * Hp].reshape(Bt, S, Hp)
        v = qkv[:, 2 * Hp:3 * Hp].reshape(Bt, S, Hp)

        heads = []
        for h in range(nhead):                                 # static unroll
            sl = slice(h * dh, (h + 1) * dh)
            qh = q[:, :, sl]                                   # (Bt, S, dh) bf16
            kh = k[:, :, sl]
            vh = v[:, :, sl]

            # 1/sqrt(dh) already folded into the Q weights/bias
            s = jnp.einsum('bqd,bkd->bqk', qh, kh,
                           preferred_element_type=jnp.float32)
            s = s - jnp.max(s, axis=-1, keepdims=True)
            p = jnp.exp(s)
            denom = jnp.sum(p, axis=-1, keepdims=True)
            if S > dh:
                # deferred normalization: scale the (Bt,S,dh) output instead of
                # the (Bt,S,S) probabilities (item 12)
                oh = jnp.einsum('bqk,bkd->bqd', p.astype(jnp.bfloat16), vh,
                                preferred_element_type=jnp.float32)
                oh = oh * pl.reciprocal(denom, approx=True)
            else:
                p = p * pl.reciprocal(denom, approx=True)
                oh = jnp.einsum('bqk,bkd->bqd', p.astype(jnp.bfloat16), vh,
                                preferred_element_type=jnp.float32)
            heads.append(oh)

        # one merged out-projection over the concatenated heads (item 2)
        attn_in = jnp.concatenate(heads, axis=-1).reshape(Nt, true_h)
        attn = jnp.dot(attn_in.astype(jnp.bfloat16), wo_ref[l],
                       preferred_element_type=jnp.float32) + bo_ref[l]

        # post-LN (PyTorch default norm_first=False)
        x = _layer_norm_padded(x + attn, ln1w_ref[l], ln1b_ref[l], true_h)

        # ---- feed forward (dim_feedforward == hidden_size) -------------------
        ff = jnp.dot(x.astype(jnp.bfloat16), w1_ref[l],
                     preferred_element_type=jnp.float32) + b1_ref[l]
        ff = jnp.maximum(ff, 0.0)                              # relu (default)
        ff = jnp.dot(ff.astype(jnp.bfloat16), w2_ref[l],
                     preferred_element_type=jnp.float32) + b2_ref[l]

        x = _layer_norm_padded(x + ff, ln2w_ref[l], ln2b_ref[l], true_h)

    # lane-dense bf16 store (item 10); host slices [:B,:,:H] and casts to f32
    o_ref[...] = x.reshape(Bt, S, Hp).astype(o_ref.dtype)


# ---------------------------------------------------------------------------
# Glue: positional encoding, synthetic params, padded-layout prep, wrapper
# ---------------------------------------------------------------------------
def make_positional_encoding(seq_len, hidden_size):
    assert hidden_size % 2 == 0, "PositionalEncoding assumes even hidden_size"
    position = jnp.arange(seq_len, dtype=jnp.float32)[:, None]
    div_term = jnp.exp(
        jnp.arange(0, hidden_size, 2, dtype=jnp.float32)
        * (-math.log(10000.0) / hidden_size))
    pe = jnp.zeros((seq_len, hidden_size), jnp.float32)
    pe = pe.at[:, 0::2].set(jnp.sin(position * div_term))
    pe = pe.at[:, 1::2].set(jnp.cos(position * div_term))
    return pe[None]                                            # (1, S, H)


def init_params(key, hidden_size, num_layers=2):
    """Deterministic synthetic parameters (same logical shapes as the PyTorch
    module). Linear weights stored pre-transposed: (in_features, out)."""
    H = hidden_size
    ks = jax.random.split(key, 8 * num_layers)
    p = {}
    p["wqkv"] = jnp.stack([0.02 * jax.random.normal(ks[8 * l + 0], (H, 3 * H))
                           for l in range(num_layers)])
    p["bqkv"] = jnp.stack([0.02 * jax.random.normal(ks[8 * l + 1], (1, 3 * H))
                           for l in range(num_layers)])
    p["wo"] = jnp.stack([0.02 * jax.random.normal(ks[8 * l + 2], (H, H))
                         for l in range(num_layers)])
    p["bo"] = jnp.stack([0.02 * jax.random.normal(ks[8 * l + 3], (1, H))
                         for l in range(num_layers)])
    p["w1"] = jnp.stack([0.02 * jax.random.normal(ks[8 * l + 4], (H, H))
                         for l in range(num_layers)])
    p["b1"] = jnp.stack([0.02 * jax.random.normal(ks[8 * l + 5], (1, H))
                         for l in range(num_layers)])
    p["w2"] = jnp.stack([0.02 * jax.random.normal(ks[8 * l + 6], (H, H))
                         for l in range(num_layers)])
    p["b2"] = jnp.stack([0.02 * jax.random.normal(ks[8 * l + 7], (1, H))
                         for l in range(num_layers)])
    p["ln1w"] = jnp.ones((num_layers, 1, H), jnp.float32)
    p["ln1b"] = jnp.zeros((num_layers, 1, H), jnp.float32)
    p["ln2w"] = jnp.ones((num_layers, 1, H), jnp.float32)
    p["ln2b"] = jnp.zeros((num_layers, 1, H), jnp.float32)
    return p


def prepare_params(params, H, nhead, num_layers):
    """Re-layout true-shape params into the lane-dense padded kernel layout.

    Only the feature dim is padded H -> Hp; heads are packed at TRUE dh inside
    each Hp-wide Q/K/V block (no per-head dh_p padding).  Matmul weights are
    cast to bf16; biases / LN params stay f32.  1/sqrt(dh) is folded into Q.
    """
    dh = H // nhead
    Hp = _round_up(H, 128)
    L = num_layers
    scale = 1.0 / math.sqrt(dh)

    wqkv = jnp.zeros((L, Hp, 3 * Hp), jnp.float32)
    bqkv = jnp.zeros((L, 1, 3 * Hp), jnp.float32)
    wo = jnp.zeros((L, H, Hp), jnp.float32)      # contraction K = true H
    bo = jnp.zeros((L, 1, Hp), jnp.float32)
    w1 = jnp.zeros((L, Hp, Hp), jnp.float32)
    b1 = jnp.zeros((L, 1, Hp), jnp.float32)
    w2 = jnp.zeros((L, Hp, Hp), jnp.float32)
    b2 = jnp.zeros((L, 1, Hp), jnp.float32)
    ln1w = jnp.zeros((L, 1, Hp), jnp.float32)
    ln1b = jnp.zeros((L, 1, Hp), jnp.float32)
    ln2w = jnp.zeros((L, 1, Hp), jnp.float32)
    ln2b = jnp.zeros((L, 1, Hp), jnp.float32)

    for l in range(L):
        wq = params["wqkv"][l][:, 0:H] * scale          # fold 1/sqrt(dh) into Q
        wk = params["wqkv"][l][:, H:2 * H]
        wv = params["wqkv"][l][:, 2 * H:3 * H]
        bq = params["bqkv"][l][0, 0:H] * scale
        bk = params["bqkv"][l][0, H:2 * H]
        bv = params["bqkv"][l][0, 2 * H:3 * H]

        wqkv = wqkv.at[l, :H, 0 * Hp:0 * Hp + H].set(wq)
        wqkv = wqkv.at[l, :H, 1 * Hp:1 * Hp + H].set(wk)
        wqkv = wqkv.at[l, :H, 2 * Hp:2 * Hp + H].set(wv)
        bqkv = bqkv.at[l, 0, 0 * Hp:0 * Hp + H].set(bq)
        bqkv = bqkv.at[l, 0, 1 * Hp:1 * Hp + H].set(bk)
        bqkv = bqkv.at[l, 0, 2 * Hp:2 * Hp + H].set(bv)

        wo = wo.at[l, :, :H].set(params["wo"][l])
        bo = bo.at[l, 0, :H].set(params["bo"][l][0])
        w1 = w1.at[l, :H, :H].set(params["w1"][l])
        b1 = b1.at[l, 0, :H].set(params["b1"][l][0])
        w2 = w2.at[l, :H, :H].set(params["w2"][l])
        b2 = b2.at[l, 0, :H].set(params["b2"][l][0])
        ln1w = ln1w.at[l, 0, :H].set(params["ln1w"][l][0])
        ln1b = ln1b.at[l, 0, :H].set(params["ln1b"][l][0])
        ln2w = ln2w.at[l, 0, :H].set(params["ln2w"][l][0])
        ln2b = ln2b.at[l, 0, :H].set(params["ln2b"][l][0])

    bf16 = jnp.bfloat16
    ordered = [
        wqkv.astype(bf16), bqkv, wo.astype(bf16), bo,
        w1.astype(bf16), b1, w2.astype(bf16), b2,
        ln1w, ln1b, ln2w, ln2b,
    ]
    return ordered, Hp


def sequence_encoder(x, params, *, nhead, num_layers=2, tokens_per_block=512):
    B, S, H = x.shape
    assert H % nhead == 0
    assert S <= 1024, "PositionalEncoding max_len is 1024"

    ordered, Hp = prepare_params(params, H, nhead, num_layers)

    # batch tile: target ~tokens_per_block tokens per grid step (MXU M fill),
    # but keep >= 2 grid steps when B >= 2 so both v7x TensorCores get work.
    bt = min(B, max(1, tokens_per_block // S))
    if B >= 2:
        bt = min(bt, pl.cdiv(B, 2))
    bt = max(bt, 1)
    G = pl.cdiv(B, bt)
    Bp = G * bt

    x_in = x if Bp == B else jnp.pad(x, ((0, Bp - B), (0, 0), (0, 0)))
    pe = make_positional_encoding(S, H)                        # (1, S, H) f32

    # ---- VMEM budget (item 5 / 7) ----------------------------------------
    weight_bytes = sum(int(a.size) * a.dtype.itemsize for a in ordered)
    nt = bt * S
    act_bytes = (
        nt * 3 * Hp * 6                 # qkv f32 result + bf16 copy
        + nt * Hp * 4 * 6               # x / attn / ff / LN temporaries
        + nhead * bt * S * S * 8        # scores + probabilities
        + nt * H * 6                    # concatenated head outputs
    )
    io_bytes = 2 * (bt * S * H * 4 + S * H * 4 + bt * S * Hp * 2)
    needed = 2 * weight_bytes + io_bytes + act_bytes + (4 << 20)
    try:
        cap = int(getattr(pltpu.get_tpu_info(), "vmem_capacity_bytes",
                          128 << 20))
    except Exception:
        cap = 64 << 20                  # conservative (v7x per-core)
    vmem_limit = int(min(max(needed, 32 << 20),
                         max(cap - (8 << 20), 32 << 20),
                         100 << 20))

    kernel = functools.partial(
        _encoder_kernel, nhead=nhead, num_layers=num_layers, true_h=H)

    def _build(single_buffer_weights):
        def wspec(arr):
            nd = arr.ndim
            idx = lambda i, _nd=nd: (0,) * _nd
            if single_buffer_weights:
                # constant index_map -> never re-DMA'd; single buffer (item 6)
                return pl.BlockSpec(arr.shape, idx,
                                    pipeline_mode=pl.Buffered(1))
            return pl.BlockSpec(arr.shape, idx)

        grid_spec = pltpu.PrefetchScalarGridSpec(
            num_scalar_prefetch=0,
            grid=(G,),
            in_specs=[
                pl.BlockSpec((bt, S, H), lambda i: (i, 0, 0)),   # x (unpadded)
                pl.BlockSpec((1, S, H), lambda i: (0, 0, 0)),    # pe (constant)
            ] + [wspec(a) for a in ordered],                     # weights
            out_specs=pl.BlockSpec((bt, S, Hp), lambda i: (i, 0, 0)),
        )
        return pl.pallas_call(
            kernel,
            out_shape=jax.ShapeDtypeStruct((Bp, S, Hp), jnp.bfloat16),
            grid_spec=grid_spec,
            compiler_params=pltpu.CompilerParams(
                dimension_semantics=("parallel",),
                vmem_limit_bytes=vmem_limit,
            ),
        )

    try:
        out = _build(True)(x_in, pe, *ordered)
    except Exception:
        # fall back to default (double-buffered) weight specs if Buffered(1)
        # is not supported by this Pallas version
        out = _build(False)(x_in, pe, *ordered)

    return out[:B, :, :H].astype(jnp.float32)


# ---------------------------------------------------------------------------
if __name__ == "__main__":
    B, S, H, NHEAD = 2, 8, 32, 4

    key = jax.random.PRNGKey(0)
    kx, kp = jax.random.split(key)
    x = jax.random.normal(kx, (B, S, H), jnp.float32)
    params = init_params(kp, H, num_layers=2)

    out = sequence_encoder(x, params, nhead=NHEAD, num_layers=2)
    out = jax.block_until_ready(out)
    assert out.shape == (B, S, H)
    assert out.dtype == jnp.float32
    assert bool(jnp.all(jnp.isfinite(out)))
    print("KERNEL_OK")
</pallas_src>

<mosaic_0001>
module attributes {stable_mosaic.version = 11 : i64} {
  func.func @_encoder_kernel(%arg0: i32, %arg1: memref<1x8x32xf32, #tpu.memory_space<vmem>>, %arg2: memref<1x8x32xf32, #tpu.memory_space<vmem>>, %arg3: memref<2x128x384xbf16, #tpu.memory_space<vmem>>, %arg4: memref<2x1x384xf32, #tpu.memory_space<vmem>>, %arg5: memref<2x32x128xbf16, #tpu.memory_space<vmem>>, %arg6: memref<2x1x128xf32, #tpu.memory_space<vmem>>, %arg7: memref<2x128x128xbf16, #tpu.memory_space<vmem>>, %arg8: memref<2x1x128xf32, #tpu.memory_space<vmem>>, %arg9: memref<2x128x128xbf16, #tpu.memory_space<vmem>>, %arg10: memref<2x1x128xf32, #tpu.memory_space<vmem>>, %arg11: memref<2x1x128xf32, #tpu.memory_space<vmem>>, %arg12: memref<2x1x128xf32, #tpu.memory_space<vmem>>, %arg13: memref<2x1x128xf32, #tpu.memory_space<vmem>>, %arg14: memref<2x1x128xf32, #tpu.memory_space<vmem>>, %arg15: memref<1x8x128xbf16, #tpu.memory_space<vmem>>) attributes {dimension_semantics = [#tpu.dimension_semantics<parallel>], iteration_bounds = array<i64: 2>, scalar_prefetch = 0 : i64, scratch_operands = 0 : i64, tpu.core_type = #tpu.core_type<tc>, window_params = [{transform_indices = @transform_0, window_bounds = array<i64: 1, 8, 32>}, {pipeline_mode = #tpu.pipeline_mode<synchronous>, transform_indices = @transform_1, window_bounds = array<i64: 1, 8, 32>}, {pipeline_mode = #tpu.pipeline_mode<synchronous>, transform_indices = @transform_2, window_bounds = array<i64: 2, 128, 384>}, {pipeline_mode = #tpu.pipeline_mode<synchronous>, transform_indices = @transform_3, window_bounds = array<i64: 2, 1, 384>}, {pipeline_mode = #tpu.pipeline_mode<synchronous>, transform_indices = @transform_4, window_bounds = array<i64: 2, 32, 128>}, {pipeline_mode = #tpu.pipeline_mode<synchronous>, transform_indices = @transform_5, window_bounds = array<i64: 2, 1, 128>}, {pipeline_mode = #tpu.pipeline_mode<synchronous>, transform_indices = @transform_6, window_bounds = array<i64: 2, 128, 128>}, {pipeline_mode = #tpu.pipeline_mode<synchronous>, transform_indices = @transform_7, window_bounds = array<i64: 2, 1, 128>}, {pipeline_mode = #tpu.pipeline_mode<synchronous>, transform_indices = @transform_8, window_bounds = array<i64: 2, 128, 128>}, {pipeline_mode = #tpu.pipeline_mode<synchronous>, transform_indices = @transform_9, window_bounds = array<i64: 2, 1, 128>}, {pipeline_mode = #tpu.pipeline_mode<synchronous>, transform_indices = @transform_10, window_bounds = array<i64: 2, 1, 128>}, {pipeline_mode = #tpu.pipeline_mode<synchronous>, transform_indices = @transform_11, window_bounds = array<i64: 2, 1, 128>}, {pipeline_mode = #tpu.pipeline_mode<synchronous>, transform_indices = @transform_12, window_bounds = array<i64: 2, 1, 128>}, {pipeline_mode = #tpu.pipeline_mode<synchronous>, transform_indices = @transform_13, window_bounds = array<i64: 2, 1, 128>}, {transform_indices = @transform_14, window_bounds = array<i64: 1, 8, 128>}]} {
    %c0 = arith.constant 0 : index
    %c0_0 = arith.constant 0 : index
    %c0_1 = arith.constant 0 : index
    %0 = vector.load %arg1[%c0, %c0_0, %c0_1] : memref<1x8x32xf32, #tpu.memory_space<vmem>>, vector<1x8x32xf32>
    %c0_2 = arith.constant 0 : index
    %c0_3 = arith.constant 0 : index
    %c0_4 = arith.constant 0 : index
    %1 = vector.load %arg2[%c0_2, %c0_3, %c0_4] : memref<1x8x32xf32, #tpu.memory_space<vmem>>, vector<1x8x32xf32>
    %2 = arith.addf %0, %1 : vector<1x8x32xf32>
    %3 = vector.shape_cast %2 : vector<1x8x32xf32> to vector<8x32xf32>
    %cst = arith.constant 0.000000e+00 : f32
    %4 = vector.broadcast %cst : f32 to vector<8x96xf32>
    %5 = tpu.concatenate %3, %4 in 1 : vector<8x32xf32>, vector<8x96xf32> -> vector<8x128xf32>
    %6 = arith.truncf %5 : vector<8x128xf32> to vector<8x128xbf16>
    %c0_5 = arith.constant 0 : index
    %c0_6 = arith.constant 0 : index
    %c0_7 = arith.constant 0 : index
    %7 = vector.load %arg3[%c0_5, %c0_6, %c0_7] : memref<2x128x384xbf16, #tpu.memory_space<vmem>>, vector<1x128x384xbf16>
    %8 = vector.shape_cast %7 : vector<1x128x384xbf16> to vector<128x384xbf16>
    %cst_8 = arith.constant dense<0.000000e+00> : vector<8x384xf32>
    %9 = tpu.matmul %6, %8, %cst_8 {dimension_numbers = #tpu.dot_dimension_numbers<[1], [0], [0], [1], [0, 0, 1, 1], [], []>} : vector<8x128xbf16>, vector<128x384xbf16>, vector<8x384xf32> -> vector<8x384xf32>
    %c0_9 = arith.constant 0 : index
    %c0_10 = arith.constant 0 : index
    %c0_11 = arith.constant 0 : index
    %10 = vector.load %arg4[%c0_9, %c0_10, %c0_11] : memref<2x1x384xf32, #tpu.memory_space<vmem>>, vector<1x1x384xf32>
    %11 = vector.shape_cast %10 : vector<1x1x384xf32> to vector<1x384xf32>
    %12 = vector.broadcast %11 : vector<1x384xf32> to vector<8x384xf32>
    %13 = arith.addf %9, %12 : vector<8x384xf32>
    %14 = arith.truncf %13 : vector<8x384xf32> to vector<8x384xbf16>
    %15 = vector.extract_strided_slice %14 {offsets = [0, 0], sizes = [8, 128], strides = [1, 1]} : vector<8x384xbf16> to vector<8x128xbf16>
    %16 = vector.shape_cast %15 : vector<8x128xbf16> to vector<1x8x128xbf16>
    %17 = vector.extract_strided_slice %14 {offsets = [0, 128], sizes = [8, 128], strides = [1, 1]} : vector<8x384xbf16> to vector<8x128xbf16>
    %18 = vector.shape_cast %17 : vector<8x128xbf16> to vector<1x8x128xbf16>
    %19 = vector.extract_strided_slice %14 {offsets = [0, 256], sizes = [8, 128], strides = [1, 1]} : vector<8x384xbf16> to vector<8x128xbf16>
    %20 = vector.shape_cast %19 : vector<8x128xbf16> to vector<1x8x128xbf16>
    %21 = vector.extract_strided_slice %16 {offsets = [0, 0, 0], sizes = [1, 8, 8], strides = [1, 1, 1]} : vector<1x8x128xbf16> to vector<1x8x8xbf16>
    %22 = vector.extract_strided_slice %18 {offsets = [0, 0, 0], sizes = [1, 8, 8], strides = [1, 1, 1]} : vector<1x8x128xbf16> to vector<1x8x8xbf16>
    %23 = vector.extract_strided_slice %20 {offsets = [0, 0, 0], sizes = [1, 8, 8], strides = [1, 1, 1]} : vector<1x8x128xbf16> to vector<1x8x8xbf16>
    "tpu.trace_start"() <{level = 10 : i32, message = "bqd,bkd->bqk"}> : () -> ()
    %cst_12 = arith.constant dense<0.000000e+00> : vector<1x8x8xf32>
    %24 = tpu.matmul %21, %22, %cst_12 {dimension_numbers = #tpu.dot_dimension_numbers<[2], [2], [1], [1], [0, 0, 0, 1, 1, 1], [0], [0]>} : vector<1x8x8xbf16>, vector<1x8x8xbf16>, vector<1x8x8xf32> -> vector<1x8x8xf32>
    "tpu.trace_stop"() : () -> ()
    %cst_13 = arith.constant dense<0xFF800000> : vector<1x8xf32>
    %25 = vector.multi_reduction <maximumf>, %24, %cst_13 [2] : vector<1x8x8xf32> to vector<1x8xf32>
    %26 = vector.shape_cast %25 : vector<1x8xf32> to vector<1x8x1xf32>
    %27 = vector.broadcast %26 : vector<1x8x1xf32> to vector<1x8x8xf32>
    %28 = arith.subf %24, %27 : vector<1x8x8xf32>
    %29 = math.exp %28 : vector<1x8x8xf32>
    %cst_14 = arith.constant dense<0.000000e+00> : vector<1x8xf32>
    %30 = vector.multi_reduction <add>, %29, %cst_14 [2] : vector<1x8x8xf32> to vector<1x8xf32>
    %31 = vector.shape_cast %30 : vector<1x8xf32> to vector<1x8x1xf32>
    %32 = tpu.reciprocal %31 {approx = true} : vector<1x8x1xf32> -> vector<1x8x1xf32>
    %33 = vector.broadcast %32 : vector<1x8x1xf32> to vector<1x8x8xf32>
    %34 = arith.mulf %29, %33 : vector<1x8x8xf32>
    %35 = arith.truncf %34 : vector<1x8x8xf32> to vector<1x8x8xbf16>
    "tpu.trace_start"() <{level = 10 : i32, message = "bqk,bkd->bqd"}> : () -> ()
    %cst_15 = arith.constant dense<0.000000e+00> : vector<1x8x8xf32>
    %36 = tpu.matmul %35, %23, %cst_15 {dimension_numbers = #tpu.dot_dimension_numbers<[2], [1], [1], [2], [0, 0, 0, 1, 1, 2], [0], [0]>} : vector<1x8x8xbf16>, vector<1x8x8xbf16>, vector<1x8x8xf32> -> vector<1x8x8xf32>
    "tpu.trace_stop"() : () -> ()
    %37 = vector.extract_strided_slice %16 {offsets = [0, 0, 8], sizes = [1, 8, 8], strides = [1, 1, 1]} : vector<1x8x128xbf16> to vector<1x8x8xbf16>
    %38 = vector.extract_strided_slice %18 {offsets = [0, 0, 8], sizes = [1, 8, 8], strides = [1, 1, 1]} : vector<1x8x128xbf16> to vector<1x8x8xbf16>
    %39 = vector.extract_strided_slice %20 {offsets = [0, 0, 8], sizes = [1, 8, 8], strides = [1, 1, 1]} : vector<1x8x128xbf16> to vector<1x8x8xbf16>
    "tpu.trace_start"() <{level = 10 : i32, message = "bqd,bkd->bqk"}> : () -> ()
    %cst_16 = arith.constant dense<0.000000e+00> : vector<1x8x8xf32>
    %40 = tpu.matmul %37, %38, %cst_16 {dimension_numbers = #tpu.dot_dimension_numbers<[2], [2], [1], [1], [0, 0, 0, 1, 1, 1], [0], [0]>} : vector<1x8x8xbf16>, vector<1x8x8xbf16>, vector<1x8x8xf32> -> vector<1x8x8xf32>
    "tpu.trace_stop"() : () -> ()
    %cst_17 = arith.constant dense<0xFF800000> : vector<1x8xf32>
    %41 = vector.multi_reduction <maximumf>, %40, %cst_17 [2] : vector<1x8x8xf32> to vector<1x8xf32>
    %42 = vector.shape_cast %41 : vector<1x8xf32> to vector<1x8x1xf32>
    %43 = vector.broadcast %42 : vector<1x8x1xf32> to vector<1x8x8xf32>
    %44 = arith.subf %40, %43 : vector<1x8x8xf32>
    %45 = math.exp %44 : vector<1x8x8xf32>
    %cst_18 = arith.constant dense<0.000000e+00> : vector<1x8xf32>
    %46 = vector.multi_reduction <add>, %45, %cst_18 [2] : vector<1x8x8xf32> to vector<1x8xf32>
    %47 = vector.shape_cast %46 : vector<1x8xf32> to vector<1x8x1xf32>
    %48 = tpu.reciprocal %47 {approx = true} : vector<1x8x1xf32> -> vector<1x8x1xf32>
    %49 = vector.broadcast %48 : vector<1x8x1xf32> to vector<1x8x8xf32>
    %50 = arith.mulf %45, %49 : vector<1x8x8xf32>
    %51 = arith.truncf %50 : vector<1x8x8xf32> to vector<1x8x8xbf16>
    "tpu.trace_start"() <{level = 10 : i32, message = "bqk,bkd->bqd"}> : () -> ()
    %cst_19 = arith.constant dense<0.000000e+00> : vector<1x8x8xf32>
    %52 = tpu.matmul %51, %39, %cst_19 {dimension_numbers = #tpu.dot_dimension_numbers<[2], [1], [1], [2], [0, 0, 0, 1, 1, 2], [0], [0]>} : vector<1x8x8xbf16>, vector<1x8x8xbf16>, vector<1x8x8xf32> -> vector<1x8x8xf32>
    "tpu.trace_stop"() : () -> ()
    %53 = vector.extract_strided_slice %16 {offsets = [0, 0, 16], sizes = [1, 8, 8], strides = [1, 1, 1]} : vector<1x8x128xbf16> to vector<1x8x8xbf16>
    %54 = vector.extract_strided_slice %18 {offsets = [0, 0, 16], sizes = [1, 8, 8], strides = [1, 1, 1]} : vector<1x8x128xbf16> to vector<1x8x8xbf16>
    %55 = vector.extract_strided_slice %20 {offsets = [0, 0, 16], sizes = [1, 8, 8], strides = [1, 1, 1]} : vector<1x8x128xbf16> to vector<1x8x8xbf16>
    "tpu.trace_start"() <{level = 10 : i32, message = "bqd,bkd->bqk"}> : () -> ()
    %cst_20 = arith.constant dense<0.000000e+00> : vector<1x8x8xf32>
    %56 = tpu.matmul %53, %54, %cst_20 {dimension_numbers = #tpu.dot_dimension_numbers<[2], [2], [1], [1], [0, 0, 0, 1, 1, 1], [0], [0]>} : vector<1x8x8xbf16>, vector<1x8x8xbf16>, vector<1x8x8xf32> -> vector<1x8x8xf32>
    "tpu.trace_stop"() : () -> ()
    %cst_21 = arith.constant dense<0xFF800000> : vector<1x8xf32>
    %57 = vector.multi_reduction <maximumf>, %56, %cst_21 [2] : vector<1x8x8xf32> to vector<1x8xf32>
    %58 = vector.shape_cast %57 : vector<1x8xf32> to vector<1x8x1xf32>
    %59 = vector.broadcast %58 : vector<1x8x1xf32> to vector<1x8x8xf32>
    %60 = arith.subf %56, %59 : vector<1x8x8xf32>
    %61 = math.exp %60 : vector<1x8x8xf32>
    %cst_22 = arith.constant dense<0.000000e+00> : vector<1x8xf32>
    %62 = vector.multi_reduction <add>, %61, %cst_22 [2] : vector<1x8x8xf32> to vector<1x8xf32>
    %63 = vector.shape_cast %62 : vector<1x8xf32> to vector<1x8x1xf32>
    %64 = tpu.reciprocal %63 {approx = true} : vector<1x8x1xf32> -> vector<1x8x1xf32>
    %65 = vector.broadcast %64 : vector<1x8x1xf32> to vector<1x8x8xf32>
    %66 = arith.mulf %61, %65 : vector<1x8x8xf32>
    %67 = arith.truncf %66 : vector<1x8x8xf32> to vector<1x8x8xbf16>
    "tpu.trace_start"() <{level = 10 : i32, message = "bqk,bkd->bqd"}> : () -> ()
    %cst_23 = arith.constant dense<0.000000e+00> : vector<1x8x8xf32>
    %68 = tpu.matmul %67, %55, %cst_23 {dimension_numbers = #tpu.dot_dimension_numbers<[2], [1], [1], [2], [0, 0, 0, 1, 1, 2], [0], [0]>} : vector<1x8x8xbf16>, vector<1x8x8xbf16>, vector<1x8x8xf32> -> vector<1x8x8xf32>
    "tpu.trace_stop"() : () -> ()
    %69 = vector.extract_strided_slice %16 {offsets = [0, 0, 24], sizes = [1, 8, 8], strides = [1, 1, 1]} : vector<1x8x128xbf16> to vector<1x8x8xbf16>
    %70 = vector.extract_strided_slice %18 {offsets = [0, 0, 24], sizes = [1, 8, 8], strides = [1, 1, 1]} : vector<1x8x128xbf16> to vector<1x8x8xbf16>
    %71 = vector.extract_strided_slice %20 {offsets = [0, 0, 24], sizes = [1, 8, 8], strides = [1, 1, 1]} : vector<1x8x128xbf16> to vector<1x8x8xbf16>
    "tpu.trace_start"() <{level = 10 : i32, message = "bqd,bkd->bqk"}> : () -> ()
    %cst_24 = arith.constant dense<0.000000e+00> : vector<1x8x8xf32>
    %72 = tpu.matmul %69, %70, %cst_24 {dimension_numbers = #tpu.dot_dimension_numbers<[2], [2], [1], [1], [0, 0, 0, 1, 1, 1], [0], [0]>} : vector<1x8x8xbf16>, vector<1x8x8xbf16>, vector<1x8x8xf32> -> vector<1x8x8xf32>
    "tpu.trace_stop"() : () -> ()
    %cst_25 = arith.constant dense<0xFF800000> : vector<1x8xf32>
    %73 = vector.multi_reduction <maximumf>, %72, %cst_25 [2] : vector<1x8x8xf32> to vector<1x8xf32>
    %74 = vector.shape_cast %73 : vector<1x8xf32> to vector<1x8x1xf32>
    %75 = vector.broadcast %74 : vector<1x8x1xf32> to vector<1x8x8xf32>
    %76 = arith.subf %72, %75 : vector<1x8x8xf32>
    %77 = math.exp %76 : vector<1x8x8xf32>
    %cst_26 = arith.constant dense<0.000000e+00> : vector<1x8xf32>
    %78 = vector.multi_reduction <add>, %77, %cst_26 [2] : vector<1x8x8xf32> to vector<1x8xf32>
    %79 = vector.shape_cast %78 : vector<1x8xf32> to vector<1x8x1xf32>
    %80 = tpu.reciprocal %79 {approx = true} : vector<1x8x1xf32> -> vector<1x8x1xf32>
    %81 = vector.broadcast %80 : vector<1x8x1xf32> to vector<1x8x8xf32>
    %82 = arith.mulf %77, %81 : vector<1x8x8xf32>
    %83 = arith.truncf %82 : vector<1x8x8xf32> to vector<1x8x8xbf16>
    "tpu.trace_start"() <{level = 10 : i32, message = "bqk,bkd->bqd"}> : () -> ()
    %cst_27 = arith.constant dense<0.000000e+00> : vector<1x8x8xf32>
    %84 = tpu.matmul %83, %71, %cst_27 {dimension_numbers = #tpu.dot_dimension_numbers<[2], [1], [1], [2], [0, 0, 0, 1, 1, 2], [0], [0]>} : vector<1x8x8xbf16>, vector<1x8x8xbf16>, vector<1x8x8xf32> -> vector<1x8x8xf32>
    "tpu.trace_stop"() : () -> ()
    %85 = tpu.concatenate %36, %52, %68, %84 in 2 : vector<1x8x8xf32>, vector<1x8x8xf32>, vector<1x8x8xf32>, vector<1x8x8xf32> -> vector<1x8x32xf32>
    %86 = vector.shape_cast %85 : vector<1x8x32xf32> to vector<8x32xf32>
    %87 = arith.truncf %86 : vector<8x32xf32> to vector<8x32xbf16>
    %c0_28 = arith.constant 0 : index
    %c0_29 = arith.constant 0 : index
    %c0_30 = arith.constant 0 : index
    %88 = vector.load %arg5[%c0_28, %c0_29, %c0_30] : memref<2x32x128xbf16, #tpu.memory_space<vmem>>, vector<1x32x128xbf16>
    %89 = vector.shape_cast %88 : vector<1x32x128xbf16> to vector<32x128xbf16>
    %cst_31 = arith.constant dense<0.000000e+00> : vector<8x128xf32>
    %90 = tpu.matmul %87, %89, %cst_31 {dimension_numbers = #tpu.dot_dimension_numbers<[1], [0], [0], [1], [0, 0, 1, 1], [], []>} : vector<8x32xbf16>, vector<32x128xbf16>, vector<8x128xf32> -> vector<8x128xf32>
    %c0_32 = arith.constant 0 : index
    %c0_33 = arith.constant 0 : index
    %c0_34 = arith.constant 0 : index
    %91 = vector.load %arg6[%c0_32, %c0_33, %c0_34] : memref<2x1x128xf32, #tpu.memory_space<vmem>>, vector<1x1x128xf32>
    %92 = vector.shape_cast %91 : vector<1x1x128xf32> to vector<1x128xf32>
    %93 = vector.broadcast %92 : vector<1x128xf32> to vector<8x128xf32>
    %94 = arith.addf %90, %93 : vector<8x128xf32>
    %95 = arith.addf %5, %94 : vector<8x128xf32>
    %c0_35 = arith.constant 0 : index
    %c0_36 = arith.constant 0 : index
    %c0_37 = arith.constant 0 : index
    %96 = vector.load %arg11[%c0_35, %c0_36, %c0_37] : memref<2x1x128xf32, #tpu.memory_space<vmem>>, vector<1x1x128xf32>
    %97 = vector.shape_cast %96 : vector<1x1x128xf32> to vector<1x128xf32>
    %c0_38 = arith.constant 0 : index
    %c0_39 = arith.constant 0 : index
    %c0_40 = arith.constant 0 : index
    %98 = vector.load %arg12[%c0_38, %c0_39, %c0_40] : memref<2x1x128xf32, #tpu.memory_space<vmem>>, vector<1x1x128xf32>
    %99 = vector.shape_cast %98 : vector<1x1x128xf32> to vector<1x128xf32>
    %cst_41 = arith.constant dense<0.000000e+00> : vector<8xf32>
    %100 = vector.multi_reduction <add>, %95, %cst_41 [1] : vector<8x128xf32> to vector<8xf32>
    %101 = vector.shape_cast %100 : vector<8xf32> to vector<8x1xf32>
    %cst_42 = arith.constant 3.125000e-02 : f32
    %102 = vector.broadcast %cst_42 : f32 to vector<8x1xf32>
    %103 = arith.mulf %101, %102 : vector<8x1xf32>
    %104 = arith.mulf %95, %95 : vector<8x128xf32>
    %cst_43 = arith.constant dense<0.000000e+00> : vector<8xf32>
    %105 = vector.multi_reduction <add>, %104, %cst_43 [1] : vector<8x128xf32> to vector<8xf32>
    %106 = vector.shape_cast %105 : vector<8xf32> to vector<8x1xf32>
    %cst_44 = arith.constant 3.125000e-02 : f32
    %107 = vector.broadcast %cst_44 : f32 to vector<8x1xf32>
    %108 = arith.mulf %106, %107 : vector<8x1xf32>
    %109 = arith.mulf %103, %103 : vector<8x1xf32>
    %110 = arith.subf %108, %109 : vector<8x1xf32>
    %111 = vector.broadcast %103 : vector<8x1xf32> to vector<8x128xf32>
    %112 = arith.subf %95, %111 : vector<8x128xf32>
    %cst_45 = arith.constant 9.99999974E-6 : f32
    %113 = vector.broadcast %cst_45 : f32 to vector<8x1xf32>
    %114 = arith.addf %110, %113 : vector<8x1xf32>
    %115 = math.rsqrt %114 : vector<8x1xf32>
    %116 = vector.broadcast %115 : vector<8x1xf32> to vector<8x128xf32>
    %117 = arith.mulf %112, %116 : vector<8x128xf32>
    %118 = vector.broadcast %97 : vector<1x128xf32> to vector<8x128xf32>
    %119 = arith.mulf %117, %118 : vector<8x128xf32>
    %120 = vector.broadcast %99 : vector<1x128xf32> to vector<8x128xf32>
    %121 = arith.addf %119, %120 : vector<8x128xf32>
    %122 = arith.truncf %121 : vector<8x128xf32> to vector<8x128xbf16>
    %c0_46 = arith.constant 0 : index
    %c0_47 = arith.constant 0 : index
    %c0_48 = arith.constant 0 : index
    %123 = vector.load %arg7[%c0_46, %c0_47, %c0_48] : memref<2x128x128xbf16, #tpu.memory_space<vmem>>, vector<1x128x128xbf16>
    %124 = vector.shape_cast %123 : vector<1x128x128xbf16> to vector<128x128xbf16>
    %cst_49 = arith.constant dense<0.000000e+00> : vector<8x128xf32>
    %125 = tpu.matmul %122, %124, %cst_49 {dimension_numbers = #tpu.dot_dimension_numbers<[1], [0], [0], [1], [0, 0, 1, 1], [], []>} : vector<8x128xbf16>, vector<128x128xbf16>, vector<8x128xf32> -> vector<8x128xf32>
    %c0_50 = arith.constant 0 : index
    %c0_51 = arith.constant 0 : index
    %c0_52 = arith.constant 0 : index
    %126 = vector.load %arg8[%c0_50, %c0_51, %c0_52] : memref<2x1x128xf32, #tpu.memory_space<vmem>>, vector<1x1x128xf32>
    %127 = vector.shape_cast %126 : vector<1x1x128xf32> to vector<1x128xf32>
    %128 = vector.broadcast %127 : vector<1x128xf32> to vector<8x128xf32>
    %129 = arith.addf %125, %128 : vector<8x128xf32>
    %cst_53 = arith.constant 0.000000e+00 : f32
    %130 = vector.broadcast %cst_53 : f32 to vector<8x128xf32>
    %131 = arith.maximumf %129, %130 : vector<8x128xf32>
    %132 = arith.truncf %131 : vector<8x128xf32> to vector<8x128xbf16>
    %c0_54 = arith.constant 0 : index
    %c0_55 = arith.constant 0 : index
    %c0_56 = arith.constant 0 : index
    %133 = vector.load %arg9[%c0_54, %c0_55, %c0_56] : memref<2x128x128xbf16, #tpu.memory_space<vmem>>, vector<1x128x128xbf16>
    %134 = vector.shape_cast %133 : vector<1x128x128xbf16> to vector<128x128xbf16>
    %cst_57 = arith.constant dense<0.000000e+00> : vector<8x128xf32>
    %135 = tpu.matmul %132, %134, %cst_57 {dimension_numbers = #tpu.dot_dimension_numbers<[1], [0], [0], [1], [0, 0, 1, 1], [], []>} : vector<8x128xbf16>, vector<128x128xbf16>, vector<8x128xf32> -> vector<8x128xf32>
    %c0_58 = arith.constant 0 : index
    %c0_59 = arith.constant 0 : index
    %c0_60 = arith.constant 0 : index
    %136 = vector.load %arg10[%c0_58, %c0_59, %c0_60] : memref<2x1x128xf32, #tpu.memory_space<vmem>>, vector<1x1x128xf32>
    %137 = vector.shape_cast %136 : vector<1x1x128xf32> to vector<1x128xf32>
    %138 = vector.broadcast %137 : vector<1x128xf32> to vector<8x128xf32>
    %139 = arith.addf %135, %138 : vector<8x128xf32>
    %140 = arith.addf %121, %139 : vector<8x128xf32>
    %c0_61 = arith.constant 0 : index
    %c0_62 = arith.constant 0 : index
    %c0_63 = arith.constant 0 : index
    %141 = vector.load %arg13[%c0_61, %c0_62, %c0_63] : memref<2x1x128xf32, #tpu.memory_space<vmem>>, vector<1x1x128xf32>
    %142 = vector.shape_cast %141 : vector<1x1x128xf32> to vector<1x128xf32>
    %c0_64 = arith.constant 0 : index
    %c0_65 = arith.constant 0 : index
    %c0_66 = arith.constant 0 : index
    %143 = vector.load %arg14[%c0_64, %c0_65, %c0_66] : memref<2x1x128xf32, #tpu.memory_space<vmem>>, vector<1x1x128xf32>
    %144 = vector.shape_cast %143 : vector<1x1x128xf32> to vector<1x128xf32>
    %cst_67 = arith.constant dense<0.000000e+00> : vector<8xf32>
    %145 = vector.multi_reduction <add>, %140, %cst_67 [1] : vector<8x128xf32> to vector<8xf32>
    %146 = vector.shape_cast %145 : vector<8xf32> to vector<8x1xf32>
    %cst_68 = arith.constant 3.125000e-02 : f32
    %147 = vector.broadcast %cst_68 : f32 to vector<8x1xf32>
    %148 = arith.mulf %146, %147 : vector<8x1xf32>
    %149 = arith.mulf %140, %140 : vector<8x128xf32>
    %cst_69 = arith.constant dense<0.000000e+00> : vector<8xf32>
    %150 = vector.multi_reduction <add>, %149, %cst_69 [1] : vector<8x128xf32> to vector<8xf32>
    %151 = vector.shape_cast %150 : vector<8xf32> to vector<8x1xf32>
    %cst_70 = arith.constant 3.125000e-02 : f32
    %152 = vector.broadcast %cst_70 : f32 to vector<8x1xf32>
    %153 = arith.mulf %151, %152 : vector<8x1xf32>
    %154 = arith.mulf %148, %148 : vector<8x1xf32>
    %155 = arith.subf %153, %154 : vector<8x1xf32>
    %156 = vector.broadcast %148 : vector<8x1xf32> to vector<8x128xf32>
    %157 = arith.subf %140, %156 : vector<8x128xf32>
    %cst_71 = arith.constant 9.99999974E-6 : f32
    %158 = vector.broadcast %cst_71 : f32 to vector<8x1xf32>
    %159 = arith.addf %155, %158 : vector<8x1xf32>
    %160 = math.rsqrt %159 : vector<8x1xf32>
    %161 = vector.broadcast %160 : vector<8x1xf32> to vector<8x128xf32>
    %162 = arith.mulf %157, %161 : vector<8x128xf32>
    %163 = vector.broadcast %142 : vector<1x128xf32> to vector<8x128xf32>
    %164 = arith.mulf %162, %163 : vector<8x128xf32>
    %165 = vector.broadcast %144 : vector<1x128xf32> to vector<8x128xf32>
    %166 = arith.addf %164, %165 : vector<8x128xf32>
    %167 = arith.truncf %166 : vector<8x128xf32> to vector<8x128xbf16>
    %c1 = arith.constant 1 : index
    %c0_72 = arith.constant 0 : index
    %c0_73 = arith.constant 0 : index
    %168 = vector.load %arg3[%c1, %c0_72, %c0_73] : memref<2x128x384xbf16, #tpu.memory_space<vmem>>, vector<1x128x384xbf16>
    %169 = vector.shape_cast %168 : vector<1x128x384xbf16> to vector<128x384xbf16>
    %cst_74 = arith.constant dense<0.000000e+00> : vector<8x384xf32>
    %170 = tpu.matmul %167, %169, %cst_74 {dimension_numbers = #tpu.dot_dimension_numbers<[1], [0], [0], [1], [0, 0, 1, 1], [], []>} : vector<8x128xbf16>, vector<128x384xbf16>, vector<8x384xf32> -> vector<8x384xf32>
    %c1_75 = arith.constant 1 : index
    %c0_76 = arith.constant 0 : index
    %c0_77 = arith.constant 0 : index
    %171 = vector.load %arg4[%c1_75, %c0_76, %c0_77] : memref<2x1x384xf32, #tpu.memory_space<vmem>>, vector<1x1x384xf32>
    %172 = vector.shape_cast %171 : vector<1x1x384xf32> to vector<1x384xf32>
    %173 = vector.broadcast %172 : vector<1x384xf32> to vector<8x384xf32>
    %174 = arith.addf %170, %173 : vector<8x384xf32>
    %175 = arith.truncf %174 : vector<8x384xf32> to vector<8x384xbf16>
    %176 = vector.extract_strided_slice %175 {offsets = [0, 0], sizes = [8, 128], strides = [1, 1]} : vector<8x384xbf16> to vector<8x128xbf16>
    %177 = vector.shape_cast %176 : vector<8x128xbf16> to vector<1x8x128xbf16>
    %178 = vector.extract_strided_slice %175 {offsets = [0, 128], sizes = [8, 128], strides = [1, 1]} : vector<8x384xbf16> to vector<8x128xbf16>
    %179 = vector.shape_cast %178 : vector<8x128xbf16> to vector<1x8x128xbf16>
    %180 = vector.extract_strided_slice %175 {offsets = [0, 256], sizes = [8, 128], strides = [1, 1]} : vector<8x384xbf16> to vector<8x128xbf16>
    %181 = vector.shape_cast %180 : vector<8x128xbf16> to vector<1x8x128xbf16>
    %182 = vector.extract_strided_slice %177 {offsets = [0, 0, 0], sizes = [1, 8, 8], strides = [1, 1, 1]} : vector<1x8x128xbf16> to vector<1x8x8xbf16>
    %183 = vector.extract_strided_slice %179 {offsets = [0, 0, 0], sizes = [1, 8, 8], strides = [1, 1, 1]} : vector<1x8x128xbf16> to vector<1x8x8xbf16>
    %184 = vector.extract_strided_slice %181 {offsets = [0, 0, 0], sizes = [1, 8, 8], strides = [1, 1, 1]} : vector<1x8x128xbf16> to vector<1x8x8xbf16>
    "tpu.trace_start"() <{level = 10 : i32, message = "bqd,bkd->bqk"}> : () -> ()
    %cst_78 = arith.constant dense<0.000000e+00> : vector<1x8x8xf32>
    %185 = tpu.matmul %182, %183, %cst_78 {dimension_numbers = #tpu.dot_dimension_numbers<[2], [2], [1], [1], [0, 0, 0, 1, 1, 1], [0], [0]>} : vector<1x8x8xbf16>, vector<1x8x8xbf16>, vector<1x8x8xf32> -> vector<1x8x8xf32>
    "tpu.trace_stop"() : () -> ()
    %cst_79 = arith.constant dense<0xFF800000> : vector<1x8xf32>
    %186 = vector.multi_reduction <maximumf>, %185, %cst_79 [2] : vector<1x8x8xf32> to vector<1x8xf32>
    %187 = vector.shape_cast %186 : vector<1x8xf32> to vector<1x8x1xf32>
    %188 = vector.broadcast %187 : vector<1x8x1xf32> to vector<1x8x8xf32>
    %189 = arith.subf %185, %188 : vector<1x8x8xf32>
    %190 = math.exp %189 : vector<1x8x8xf32>
    %cst_80 = arith.constant dense<0.000000e+00> : vector<1x8xf32>
    %191 = vector.multi_reduction <add>, %190, %cst_80 [2] : vector<1x8x8xf32> to vector<1x8xf32>
    %192 = vector.shape_cast %191 : vector<1x8xf32> to vector<1x8x1xf32>
    %193 = tpu.reciprocal %192 {approx = true} : vector<1x8x1xf32> -> vector<1x8x1xf32>
    %194 = vector.broadcast %193 : vector<1x8x1xf32> to vector<1x8x8xf32>
    %195 = arith.mulf %190, %194 : vector<1x8x8xf32>
    %196 = arith.truncf %195 : vector<1x8x8xf32> to vector<1x8x8xbf16>
    "tpu.trace_start"() <{level = 10 : i32, message = "bqk,bkd->bqd"}> : () -> ()
    %cst_81 = arith.constant dense<0.000000e+00> : vector<1x8x8xf32>
    %197 = tpu.matmul %196, %184, %cst_81 {dimension_numbers = #tpu.dot_dimension_numbers<[2], [1], [1], [2], [0, 0, 0, 1, 1, 2], [0], [0]>} : vector<1x8x8xbf16>, vector<1x8x8xbf16>, vector<1x8x8xf32> -> vector<1x8x8xf32>
    "tpu.trace_stop"() : () -> ()
    %198 = vector.extract_strided_slice %177 {offsets = [0, 0, 8], sizes = [1, 8, 8], strides = [1, 1, 1]} : vector<1x8x128xbf16> to vector<1x8x8xbf16>
    %199 = vector.extract_strided_slice %179 {offsets = [0, 0, 8], sizes = [1, 8, 8], strides = [1, 1, 1]} : vector<1x8x128xbf16> to vector<1x8x8xbf16>
    %200 = vector.extract_strided_slice %181 {offsets = [0, 0, 8], sizes = [1, 8, 8], strides = [1, 1, 1]} : vector<1x8x128xbf16> to vector<1x8x8xbf16>
    "tpu.trace_start"() <{level = 10 : i32, message = "bqd,bkd->bqk"}> : () -> ()
    %cst_82 = arith.constant dense<0.000000e+00> : vector<1x8x8xf32>
    %201 = tpu.matmul %198, %199, %cst_82 {dimension_numbers = #tpu.dot_dimension_numbers<[2], [2], [1], [1], [0, 0, 0, 1, 1, 1], [0], [0]>} : vector<1x8x8xbf16>, vector<1x8x8xbf16>, vector<1x8x8xf32> -> vector<1x8x8xf32>
    "tpu.trace_stop"() : () -> ()
    %cst_83 = arith.constant dense<0xFF800000> : vector<1x8xf32>
    %202 = vector.multi_reduction <maximumf>, %201, %cst_83 [2] : vector<1x8x8xf32> to vector<1x8xf32>
    %203 = vector.shape_cast %202 : vector<1x8xf32> to vector<1x8x1xf32>
    %204 = vector.broadcast %203 : vector<1x8x1xf32> to vector<1x8x8xf32>
    %205 = arith.subf %201, %204 : vector<1x8x8xf32>
    %206 = math.exp %205 : vector<1x8x8xf32>
    %cst_84 = arith.constant dense<0.000000e+00> : vector<1x8xf32>
    %207 = vector.multi_reduction <add>, %206, %cst_84 [2] : vector<1x8x8xf32> to vector<1x8xf32>
    %208 = vector.shape_cast %207 : vector<1x8xf32> to vector<1x8x1xf32>
    %209 = tpu.reciprocal %208 {approx = true} : vector<1x8x1xf32> -> vector<1x8x1xf32>
    %210 = vector.broadcast %209 : vector<1x8x1xf32> to vector<1x8x8xf32>
    %211 = arith.mulf %206, %210 : vector<1x8x8xf32>
    %212 = arith.truncf %211 : vector<1x8x8xf32> to vector<1x8x8xbf16>
    "tpu.trace_start"() <{level = 10 : i32, message = "bqk,bkd->bqd"}> : () -> ()
    %cst_85 = arith.constant dense<0.000000e+00> : vector<1x8x8xf32>
    %213 = tpu.matmul %212, %200, %cst_85 {dimension_numbers = #tpu.dot_dimension_numbers<[2], [1], [1], [2], [0, 0, 0, 1, 1, 2], [0], [0]>} : vector<1x8x8xbf16>, vector<1x8x8xbf16>, vector<1x8x8xf32> -> vector<1x8x8xf32>
    "tpu.trace_stop"() : () -> ()
    %214 = vector.extract_strided_slice %177 {offsets = [0, 0, 16], sizes = [1, 8, 8], strides = [1, 1, 1]} : vector<1x8x128xbf16> to vector<1x8x8xbf16>
    %215 = vector.extract_strided_slice %179 {offsets = [0, 0, 16], sizes = [1, 8, 8], strides = [1, 1, 1]} : vector<1x8x128xbf16> to vector<1x8x8xbf16>
    %216 = vector.extract_strided_slice %181 {offsets = [0, 0, 16], sizes = [1, 8, 8], strides = [1, 1, 1]} : vector<1x8x128xbf16> to vector<1x8x8xbf16>
    "tpu.trace_start"() <{level = 10 : i32, message = "bqd,bkd->bqk"}> : () -> ()
    %cst_86 = arith.constant dense<0.000000e+00> : vector<1x8x8xf32>
    %217 = tpu.matmul %214, %215, %cst_86 {dimension_numbers = #tpu.dot_dimension_numbers<[2], [2], [1], [1], [0, 0, 0, 1, 1, 1], [0], [0]>} : vector<1x8x8xbf16>, vector<1x8x8xbf16>, vector<1x8x8xf32> -> vector<1x8x8xf32>
    "tpu.trace_stop"() : () -> ()
    %cst_87 = arith.constant dense<0xFF800000> : vector<1x8xf32>
    %218 = vector.multi_reduction <maximumf>, %217, %cst_87 [2] : vector<1x8x8xf32> to vector<1x8xf32>
    %219 = vector.shape_cast %218 : vector<1x8xf32> to vector<1x8x1xf32>
    %220 = vector.broadcast %219 : vector<1x8x1xf32> to vector<1x8x8xf32>
    %221 = arith.subf %217, %220 : vector<1x8x8xf32>
    %222 = math.exp %221 : vector<1x8x8xf32>
    %cst_88 = arith.constant dense<0.000000e+00> : vector<1x8xf32>
    %223 = vector.multi_reduction <add>, %222, %cst_88 [2] : vector<1x8x8xf32> to vector<1x8xf32>
    %224 = vector.shape_cast %223 : vector<1x8xf32> to vector<1x8x1xf32>
    %225 = tpu.reciprocal %224 {approx = true} : vector<1x8x1xf32> -> vector<1x8x1xf32>
    %226 = vector.broadcast %225 : vector<1x8x1xf32> to vector<1x8x8xf32>
    %227 = arith.mulf %222, %226 : vector<1x8x8xf32>
    %228 = arith.truncf %227 : vector<1x8x8xf32> to vector<1x8x8xbf16>
    "tpu.trace_start"() <{level = 10 : i32, message = "bqk,bkd->bqd"}> : () -> ()
    %cst_89 = arith.constant dense<0.000000e+00> : vector<1x8x8xf32>
    %229 = tpu.matmul %228, %216, %cst_89 {dimension_numbers = #tpu.dot_dimension_numbers<[2], [1], [1], [2], [0, 0, 0, 1, 1, 2], [0], [0]>} : vector<1x8x8xbf16>, vector<1x8x8xbf16>, vector<1x8x8xf32> -> vector<1x8x8xf32>
    "tpu.trace_stop"() : () -> ()
    %230 = vector.extract_strided_slice %177 {offsets = [0, 0, 24], sizes = [1, 8, 8], strides = [1, 1, 1]} : vector<1x8x128xbf16> to vector<1x8x8xbf16>
    %231 = vector.extract_strided_slice %179 {offsets = [0, 0, 24], sizes = [1, 8, 8], strides = [1, 1, 1]} : vector<1x8x128xbf16> to vector<1x8x8xbf16>
    %232 = vector.extract_strided_slice %181 {offsets = [0, 0, 24], sizes = [1, 8, 8], strides = [1, 1, 1]} : vector<1x8x128xbf16> to vector<1x8x8xbf16>
    "tpu.trace_start"() <{level = 10 : i32, message = "bqd,bkd->bqk"}> : () -> ()
    %cst_90 = arith.constant dense<0.000000e+00> : vector<1x8x8xf32>
    %233 = tpu.matmul %230, %231, %cst_90 {dimension_numbers = #tpu.dot_dimension_numbers<[2], [2], [1], [1], [0, 0, 0, 1, 1, 1], [0], [0]>} : vector<1x8x8xbf16>, vector<1x8x8xbf16>, vector<1x8x8xf32> -> vector<1x8x8xf32>
    "tpu.trace_stop"() : () -> ()
    %cst_91 = arith.constant dense<0xFF800000> : vector<1x8xf32>
    %234 = vector.multi_reduction <maximumf>, %233, %cst_91 [2] : vector<1x8x8xf32> to vector<1x8xf32>
    %235 = vector.shape_cast %234 : vector<1x8xf32> to vector<1x8x1xf32>
    %236 = vector.broadcast %235 : vector<1x8x1xf32> to vector<1x8x8xf32>
    %237 = arith.subf %233, %236 : vector<1x8x8xf32>
    %238 = math.exp %237 : vector<1x8x8xf32>
    %cst_92 = arith.constant dense<0.000000e+00> : vector<1x8xf32>
    %239 = vector.multi_reduction <add>, %238, %cst_92 [2] : vector<1x8x8xf32> to vector<1x8xf32>
    %240 = vector.shape_cast %239 : vector<1x8xf32> to vector<1x8x1xf32>
    %241 = tpu.reciprocal %240 {approx = true} : vector<1x8x1xf32> -> vector<1x8x1xf32>
    %242 = vector.broadcast %241 : vector<1x8x1xf32> to vector<1x8x8xf32>
    %243 = arith.mulf %238, %242 : vector<1x8x8xf32>
    %244 = arith.truncf %243 : vector<1x8x8xf32> to vector<1x8x8xbf16>
    "tpu.trace_start"() <{level = 10 : i32, message = "bqk,bkd->bqd"}> : () -> ()
    %cst_93 = arith.constant dense<0.000000e+00> : vector<1x8x8xf32>
    %245 = tpu.matmul %244, %232, %cst_93 {dimension_numbers = #tpu.dot_dimension_numbers<[2], [1], [1], [2], [0, 0, 0, 1, 1, 2], [0], [0]>} : vector<1x8x8xbf16>, vector<1x8x8xbf16>, vector<1x8x8xf32> -> vector<1x8x8xf32>
    "tpu.trace_stop"() : () -> ()
    %246 = tpu.concatenate %197, %213, %229, %245 in 2 : vector<1x8x8xf32>, vector<1x8x8xf32>, vector<1x8x8xf32>, vector<1x8x8xf32> -> vector<1x8x32xf32>
    %247 = vector.shape_cast %246 : vector<1x8x32xf32> to vector<8x32xf32>
    %248 = arith.truncf %247 : vector<8x32xf32> to vector<8x32xbf16>
    %c1_94 = arith.constant 1 : index
    %c0_95 = arith.constant 0 : index
    %c0_96 = arith.constant 0 : index
    %249 = vector.load %arg5[%c1_94, %c0_95, %c0_96] : memref<2x32x128xbf16, #tpu.memory_space<vmem>>, vector<1x32x128xbf16>
    %250 = vector.shape_cast %249 : vector<1x32x128xbf16> to vector<32x128xbf16>
    %cst_97 = arith.constant dense<0.000000e+00> : vector<8x128xf32>
    %251 = tpu.matmul %248, %250, %cst_97 {dimension_numbers = #tpu.dot_dimension_numbers<[1], [0], [0], [1], [0, 0, 1, 1], [], []>} : vector<8x32xbf16>, vector<32x128xbf16>, vector<8x128xf32> -> vector<8x128xf32>
    %c1_98 = arith.constant 1 : index
    %c0_99 = arith.constant 0 : index
    %c0_100 = arith.constant 0 : index
    %252 = vector.load %arg6[%c1_98, %c0_99, %c0_100] : memref<2x1x128xf32, #tpu.memory_space<vmem>>, vector<1x1x128xf32>
    %253 = vector.shape_cast %252 : vector<1x1x128xf32> to vector<1x128xf32>
    %254 = vector.broadcast %253 : vector<1x128xf32> to vector<8x128xf32>
    %255 = arith.addf %251, %254 : vector<8x128xf32>
    %256 = arith.addf %166, %255 : vector<8x128xf32>
    %c1_101 = arith.constant 1 : index
    %c0_102 = arith.constant 0 : index
    %c0_103 = arith.constant 0 : index
    %257 = vector.load %arg11[%c1_101, %c0_102, %c0_103] : memref<2x1x128xf32, #tpu.memory_space<vmem>>, vector<1x1x128xf32>
    %258 = vector.shape_cast %257 : vector<1x1x128xf32> to vector<1x128xf32>
    %c1_104 = arith.constant 1 : index
    %c0_105 = arith.constant 0 : index
    %c0_106 = arith.constant 0 : index
    %259 = vector.load %arg12[%c1_104, %c0_105, %c0_106] : memref<2x1x128xf32, #tpu.memory_space<vmem>>, vector<1x1x128xf32>
    %260 = vector.shape_cast %259 : vector<1x1x128xf32> to vector<1x128xf32>
    %cst_107 = arith.constant dense<0.000000e+00> : vector<8xf32>
    %261 = vector.multi_reduction <add>, %256, %cst_107 [1] : vector<8x128xf32> to vector<8xf32>
    %262 = vector.shape_cast %261 : vector<8xf32> to vector<8x1xf32>
    %cst_108 = arith.constant 3.125000e-02 : f32
    %263 = vector.broadcast %cst_108 : f32 to vector<8x1xf32>
    %264 = arith.mulf %262, %263 : vector<8x1xf32>
    %265 = arith.mulf %256, %256 : vector<8x128xf32>
    %cst_109 = arith.constant dense<0.000000e+00> : vector<8xf32>
    %266 = vector.multi_reduction <add>, %265, %cst_109 [1] : vector<8x128xf32> to vector<8xf32>
    %267 = vector.shape_cast %266 : vector<8xf32> to vector<8x1xf32>
    %cst_110 = arith.constant 3.125000e-02 : f32
    %268 = vector.broadcast %cst_110 : f32 to vector<8x1xf32>
    %269 = arith.mulf %267, %268 : vector<8x1xf32>
    %270 = arith.mulf %264, %264 : vector<8x1xf32>
    %271 = arith.subf %269, %270 : vector<8x1xf32>
    %272 = vector.broadcast %264 : vector<8x1xf32> to vector<8x128xf32>
    %273 = arith.subf %256, %272 : vector<8x128xf32>
    %cst_111 = arith.constant 9.99999974E-6 : f32
    %274 = vector.broadcast %cst_111 : f32 to vector<8x1xf32>
    %275 = arith.addf %271, %274 : vector<8x1xf32>
    %276 = math.rsqrt %275 : vector<8x1xf32>
    %277 = vector.broadcast %276 : vector<8x1xf32> to vector<8x128xf32>
    %278 = arith.mulf %273, %277 : vector<8x128xf32>
    %279 = vector.broadcast %258 : vector<1x128xf32> to vector<8x128xf32>
    %280 = arith.mulf %278, %279 : vector<8x128xf32>
    %281 = vector.broadcast %260 : vector<1x128xf32> to vector<8x128xf32>
    %282 = arith.addf %280, %281 : vector<8x128xf32>
    %283 = arith.truncf %282 : vector<8x128xf32> to vector<8x128xbf16>
    %c1_112 = arith.constant 1 : index
    %c0_113 = arith.constant 0 : index
    %c0_114 = arith.constant 0 : index
    %284 = vector.load %arg7[%c1_112, %c0_113, %c0_114] : memref<2x128x128xbf16, #tpu.memory_space<vmem>>, vector<1x128x128xbf16>
    %285 = vector.shape_cast %284 : vector<1x128x128xbf16> to vector<128x128xbf16>
    %cst_115 = arith.constant dense<0.000000e+00> : vector<8x128xf32>
    %286 = tpu.matmul %283, %285, %cst_115 {dimension_numbers = #tpu.dot_dimension_numbers<[1], [0], [0], [1], [0, 0, 1, 1], [], []>} : vector<8x128xbf16>, vector<128x128xbf16>, vector<8x128xf32> -> vector<8x128xf32>
    %c1_116 = arith.constant 1 : index
    %c0_117 = arith.constant 0 : index
    %c0_118 = arith.constant 0 : index
    %287 = vector.load %arg8[%c1_116, %c0_117, %c0_118] : memref<2x1x128xf32, #tpu.memory_space<vmem>>, vector<1x1x128xf32>
    %288 = vector.shape_cast %287 : vector<1x1x128xf32> to vector<1x128xf32>
    %289 = vector.broadcast %288 : vector<1x128xf32> to vector<8x128xf32>
    %290 = arith.addf %286, %289 : vector<8x128xf32>
    %cst_119 = arith.constant 0.000000e+00 : f32
    %291 = vector.broadcast %cst_119 : f32 to vector<8x128xf32>
    %292 = arith.maximumf %290, %291 : vector<8x128xf32>
    %293 = arith.truncf %292 : vector<8x128xf32> to vector<8x128xbf16>
    %c1_120 = arith.constant 1 : index
    %c0_121 = arith.constant 0 : index
    %c0_122 = arith.constant 0 : index
    %294 = vector.load %arg9[%c1_120, %c0_121, %c0_122] : memref<2x128x128xbf16, #tpu.memory_space<vmem>>, vector<1x128x128xbf16>
    %295 = vector.shape_cast %294 : vector<1x128x128xbf16> to vector<128x128xbf16>
    %cst_123 = arith.constant dense<0.000000e+00> : vector<8x128xf32>
    %296 = tpu.matmul %293, %295, %cst_123 {dimension_numbers = #tpu.dot_dimension_numbers<[1], [0], [0], [1], [0, 0, 1, 1], [], []>} : vector<8x128xbf16>, vector<128x128xbf16>, vector<8x128xf32> -> vector<8x128xf32>
    %c1_124 = arith.constant 1 : index
    %c0_125 = arith.constant 0 : index
    %c0_126 = arith.constant 0 : index
    %297 = vector.load %arg10[%c1_124, %c0_125, %c0_126] : memref<2x1x128xf32, #tpu.memory_space<vmem>>, vector<1x1x128xf32>
    %298 = vector.shape_cast %297 : vector<1x1x128xf32> to vector<1x128xf32>
    %299 = vector.broadcast %298 : vector<1x128xf32> to vector<8x128xf32>
    %300 = arith.addf %296, %299 : vector<8x128xf32>
    %301 = arith.addf %282, %300 : vector<8x128xf32>
    %c1_127 = arith.constant 1 : index
    %c0_128 = arith.constant 0 : index
    %c0_129 = arith.constant 0 : index
    %302 = vector.load %arg13[%c1_127, %c0_128, %c0_129] : memref<2x1x128xf32, #tpu.memory_space<vmem>>, vector<1x1x128xf32>
    %303 = vector.shape_cast %302 : vector<1x1x128xf32> to vector<1x128xf32>
    %c1_130 = arith.constant 1 : index
    %c0_131 = arith.constant 0 : index
    %c0_132 = arith.constant 0 : index
    %304 = vector.load %arg14[%c1_130, %c0_131, %c0_132] : memref<2x1x128xf32, #tpu.memory_space<vmem>>, vector<1x1x128xf32>
    %305 = vector.shape_cast %304 : vector<1x1x128xf32> to vector<1x128xf32>
    %cst_133 = arith.constant dense<0.000000e+00> : vector<8xf32>
    %306 = vector.multi_reduction <add>, %301, %cst_133 [1] : vector<8x128xf32> to vector<8xf32>
    %307 = vector.shape_cast %306 : vector<8xf32> to vector<8x1xf32>
    %cst_134 = arith.constant 3.125000e-02 : f32
    %308 = vector.broadcast %cst_134 : f32 to vector<8x1xf32>
    %309 = arith.mulf %307, %308 : vector<8x1xf32>
    %310 = arith.mulf %301, %301 : vector<8x128xf32>
    %cst_135 = arith.constant dense<0.000000e+00> : vector<8xf32>
    %311 = vector.multi_reduction <add>, %310, %cst_135 [1] : vector<8x128xf32> to vector<8xf32>
    %312 = vector.shape_cast %311 : vector<8xf32> to vector<8x1xf32>
    %cst_136 = arith.constant 3.125000e-02 : f32
    %313 = vector.broadcast %cst_136 : f32 to vector<8x1xf32>
    %314 = arith.mulf %312, %313 : vector<8x1xf32>
    %315 = arith.mulf %309, %309 : vector<8x1xf32>
    %316 = arith.subf %314, %315 : vector<8x1xf32>
    %317 = vector.broadcast %309 : vector<8x1xf32> to vector<8x128xf32>
    %318 = arith.subf %301, %317 : vector<8x128xf32>
    %cst_137 = arith.constant 9.99999974E-6 : f32
    %319 = vector.broadcast %cst_137 : f32 to vector<8x1xf32>
    %320 = arith.addf %316, %319 : vector<8x1xf32>
    %321 = math.rsqrt %320 : vector<8x1xf32>
    %322 = vector.broadcast %321 : vector<8x1xf32> to vector<8x128xf32>
    %323 = arith.mulf %318, %322 : vector<8x128xf32>
    %324 = vector.broadcast %303 : vector<1x128xf32> to vector<8x128xf32>
    %325 = arith.mulf %323, %324 : vector<8x128xf32>
    %326 = vector.broadcast %305 : vector<1x128xf32> to vector<8x128xf32>
    %327 = arith.addf %325, %326 : vector<8x128xf32>
    %328 = vector.shape_cast %327 : vector<8x128xf32> to vector<1x8x128xf32>
    %329 = arith.truncf %328 : vector<1x8x128xf32> to vector<1x8x128xbf16>
    %c0_138 = arith.constant 0 : index
    %c0_139 = arith.constant 0 : index
    %c0_140 = arith.constant 0 : index
    %330 = vector.load %arg15[%c0_138, %c0_139, %c0_140] : memref<1x8x128xbf16, #tpu.memory_space<vmem>>, vector<1x8x128xbf16>
    tpu.vector_store %arg15[%c0_138, %c0_139, %c0_140], %329 {strides = array<i32>} : memref<1x8x128xbf16, #tpu.memory_space<vmem>>, vector<1x8x128xbf16>,
    return
  }
  func.func @transform_0(%arg0: i32) -> (i32, i32, i32) {
    %c0_i32 = arith.constant 0 : i32
    %c0_i32_0 = arith.constant 0 : i32
    %c0_i32_1 = arith.constant 0 : i32
    return %arg0, %c0_i32, %c0_i32_0 : i32, i32, i32
  }
  func.func @transform_1(%arg0: i32) -> (i32, i32, i32) {
    %c0_i32 = arith.constant 0 : i32
    %c0_i32_0 = arith.constant 0 : i32
    %c0_i32_1 = arith.constant 0 : i32
    %c0_i32_2 = arith.constant 0 : i32
    return %c0_i32, %c0_i32_0, %c0_i32_1 : i32, i32, i32
  }
  func.func @transform_2(%arg0: i32) -> (i32, i32, i32) {
    %c0_i32 = arith.constant 0 : i32
    %c0_i32_0 = arith.constant 0 : i32
    %c0_i32_1 = arith.constant 0 : i32
    %c0_i32_2 = arith.constant 0 : i32
    return %c0_i32, %c0_i32_0, %c0_i32_1 : i32, i32, i32
  }
  func.func @transform_3(%arg0: i32) -> (i32, i32, i32) {
    %c0_i32 = arith.constant 0 : i32
    %c0_i32_0 = arith.constant 0 : i32
    %c0_i32_1 = arith.constant 0 : i32
    %c0_i32_2 = arith.constant 0 : i32
    return %c0_i32, %c0_i32_0, %c0_i32_1 : i32, i32, i32
  }
  func.func @transform_4(%arg0: i32) -> (i32, i32, i32) {
    %c0_i32 = arith.constant 0 : i32
    %c0_i32_0 = arith.constant 0 : i32
    %c0_i32_1 = arith.constant 0 : i32
    %c0_i32_2 = arith.constant 0 : i32
    return %c0_i32, %c0_i32_0, %c0_i32_1 : i32, i32, i32
  }
  func.func @transform_5(%arg0: i32) -> (i32, i32, i32) {
    %c0_i32 = arith.constant 0 : i32
    %c0_i32_0 = arith.constant 0 : i32
    %c0_i32_1 = arith.constant 0 : i32
    %c0_i32_2 = arith.constant 0 : i32
    return %c0_i32, %c0_i32_0, %c0_i32_1 : i32, i32, i32
  }
  func.func @transform_6(%arg0: i32) -> (i32, i32, i32) {
    %c0_i32 = arith.constant 0 : i32
    %c0_i32_0 = arith.constant 0 : i32
    %c0_i32_1 = arith.constant 0 : i32
    %c0_i32_2 = arith.constant 0 : i32
    return %c0_i32, %c0_i32_0, %c0_i32_1 : i32, i32, i32
  }
  func.func @transform_7(%arg0: i32) -> (i32, i32, i32) {
    %c0_i32 = arith.constant 0 : i32
    %c0_i32_0 = arith.constant 0 : i32
    %c0_i32_1 = arith.constant 0 : i32
    %c0_i32_2 = arith.constant 0 : i32
    return %c0_i32, %c0_i32_0, %c0_i32_1 : i32, i32, i32
  }
  func.func @transform_8(%arg0: i32) -> (i32, i32, i32) {
    %c0_i32 = arith.constant 0 : i32
    %c0_i32_0 = arith.constant 0 : i32
    %c0_i32_1 = arith.constant 0 : i32
    %c0_i32_2 = arith.constant 0 : i32
    return %c0_i32, %c0_i32_0, %c0_i32_1 : i32, i32, i32
  }
  func.func @transform_9(%arg0: i32) -> (i32, i32, i32) {
    %c0_i32 = arith.constant 0 : i32
    %c0_i32_0 = arith.constant 0 : i32
    %c0_i32_1 = arith.constant 0 : i32
    %c0_i32_2 = arith.constant 0 : i32
    return %c0_i32, %c0_i32_0, %c0_i32_1 : i32, i32, i32
  }
  func.func @transform_10(%arg0: i32) -> (i32, i32, i32) {
    %c0_i32 = arith.constant 0 : i32
    %c0_i32_0 = arith.constant 0 : i32
    %c0_i32_1 = arith.constant 0 : i32
    %c0_i32_2 = arith.constant 0 : i32
    return %c0_i32, %c0_i32_0, %c0_i32_1 : i32, i32, i32
  }
  func.func @transform_11(%arg0: i32) -> (i32, i32, i32) {
    %c0_i32 = arith.constant 0 : i32
    %c0_i32_0 = arith.constant 0 : i32
    %c0_i32_1 = arith.constant 0 : i32
    %c0_i32_2 = arith.constant 0 : i32
    return %c0_i32, %c0_i32_0, %c0_i32_1 : i32, i32, i32
  }
  func.func @transform_12(%arg0: i32) -> (i32, i32, i32) {
    %c0_i32 = arith.constant 0 : i32
    %c0_i32_0 = arith.constant 0 : i32
    %c0_i32_1 = arith.constant 0 : i32
    %c0_i32_2 = arith.constant 0 : i32
    return %c0_i32, %c0_i32_0, %c0_i32_1 : i32, i32, i32
  }
  func.func @transform_13(%arg0: i32) -> (i32, i32, i32) {
    %c0_i32 = arith.constant 0 : i32
    %c0_i32_0 = arith.constant 0 : i32
    %c0_i32_1 = arith.constant 0 : i32
    %c0_i32_2 = arith.constant 0 : i32
    return %c0_i32, %c0_i32_0, %c0_i32_1 : i32, i32, i32
  }
  func.func @transform_14(%arg0: i32) -> (i32, i32, i32) {
    %c0_i32 = arith.constant 0 : i32
    %c0_i32_0 = arith.constant 0 : i32
    %c0_i32_1 = arith.constant 0 : i32
    return %arg0, %c0_i32, %c0_i32_0 : i32, i32, i32
  }
}

module attributes {stable_mosaic.version = 11 : i64} {
  func.func @_encoder_kernel(%arg0: i32, %arg1: memref<1x8x32xf32, #tpu.memory_space<vmem>>, %arg2: memref<1x8x32xf32, #tpu.memory_space<vmem>>, %arg3: memref<2x128x384xbf16, #tpu.memory_space<vmem>>, %arg4: memref<2x1x384xf32, #tpu.memory_space<vmem>>, %arg5: memref<2x32x128xbf16, #tpu.memory_space<vmem>>, %arg6: memref<2x1x128xf32, #tpu.memory_space<vmem>>, %arg7: memref<2x128x128xbf16, #tpu.memory_space<vmem>>, %arg8: memref<2x1x128xf32, #tpu.memory_space<vmem>>, %arg9: memref<2x128x128xbf16, #tpu.memory_space<vmem>>, %arg10: memref<2x1x128xf32, #tpu.memory_space<vmem>>, %arg11: memref<2x1x128xf32, #tpu.memory_space<vmem>>, %arg12: memref<2x1x128xf32, #tpu.memory_space<vmem>>, %arg13: memref<2x1x128xf32, #tpu.memory_space<vmem>>, %arg14: memref<2x1x128xf32, #tpu.memory_space<vmem>>, %arg15: memref<1x8x128xbf16, #tpu.memory_space<vmem>>) attributes {dimension_semantics = [#tpu.dimension_semantics<parallel>], iteration_bounds = array<i64: 2>, scalar_prefetch = 0 : i64, scratch_operands = 0 : i64, tpu.core_type = #tpu.core_type<tc>, window_params = [{transform_indices = @transform_0, window_bounds = array<i64: 1, 8, 32>}, {pipeline_mode = #tpu.pipeline_mode<synchronous>, transform_indices = @transform_1, window_bounds = array<i64: 1, 8, 32>}, {pipeline_mode = #tpu.pipeline_mode<synchronous>, transform_indices = @transform_2, window_bounds = array<i64: 2, 128, 384>}, {pipeline_mode = #tpu.pipeline_mode<synchronous>, transform_indices = @transform_3, window_bounds = array<i64: 2, 1, 384>}, {pipeline_mode = #tpu.pipeline_mode<synchronous>, transform_indices = @transform_4, window_bounds = array<i64: 2, 32, 128>}, {pipeline_mode = #tpu.pipeline_mode<synchronous>, transform_indices = @transform_5, window_bounds = array<i64: 2, 1, 128>}, {pipeline_mode = #tpu.pipeline_mode<synchronous>, transform_indices = @transform_6, window_bounds = array<i64: 2, 128, 128>}, {pipeline_mode = #tpu.pipeline_mode<synchronous>, transform_indices = @transform_7, window_bounds = array<i64: 2, 1, 128>}, {pipeline_mode = #tpu.pipeline_mode<synchronous>, transform_indices = @transform_8, window_bounds = array<i64: 2, 128, 128>}, {pipeline_mode = #tpu.pipeline_mode<synchronous>, transform_indices = @transform_9, window_bounds = array<i64: 2, 1, 128>}, {pipeline_mode = #tpu.pipeline_mode<synchronous>, transform_indices = @transform_10, window_bounds = array<i64: 2, 1, 128>}, {pipeline_mode = #tpu.pipeline_mode<synchronous>, transform_indices = @transform_11, window_bounds = array<i64: 2, 1, 128>}, {pipeline_mode = #tpu.pipeline_mode<synchronous>, transform_indices = @transform_12, window_bounds = array<i64: 2, 1, 128>}, {pipeline_mode = #tpu.pipeline_mode<synchronous>, transform_indices = @transform_13, window_bounds = array<i64: 2, 1, 128>}, {transform_indices = @transform_14, window_bounds = array<i64: 1, 8, 128>}]} {
    %c0 = arith.constant 0 : index
    %c0_0 = arith.constant 0 : index
    %c0_1 = arith.constant 0 : index
    %0 = vector.load %arg1[%c0, %c0_0, %c0_1] : memref<1x8x32xf32, #tpu.memory_space<vmem>>, vector<1x8x32xf32>
    %c0_2 = arith.constant 0 : index
    %c0_3 = arith.constant 0 : index
    %c0_4 = arith.constant 0 : index
    %1 = vector.load %arg2[%c0_2, %c0_3, %c0_4] : memref<1x8x32xf32, #tpu.memory_space<vmem>>, vector<1x8x32xf32>
    %2 = arith.addf %0, %1 : vector<1x8x32xf32>
    %3 = vector.shape_cast %2 : vector<1x8x32xf32> to vector<8x32xf32>
    %cst = arith.constant 0.000000e+00 : f32
    %4 = vector.broadcast %cst : f32 to vector<8x96xf32>
    %5 = tpu.concatenate %3, %4 in 1 : vector<8x32xf32>, vector<8x96xf32> -> vector<8x128xf32>
    %6 = arith.truncf %5 : vector<8x128xf32> to vector<8x128xbf16>
    %c0_5 = arith.constant 0 : index
    %c0_6 = arith.constant 0 : index
    %c0_7 = arith.constant 0 : index
    %7 = vector.load %arg3[%c0_5, %c0_6, %c0_7] : memref<2x128x384xbf16, #tpu.memory_space<vmem>>, vector<1x128x384xbf16>
    %8 = vector.shape_cast %7 : vector<1x128x384xbf16> to vector<128x384xbf16>
    %cst_8 = arith.constant dense<0.000000e+00> : vector<8x384xf32>
    %9 = tpu.matmul %6, %8, %cst_8 {dimension_numbers = #tpu.dot_dimension_numbers<[1], [0], [0], [1], [0, 0, 1, 1], [], []>} : vector<8x128xbf16>, vector<128x384xbf16>, vector<8x384xf32> -> vector<8x384xf32>
    %c0_9 = arith.constant 0 : index
    %c0_10 = arith.constant 0 : index
    %c0_11 = arith.constant 0 : index
    %10 = vector.load %arg4[%c0_9, %c0_10, %c0_11] : memref<2x1x384xf32, #tpu.memory_space<vmem>>, vector<1x1x384xf32>
    %11 = vector.shape_cast %10 : vector<1x1x384xf32> to vector<1x384xf32>
    %12 = vector.broadcast %11 : vector<1x384xf32> to vector<8x384xf32>
    %13 = arith.addf %9, %12 : vector<8x384xf32>
    %14 = arith.truncf %13 : vector<8x384xf32> to vector<8x384xbf16>
    %15 = vector.extract_strided_slice %14 {offsets = [0, 0], sizes = [8, 128], strides = [1, 1]} : vector<8x384xbf16> to vector<8x128xbf16>
    %16 = vector.shape_cast %15 : vector<8x128xbf16> to vector<1x8x128xbf16>
    %17 = vector.extract_strided_slice %14 {offsets = [0, 128], sizes = [8, 128], strides = [1, 1]} : vector<8x384xbf16> to vector<8x128xbf16>
    %18 = vector.shape_cast %17 : vector<8x128xbf16> to vector<1x8x128xbf16>
    %19 = vector.extract_strided_slice %14 {offsets = [0, 256], sizes = [8, 128], strides = [1, 1]} : vector<8x384xbf16> to vector<8x128xbf16>
    %20 = vector.shape_cast %19 : vector<8x128xbf16> to vector<1x8x128xbf16>
    %21 = vector.extract_strided_slice %16 {offsets = [0, 0, 0], sizes = [1, 8, 8], strides = [1, 1, 1]} : vector<1x8x128xbf16> to vector<1x8x8xbf16>
    %22 = vector.extract_strided_slice %18 {offsets = [0, 0, 0], sizes = [1, 8, 8], strides = [1, 1, 1]} : vector<1x8x128xbf16> to vector<1x8x8xbf16>
    %23 = vector.extract_strided_slice %20 {offsets = [0, 0, 0], sizes = [1, 8, 8], strides = [1, 1, 1]} : vector<1x8x128xbf16> to vector<1x8x8xbf16>
    "tpu.trace_start"() <{level = 10 : i32, message = "bqd,bkd->bqk"}> : () -> ()
    %cst_12 = arith.constant dense<0.000000e+00> : vector<1x8x8xf32>
    %24 = tpu.matmul %21, %22, %cst_12 {dimension_numbers = #tpu.dot_dimension_numbers<[2], [2], [1], [1], [0, 0, 0, 1, 1, 1], [0], [0]>} : vector<1x8x8xbf16>, vector<1x8x8xbf16>, vector<1x8x8xf32> -> vector<1x8x8xf32>
    "tpu.trace_stop"() : () -> ()
    %cst_13 = arith.constant dense<0xFF800000> : vector<1x8xf32>
    %25 = vector.multi_reduction <maximumf>, %24, %cst_13 [2] : vector<1x8x8xf32> to vector<1x8xf32>
    %26 = vector.shape_cast %25 : vector<1x8xf32> to vector<1x8x1xf32>
    %27 = vector.broadcast %26 : vector<1x8x1xf32> to vector<1x8x8xf32>
    %28 = arith.subf %24, %27 : vector<1x8x8xf32>
    %29 = math.exp %28 : vector<1x8x8xf32>
    %cst_14 = arith.constant dense<0.000000e+00> : vector<1x8xf32>
    %30 = vector.multi_reduction <add>, %29, %cst_14 [2] : vector<1x8x8xf32> to vector<1x8xf32>
    %31 = vector.shape_cast %30 : vector<1x8xf32> to vector<1x8x1xf32>
    %32 = tpu.reciprocal %31 {approx = true} : vector<1x8x1xf32> -> vector<1x8x1xf32>
    %33 = vector.broadcast %32 : vector<1x8x1xf32> to vector<1x8x8xf32>
    %34 = arith.mulf %29, %33 : vector<1x8x8xf32>
    %35 = arith.truncf %34 : vector<1x8x8xf32> to vector<1x8x8xbf16>
    "tpu.trace_start"() <{level = 10 : i32, message = "bqk,bkd->bqd"}> : () -> ()
    %cst_15 = arith.constant dense<0.000000e+00> : vector<1x8x8xf32>
    %36 = tpu.matmul %35, %23, %cst_15 {dimension_numbers = #tpu.dot_dimension_numbers<[2], [1], [1], [2], [0, 0, 0, 1, 1, 2], [0], [0]>} : vector<1x8x8xbf16>, vector<1x8x8xbf16>, vector<1x8x8xf32> -> vector<1x8x8xf32>
    "tpu.trace_stop"() : () -> ()
    %37 = vector.extract_strided_slice %16 {offsets = [0, 0, 8], sizes = [1, 8, 8], strides = [1, 1, 1]} : vector<1x8x128xbf16> to vector<1x8x8xbf16>
    %38 = vector.extract_strided_slice %18 {offsets = [0, 0, 8], sizes = [1, 8, 8], strides = [1, 1, 1]} : vector<1x8x128xbf16> to vector<1x8x8xbf16>
    %39 = vector.extract_strided_slice %20 {offsets = [0, 0, 8], sizes = [1, 8, 8], strides = [1, 1, 1]} : vector<1x8x128xbf16> to vector<1x8x8xbf16>
    "tpu.trace_start"() <{level = 10 : i32, message = "bqd,bkd->bqk"}> : () -> ()
    %cst_16 = arith.constant dense<0.000000e+00> : vector<1x8x8xf32>
    %40 = tpu.matmul %37, %38, %cst_16 {dimension_numbers = #tpu.dot_dimension_numbers<[2], [2], [1], [1], [0, 0, 0, 1, 1, 1], [0], [0]>} : vector<1x8x8xbf16>, vector<1x8x8xbf16>, vector<1x8x8xf32> -> vector<1x8x8xf32>
    "tpu.trace_stop"() : () -> ()
    %cst_17 = arith.constant dense<0xFF800000> : vector<1x8xf32>
    %41 = vector.multi_reduction <maximumf>, %40, %cst_17 [2] : vector<1x8x8xf32> to vector<1x8xf32>
    %42 = vector.shape_cast %41 : vector<1x8xf32> to vector<1x8x1xf32>
    %43 = vector.broadcast %42 : vector<1x8x1xf32> to vector<1x8x8xf32>
    %44 = arith.subf %40, %43 : vector<1x8x8xf32>
    %45 = math.exp %44 : vector<1x8x8xf32>
    %cst_18 = arith.constant dense<0.000000e+00> : vector<1x8xf32>
    %46 = vector.multi_reduction <add>, %45, %cst_18 [2] : vector<1x8x8xf32> to vector<1x8xf32>
    %47 = vector.shape_cast %46 : vector<1x8xf32> to vector<1x8x1xf32>
    %48 = tpu.reciprocal %47 {approx = true} : vector<1x8x1xf32> -> vector<1x8x1xf32>
    %49 = vector.broadcast %48 : vector<1x8x1xf32> to vector<1x8x8xf32>
    %50 = arith.mulf %45, %49 : vector<1x8x8xf32>
    %51 = arith.truncf %50 : vector<1x8x8xf32> to vector<1x8x8xbf16>
    "tpu.trace_start"() <{level = 10 : i32, message = "bqk,bkd->bqd"}> : () -> ()
    %cst_19 = arith.constant dense<0.000000e+00> : vector<1x8x8xf32>
    %52 = tpu.matmul %51, %39, %cst_19 {dimension_numbers = #tpu.dot_dimension_numbers<[2], [1], [1], [2], [0, 0, 0, 1, 1, 2], [0], [0]>} : vector<1x8x8xbf16>, vector<1x8x8xbf16>, vector<1x8x8xf32> -> vector<1x8x8xf32>
    "tpu.trace_stop"() : () -> ()
    %53 = vector.extract_strided_slice %16 {offsets = [0, 0, 16], sizes = [1, 8, 8], strides = [1, 1, 1]} : vector<1x8x128xbf16> to vector<1x8x8xbf16>
    %54 = vector.extract_strided_slice %18 {offsets = [0, 0, 16], sizes = [1, 8, 8], strides = [1, 1, 1]} : vector<1x8x128xbf16> to vector<1x8x8xbf16>
    %55 = vector.extract_strided_slice %20 {offsets = [0, 0, 16], sizes = [1, 8, 8], strides = [1, 1, 1]} : vector<1x8x128xbf16> to vector<1x8x8xbf16>
    "tpu.trace_start"() <{level = 10 : i32, message = "bqd,bkd->bqk"}> : () -> ()
    %cst_20 = arith.constant dense<0.000000e+00> : vector<1x8x8xf32>
    %56 = tpu.matmul %53, %54, %cst_20 {dimension_numbers = #tpu.dot_dimension_numbers<[2], [2], [1], [1], [0, 0, 0, 1, 1, 1], [0], [0]>} : vector<1x8x8xbf16>, vector<1x8x8xbf16>, vector<1x8x8xf32> -> vector<1x8x8xf32>
    "tpu.trace_stop"() : () -> ()
    %cst_21 = arith.constant dense<0xFF800000> : vector<1x8xf32>
    %57 = vector.multi_reduction <maximumf>, %56, %cst_21 [2] : vector<1x8x8xf32> to vector<1x8xf32>
    %58 = vector.shape_cast %57 : vector<1x8xf32> to vector<1x8x1xf32>
    %59 = vector.broadcast %58 : vector<1x8x1xf32> to vector<1x8x8xf32>
    %60 = arith.subf %56, %59 : vector<1x8x8xf32>
    %61 = math.exp %60 : vector<1x8x8xf32>
    %cst_22 = arith.constant dense<0.000000e+00> : vector<1x8xf32>
    %62 = vector.multi_reduction <add>, %61, %cst_22 [2] : vector<1x8x8xf32> to vector<1x8xf32>
    %63 = vector.shape_cast %62 : vector<1x8xf32> to vector<1x8x1xf32>
    %64 = tpu.reciprocal %63 {approx = true} : vector<1x8x1xf32> -> vector<1x8x1xf32>
    %65 = vector.broadcast %64 : vector<1x8x1xf32> to vector<1x8x8xf32>
    %66 = arith.mulf %61, %65 : vector<1x8x8xf32>
    %67 = arith.truncf %66 : vector<1x8x8xf32> to vector<1x8x8xbf16>
    "tpu.trace_start"() <{level = 10 : i32, message = "bqk,bkd->bqd"}> : () -> ()
    %cst_23 = arith.constant dense<0.000000e+00> : vector<1x8x8xf32>
    %68 = tpu.matmul %67, %55, %cst_23 {dimension_numbers = #tpu.dot_dimension_numbers<[2], [1], [1], [2], [0, 0, 0, 1, 1, 2], [0], [0]>} : vector<1x8x8xbf16>, vector<1x8x8xbf16>, vector<1x8x8xf32> -> vector<1x8x8xf32>
    "tpu.trace_stop"() : () -> ()
    %69 = vector.extract_strided_slice %16 {offsets = [0, 0, 24], sizes = [1, 8, 8], strides = [1, 1, 1]} : vector<1x8x128xbf16> to vector<1x8x8xbf16>
    %70 = vector.extract_strided_slice %18 {offsets = [0, 0, 24], sizes = [1, 8, 8], strides = [1, 1, 1]} : vector<1x8x128xbf16> to vector<1x8x8xbf16>
    %71 = vector.extract_strided_slice %20 {offsets = [0, 0, 24], sizes = [1, 8, 8], strides = [1, 1, 1]} : vector<1x8x128xbf16> to vector<1x8x8xbf16>
    "tpu.trace_start"() <{level = 10 : i32, message = "bqd,bkd->bqk"}> : () -> ()
    %cst_24 = arith.constant dense<0.000000e+00> : vector<1x8x8xf32>
    %72 = tpu.matmul %69, %70, %cst_24 {dimension_numbers = #tpu.dot_dimension_numbers<[2], [2], [1], [1], [0, 0, 0, 1, 1, 1], [0], [0]>} : vector<1x8x8xbf16>, vector<1x8x8xbf16>, vector<1x8x8xf32> -> vector<1x8x8xf32>
    "tpu.trace_stop"() : () -> ()
    %cst_25 = arith.constant dense<0xFF800000> : vector<1x8xf32>
    %73 = vector.multi_reduction <maximumf>, %72, %cst_25 [2] : vector<1x8x8xf32> to vector<1x8xf32>
    %74 = vector.shape_cast %73 : vector<1x8xf32> to vector<1x8x1xf32>
    %75 = vector.broadcast %74 : vector<1x8x1xf32> to vector<1x8x8xf32>
    %76 = arith.subf %72, %75 : vector<1x8x8xf32>
    %77 = math.exp %76 : vector<1x8x8xf32>
    %cst_26 = arith.constant dense<0.000000e+00> : vector<1x8xf32>
    %78 = vector.multi_reduction <add>, %77, %cst_26 [2] : vector<1x8x8xf32> to vector<1x8xf32>
    %79 = vector.shape_cast %78 : vector<1x8xf32> to vector<1x8x1xf32>
    %80 = tpu.reciprocal %79 {approx = true} : vector<1x8x1xf32> -> vector<1x8x1xf32>
    %81 = vector.broadcast %80 : vector<1x8x1xf32> to vector<1x8x8xf32>
    %82 = arith.mulf %77, %81 : vector<1x8x8xf32>
    %83 = arith.truncf %82 : vector<1x8x8xf32> to vector<1x8x8xbf16>
    "tpu.trace_start"() <{level = 10 : i32, message = "bqk,bkd->bqd"}> : () -> ()
    %cst_27 = arith.constant dense<0.000000e+00> : vector<1x8x8xf32>
    %84 = tpu.matmul %83, %71, %cst_27 {dimension_numbers = #tpu.dot_dimension_numbers<[2], [1], [1], [2], [0, 0, 0, 1, 1, 2], [0], [0]>} : vector<1x8x8xbf16>, vector<1x8x8xbf16>, vector<1x8x8xf32> -> vector<1x8x8xf32>
    "tpu.trace_stop"() : () -> ()
    %85 = tpu.concatenate %36, %52, %68, %84 in 2 : vector<1x8x8xf32>, vector<1x8x8xf32>, vector<1x8x8xf32>, vector<1x8x8xf32> -> vector<1x8x32xf32>
    %86 = vector.shape_cast %85 : vector<1x8x32xf32> to vector<8x32xf32>
    %87 = arith.truncf %86 : vector<8x32xf32> to vector<8x32xbf16>
    %c0_28 = arith.constant 0 : index
    %c0_29 = arith.constant 0 : index
    %c0_30 = arith.constant 0 : index
    %88 = vector.load %arg5[%c0_28, %c0_29, %c0_30] : memref<2x32x128xbf16, #tpu.memory_space<vmem>>, vector<1x32x128xbf16>
    %89 = vector.shape_cast %88 : vector<1x32x128xbf16> to vector<32x128xbf16>
    %cst_31 = arith.constant dense<0.000000e+00> : vector<8x128xf32>
    %90 = tpu.matmul %87, %89, %cst_31 {dimension_numbers = #tpu.dot_dimension_numbers<[1], [0], [0], [1], [0, 0, 1, 1], [], []>} : vector<8x32xbf16>, vector<32x128xbf16>, vector<8x128xf32> -> vector<8x128xf32>
    %c0_32 = arith.constant 0 : index
    %c0_33 = arith.constant 0 : index
    %c0_34 = arith.constant 0 : index
    %91 = vector.load %arg6[%c0_32, %c0_33, %c0_34] : memref<2x1x128xf32, #tpu.memory_space<vmem>>, vector<1x1x128xf32>
    %92 = vector.shape_cast %91 : vector<1x1x128xf32> to vector<1x128xf32>
    %93 = vector.broadcast %92 : vector<1x128xf32> to vector<8x128xf32>
    %94 = arith.addf %90, %93 : vector<8x128xf32>
    %95 = arith.addf %5, %94 : vector<8x128xf32>
    %c0_35 = arith.constant 0 : index
    %c0_36 = arith.constant 0 : index
    %c0_37 = arith.constant 0 : index
    %96 = vector.load %arg11[%c0_35, %c0_36, %c0_37] : memref<2x1x128xf32, #tpu.memory_space<vmem>>, vector<1x1x128xf32>
    %97 = vector.shape_cast %96 : vector<1x1x128xf32> to vector<1x128xf32>
    %c0_38 = arith.constant 0 : index
    %c0_39 = arith.constant 0 : index
    %c0_40 = arith.constant 0 : index
    %98 = vector.load %arg12[%c0_38, %c0_39, %c0_40] : memref<2x1x128xf32, #tpu.memory_space<vmem>>, vector<1x1x128xf32>
    %99 = vector.shape_cast %98 : vector<1x1x128xf32> to vector<1x128xf32>
    %cst_41 = arith.constant dense<0.000000e+00> : vector<8xf32>
    %100 = vector.multi_reduction <add>, %95, %cst_41 [1] : vector<8x128xf32> to vector<8xf32>
    %101 = vector.shape_cast %100 : vector<8xf32> to vector<8x1xf32>
    %cst_42 = arith.constant 3.125000e-02 : f32
    %102 = vector.broadcast %cst_42 : f32 to vector<8x1xf32>
    %103 = arith.mulf %101, %102 : vector<8x1xf32>
    %104 = arith.mulf %95, %95 : vector<8x128xf32>
    %cst_43 = arith.constant dense<0.000000e+00> : vector<8xf32>
    %105 = vector.multi_reduction <add>, %104, %cst_43 [1] : vector<8x128xf32> to vector<8xf32>
    %106 = vector.shape_cast %105 : vector<8xf32> to vector<8x1xf32>
    %cst_44 = arith.constant 3.125000e-02 : f32
    %107 = vector.broadcast %cst_44 : f32 to vector<8x1xf32>
    %108 = arith.mulf %106, %107 : vector<8x1xf32>
    %109 = arith.mulf %103, %103 : vector<8x1xf32>
    %110 = arith.subf %108, %109 : vector<8x1xf32>
    %111 = vector.broadcast %103 : vector<8x1xf32> to vector<8x128xf32>
    %112 = arith.subf %95, %111 : vector<8x128xf32>
    %cst_45 = arith.constant 9.99999974E-6 : f32
    %113 = vector.broadcast %cst_45 : f32 to vector<8x1xf32>
    %114 = arith.addf %110, %113 : vector<8x1xf32>
    %115 = math.rsqrt %114 : vector<8x1xf32>
    %116 = vector.broadcast %115 : vector<8x1xf32> to vector<8x128xf32>
    %117 = arith.mulf %112, %116 : vector<8x128xf32>
    %118 = vector.broadcast %97 : vector<1x128xf32> to vector<8x128xf32>
    %119 = arith.mulf %117, %118 : vector<8x128xf32>
    %120 = vector.broadcast %99 : vector<1x128xf32> to vector<8x128xf32>
    %121 = arith.addf %119, %120 : vector<8x128xf32>
    %122 = arith.truncf %121 : vector<8x128xf32> to vector<8x128xbf16>
    %c0_46 = arith.constant 0 : index
    %c0_47 = arith.constant 0 : index
    %c0_48 = arith.constant 0 : index
    %123 = vector.load %arg7[%c0_46, %c0_47, %c0_48] : memref<2x128x128xbf16, #tpu.memory_space<vmem>>, vector<1x128x128xbf16>
    %124 = vector.shape_cast %123 : vector<1x128x128xbf16> to vector<128x128xbf16>
    %cst_49 = arith.constant dense<0.000000e+00> : vector<8x128xf32>
    %125 = tpu.matmul %122, %124, %cst_49 {dimension_numbers = #tpu.dot_dimension_numbers<[1], [0], [0], [1], [0, 0, 1, 1], [], []>} : vector<8x128xbf16>, vector<128x128xbf16>, vector<8x128xf32> -> vector<8x128xf32>
    %c0_50 = arith.constant 0 : index
    %c0_51 = arith.constant 0 : index
    %c0_52 = arith.constant 0 : index
    %126 = vector.load %arg8[%c0_50, %c0_51, %c0_52] : memref<2x1x128xf32, #tpu.memory_space<vmem>>, vector<1x1x128xf32>
    %127 = vector.shape_cast %126 : vector<1x1x128xf32> to vector<1x128xf32>
    %128 = vector.broadcast %127 : vector<1x128xf32> to vector<8x128xf32>
    %129 = arith.addf %125, %128 : vector<8x128xf32>
    %cst_53 = arith.constant 0.000000e+00 : f32
    %130 = vector.broadcast %cst_53 : f32 to vector<8x128xf32>
    %131 = arith.maximumf %129, %130 : vector<8x128xf32>
    %132 = arith.truncf %131 : vector<8x128xf32> to vector<8x128xbf16>
    %c0_54 = arith.constant 0 : index
    %c0_55 = arith.constant 0 : index
    %c0_56 = arith.constant 0 : index
    %133 = vector.load %arg9[%c0_54, %c0_55, %c0_56] : memref<2x128x128xbf16, #tpu.memory_space<vmem>>, vector<1x128x128xbf16>
    %134 = vector.shape_cast %133 : vector<1x128x128xbf16> to vector<128x128xbf16>
    %cst_57 = arith.constant dense<0.000000e+00> : vector<8x128xf32>
    %135 = tpu.matmul %132, %134, %cst_57 {dimension_numbers = #tpu.dot_dimension_numbers<[1], [0], [0], [1], [0, 0, 1, 1], [], []>} : vector<8x128xbf16>, vector<128x128xbf16>, vector<8x128xf32> -> vector<8x128xf32>
    %c0_58 = arith.constant 0 : index
    %c0_59 = arith.constant 0 : index
    %c0_60 = arith.constant 0 : index
    %136 = vector.load %arg10[%c0_58, %c0_59, %c0_60] : memref<2x1x128xf32, #tpu.memory_space<vmem>>, vector<1x1x128xf32>
    %137 = vector.shape_cast %136 : vector<1x1x128xf32> to vector<1x128xf32>
    %138 = vector.broadcast %137 : vector<1x128xf32> to vector<8x128xf32>
    %139 = arith.addf %135, %138 : vector<8x128xf32>
    %140 = arith.addf %121, %139 : vector<8x128xf32>
    %c0_61 = arith.constant 0 : index
    %c0_62 = arith.constant 0 : index
    %c0_63 = arith.constant 0 : index
    %141 = vector.load %arg13[%c0_61, %c0_62, %c0_63] : memref<2x1x128xf32, #tpu.memory_space<vmem>>, vector<1x1x128xf32>
    %142 = vector.shape_cast %141 : vector<1x1x128xf32> to vector<1x128xf32>
    %c0_64 = arith.constant 0 : index
    %c0_65 = arith.constant 0 : index
    %c0_66 = arith.constant 0 : index
    %143 = vector.load %arg14[%c0_64, %c0_65, %c0_66] : memref<2x1x128xf32, #tpu.memory_space<vmem>>, vector<1x1x128xf32>
    %144 = vector.shape_cast %143 : vector<1x1x128xf32> to vector<1x128xf32>
    %cst_67 = arith.constant dense<0.000000e+00> : vector<8xf32>
    %145 = vector.multi_reduction <add>, %140, %cst_67 [1] : vector<8x128xf32> to vector<8xf32>
    %146 = vector.shape_cast %145 : vector<8xf32> to vector<8x1xf32>
    %cst_68 = arith.constant 3.125000e-02 : f32
    %147 = vector.broadcast %cst_68 : f32 to vector<8x1xf32>
    %148 = arith.mulf %146, %147 : vector<8x1xf32>
    %149 = arith.mulf %140, %140 : vector<8x128xf32>
    %cst_69 = arith.constant dense<0.000000e+00> : vector<8xf32>
    %150 = vector.multi_reduction <add>, %149, %cst_69 [1] : vector<8x128xf32> to vector<8xf32>
    %151 = vector.shape_cast %150 : vector<8xf32> to vector<8x1xf32>
    %cst_70 = arith.constant 3.125000e-02 : f32
    %152 = vector.broadcast %cst_70 : f32 to vector<8x1xf32>
    %153 = arith.mulf %151, %152 : vector<8x1xf32>
    %154 = arith.mulf %148, %148 : vector<8x1xf32>
    %155 = arith.subf %153, %154 : vector<8x1xf32>
    %156 = vector.broadcast %148 : vector<8x1xf32> to vector<8x128xf32>
    %157 = arith.subf %140, %156 : vector<8x128xf32>
    %cst_71 = arith.constant 9.99999974E-6 : f32
    %158 = vector.broadcast %cst_71 : f32 to vector<8x1xf32>
    %159 = arith.addf %155, %158 : vector<8x1xf32>
    %160 = math.rsqrt %159 : vector<8x1xf32>
    %161 = vector.broadcast %160 : vector<8x1xf32> to vector<8x128xf32>
    %162 = arith.mulf %157, %161 : vector<8x128xf32>
    %163 = vector.broadcast %142 : vector<1x128xf32> to vector<8x128xf32>
    %164 = arith.mulf %162, %163 : vector<8x128xf32>
    %165 = vector.broadcast %144 : vector<1x128xf32> to vector<8x128xf32>
    %166 = arith.addf %164, %165 : vector<8x128xf32>
    %167 = arith.truncf %166 : vector<8x128xf32> to vector<8x128xbf16>
    %c1 = arith.constant 1 : index
    %c0_72 = arith.constant 0 : index
    %c0_73 = arith.constant 0 : index
    %168 = vector.load %arg3[%c1, %c0_72, %c0_73] : memref<2x128x384xbf16, #tpu.memory_space<vmem>>, vector<1x128x384xbf16>
    %169 = vector.shape_cast %168 : vector<1x128x384xbf16> to vector<128x384xbf16>
    %cst_74 = arith.constant dense<0.000000e+00> : vector<8x384xf32>
    %170 = tpu.matmul %167, %169, %cst_74 {dimension_numbers = #tpu.dot_dimension_numbers<[1], [0], [0], [1], [0, 0, 1, 1], [], []>} : vector<8x128xbf16>, vector<128x384xbf16>, vector<8x384xf32> -> vector<8x384xf32>
    %c1_75 = arith.constant 1 : index
    %c0_76 = arith.constant 0 : index
    %c0_77 = arith.constant 0 : index
    %171 = vector.load %arg4[%c1_75, %c0_76, %c0_77] : memref<2x1x384xf32, #tpu.memory_space<vmem>>, vector<1x1x384xf32>
    %172 = vector.shape_cast %171 : vector<1x1x384xf32> to vector<1x384xf32>
    %173 = vector.broadcast %172 : vector<1x384xf32> to vector<8x384xf32>
    %174 = arith.addf %170, %173 : vector<8x384xf32>
    %175 = arith.truncf %174 : vector<8x384xf32> to vector<8x384xbf16>
    %176 = vector.extract_strided_slice %175 {offsets = [0, 0], sizes = [8, 128], strides = [1, 1]} : vector<8x384xbf16> to vector<8x128xbf16>
    %177 = vector.shape_cast %176 : vector<8x128xbf16> to vector<1x8x128xbf16>
    %178 = vector.extract_strided_slice %175 {offsets = [0, 128], sizes = [8, 128], strides = [1, 1]} : vector<8x384xbf16> to vector<8x128xbf16>
    %179 = vector.shape_cast %178 : vector<8x128xbf16> to vector<1x8x128xbf16>
    %180 = vector.extract_strided_slice %175 {offsets = [0, 256], sizes = [8, 128], strides = [1, 1]} : vector<8x384xbf16> to vector<8x128xbf16>
    %181 = vector.shape_cast %180 : vector<8x128xbf16> to vector<1x8x128xbf16>
    %182 = vector.extract_strided_slice %177 {offsets = [0, 0, 0], sizes = [1, 8, 8], strides = [1, 1, 1]} : vector<1x8x128xbf16> to vector<1x8x8xbf16>
    %183 = vector.extract_strided_slice %179 {offsets = [0, 0, 0], sizes = [1, 8, 8], strides = [1, 1, 1]} : vector<1x8x128xbf16> to vector<1x8x8xbf16>
    %184 = vector.extract_strided_slice %181 {offsets = [0, 0, 0], sizes = [1, 8, 8], strides = [1, 1, 1]} : vector<1x8x128xbf16> to vector<1x8x8xbf16>
    "tpu.trace_start"() <{level = 10 : i32, message = "bqd,bkd->bqk"}> : () -> ()
    %cst_78 = arith.constant dense<0.000000e+00> : vector<1x8x8xf32>
    %185 = tpu.matmul %182, %183, %cst_78 {dimension_numbers = #tpu.dot_dimension_numbers<[2], [2], [1], [1], [0, 0, 0, 1, 1, 1], [0], [0]>} : vector<1x8x8xbf16>, vector<1x8x8xbf16>, vector<1x8x8xf32> -> vector<1x8x8xf32>
    "tpu.trace_stop"() : () -> ()
    %cst_79 = arith.constant dense<0xFF800000> : vector<1x8xf32>
    %186 = vector.multi_reduction <maximumf>, %185, %cst_79 [2] : vector<1x8x8xf32> to vector<1x8xf32>
    %187 = vector.shape_cast %186 : vector<1x8xf32> to vector<1x8x1xf32>
    %188 = vector.broadcast %187 : vector<1x8x1xf32> to vector<1x8x8xf32>
    %189 = arith.subf %185, %188 : vector<1x8x8xf32>
    %190 = math.exp %189 : vector<1x8x8xf32>
    %cst_80 = arith.constant dense<0.000000e+00> : vector<1x8xf32>
    %191 = vector.multi_reduction <add>, %190, %cst_80 [2] : vector<1x8x8xf32> to vector<1x8xf32>
    %192 = vector.shape_cast %191 : vector<1x8xf32> to vector<1x8x1xf32>
    %193 = tpu.reciprocal %192 {approx = true} : vector<1x8x1xf32> -> vector<1x8x1xf32>
    %194 = vector.broadcast %193 : vector<1x8x1xf32> to vector<1x8x8xf32>
    %195 = arith.mulf %190, %194 : vector<1x8x8xf32>
    %196 = arith.truncf %195 : vector<1x8x8xf32> to vector<1x8x8xbf16>
    "tpu.trace_start"() <{level = 10 : i32, message = "bqk,bkd->bqd"}> : () -> ()
    %cst_81 = arith.constant dense<0.000000e+00> : vector<1x8x8xf32>
    %197 = tpu.matmul %196, %184, %cst_81 {dimension_numbers = #tpu.dot_dimension_numbers<[2], [1], [1], [2], [0, 0, 0, 1, 1, 2], [0], [0]>} : vector<1x8x8xbf16>, vector<1x8x8xbf16>, vector<1x8x8xf32> -> vector<1x8x8xf32>
    "tpu.trace_stop"() : () -> ()
    %198 = vector.extract_strided_slice %177 {offsets = [0, 0, 8], sizes = [1, 8, 8], strides = [1, 1, 1]} : vector<1x8x128xbf16> to vector<1x8x8xbf16>
    %199 = vector.extract_strided_slice %179 {offsets = [0, 0, 8], sizes = [1, 8, 8], strides = [1, 1, 1]} : vector<1x8x128xbf16> to vector<1x8x8xbf16>
    %200 = vector.extract_strided_slice %181 {offsets = [0, 0, 8], sizes = [1, 8, 8], strides = [1, 1, 1]} : vector<1x8x128xbf16> to vector<1x8x8xbf16>
    "tpu.trace_start"() <{level = 10 : i32, message = "bqd,bkd->bqk"}> : () -> ()
    %cst_82 = arith.constant dense<0.000000e+00> : vector<1x8x8xf32>
    %201 = tpu.matmul %198, %199, %cst_82 {dimension_numbers = #tpu.dot_dimension_numbers<[2], [2], [1], [1], [0, 0, 0, 1, 1, 1], [0], [0]>} : vector<1x8x8xbf16>, vector<1x8x8xbf16>, vector<1x8x8xf32> -> vector<1x8x8xf32>
    "tpu.trace_stop"() : () -> ()
    %cst_83 = arith.constant dense<0xFF800000> : vector<1x8xf32>
    %202 = vector.multi_reduction <maximumf>, %201, %cst_83 [2] : vector<1x8x8xf32> to vector<1x8xf32>
    %203 = vector.shape_cast %202 : vector<1x8xf32> to vector<1x8x1xf32>
    %204 = vector.broadcast %203 : vector<1x8x1xf32> to vector<1x8x8xf32>
    %205 = arith.subf %201, %204 : vector<1x8x8xf32>
    %206 = math.exp %205 : vector<1x8x8xf32>
    %cst_84 = arith.constant dense<0.000000e+00> : vector<1x8xf32>
    %207 = vector.multi_reduction <add>, %206, %cst_84 [2] : vector<1x8x8xf32> to vector<1x8xf32>
    %208 = vector.shape_cast %207 : vector<1x8xf32> to vector<1x8x1xf32>
    %209 = tpu.reciprocal %208 {approx = true} : vector<1x8x1xf32> -> vector<1x8x1xf32>
    %210 = vector.broadcast %209 : vector<1x8x1xf32> to vector<1x8x8xf32>
    %211 = arith.mulf %206, %210 : vector<1x8x8xf32>
    %212 = arith.truncf %211 : vector<1x8x8xf32> to vector<1x8x8xbf16>
    "tpu.trace_start"() <{level = 10 : i32, message = "bqk,bkd->bqd"}> : () -> ()
    %cst_85 = arith.constant dense<0.000000e+00> : vector<1x8x8xf32>
    %213 = tpu.matmul %212, %200, %cst_85 {dimension_numbers = #tpu.dot_dimension_numbers<[2], [1], [1], [2], [0, 0, 0, 1, 1, 2], [0], [0]>} : vector<1x8x8xbf16>, vector<1x8x8xbf16>, vector<1x8x8xf32> -> vector<1x8x8xf32>
    "tpu.trace_stop"() : () -> ()
    %214 = vector.extract_strided_slice %177 {offsets = [0, 0, 16], sizes = [1, 8, 8], strides = [1, 1, 1]} : vector<1x8x128xbf16> to vector<1x8x8xbf16>
    %215 = vector.extract_strided_slice %179 {offsets = [0, 0, 16], sizes = [1, 8, 8], strides = [1, 1, 1]} : vector<1x8x128xbf16> to vector<1x8x8xbf16>
    %216 = vector.extract_strided_slice %181 {offsets = [0, 0, 16], sizes = [1, 8, 8], strides = [1, 1, 1]} : vector<1x8x128xbf16> to vector<1x8x8xbf16>
    "tpu.trace_start"() <{level = 10 : i32, message = "bqd,bkd->bqk"}> : () -> ()
    %cst_86 = arith.constant dense<0.000000e+00> : vector<1x8x8xf32>
    %217 = tpu.matmul %214, %215, %cst_86 {dimension_numbers = #tpu.dot_dimension_numbers<[2], [2], [1], [1], [0, 0, 0, 1, 1, 1], [0], [0]>} : vector<1x8x8xbf16>, vector<1x8x8xbf16>, vector<1x8x8xf32> -> vector<1x8x8xf32>
    "tpu.trace_stop"() : () -> ()
    %cst_87 = arith.constant dense<0xFF800000> : vector<1x8xf32>
    %218 = vector.multi_reduction <maximumf>, %217, %cst_87 [2] : vector<1x8x8xf32> to vector<1x8xf32>
    %219 = vector.shape_cast %218 : vector<1x8xf32> to vector<1x8x1xf32>
    %220 = vector.broadcast %219 : vector<1x8x1xf32> to vector<1x8x8xf32>
    %221 = arith.subf %217, %220 : vector<1x8x8xf32>
    %222 = math.exp %221 : vector<1x8x8xf32>
    %cst_88 = arith.constant dense<0.000000e+00> : vector<1x8xf32>
    %223 = vector.multi_reduction <add>, %222, %cst_88 [2] : vector<1x8x8xf32> to vector<1x8xf32>
    %224 = vector.shape_cast %223 : vector<1x8xf32> to vector<1x8x1xf32>
    %225 = tpu.reciprocal %224 {approx = true} : vector<1x8x1xf32> -> vector<1x8x1xf32>
    %226 = vector.broadcast %225 : vector<1x8x1xf32> to vector<1x8x8xf32>
    %227 = arith.mulf %222, %226 : vector<1x8x8xf32>
    %228 = arith.truncf %227 : vector<1x8x8xf32> to vector<1x8x8xbf16>
    "tpu.trace_start"() <{level = 10 : i32, message = "bqk,bkd->bqd"}> : () -> ()
    %cst_89 = arith.constant dense<0.000000e+00> : vector<1x8x8xf32>
    %229 = tpu.matmul %228, %216, %cst_89 {dimension_numbers = #tpu.dot_dimension_numbers<[2], [1], [1], [2], [0, 0, 0, 1, 1, 2], [0], [0]>} : vector<1x8x8xbf16>, vector<1x8x8xbf16>, vector<1x8x8xf32> -> vector<1x8x8xf32>
    "tpu.trace_stop"() : () -> ()
    %230 = vector.extract_strided_slice %177 {offsets = [0, 0, 24], sizes = [1, 8, 8], strides = [1, 1, 1]} : vector<1x8x128xbf16> to vector<1x8x8xbf16>
    %231 = vector.extract_strided_slice %179 {offsets = [0, 0, 24], sizes = [1, 8, 8], strides = [1, 1, 1]} : vector<1x8x128xbf16> to vector<1x8x8xbf16>
    %232 = vector.extract_strided_slice %181 {offsets = [0, 0, 24], sizes = [1, 8, 8], strides = [1, 1, 1]} : vector<1x8x128xbf16> to vector<1x8x8xbf16>
    "tpu.trace_start"() <{level = 10 : i32, message = "bqd,bkd->bqk"}> : () -> ()
    %cst_90 = arith.constant dense<0.000000e+00> : vector<1x8x8xf32>
    %233 = tpu.matmul %230, %231, %cst_90 {dimension_numbers = #tpu.dot_dimension_numbers<[2], [2], [1], [1], [0, 0, 0, 1, 1, 1], [0], [0]>} : vector<1x8x8xbf16>, vector<1x8x8xbf16>, vector<1x8x8xf32> -> vector<1x8x8xf32>
    "tpu.trace_stop"() : () -> ()
    %cst_91 = arith.constant dense<0xFF800000> : vector<1x8xf32>
    %234 = vector.multi_reduction <maximumf>, %233, %cst_91 [2] : vector<1x8x8xf32> to vector<1x8xf32>
    %235 = vector.shape_cast %234 : vector<1x8xf32> to vector<1x8x1xf32>
    %236 = vector.broadcast %235 : vector<1x8x1xf32> to vector<1x8x8xf32>
    %237 = arith.subf %233, %236 : vector<1x8x8xf32>
    %238 = math.exp %237 : vector<1x8x8xf32>
    %cst_92 = arith.constant dense<0.000000e+00> : vector<1x8xf32>
    %239 = vector.multi_reduction <add>, %238, %cst_92 [2] : vector<1x8x8xf32> to vector<1x8xf32>
    %240 = vector.shape_cast %239 : vector<1x8xf32> to vector<1x8x1xf32>
    %241 = tpu.reciprocal %240 {approx = true} : vector<1x8x1xf32> -> vector<1x8x1xf32>
    %242 = vector.broadcast %241 : vector<1x8x1xf32> to vector<1x8x8xf32>
    %243 = arith.mulf %238, %242 : vector<1x8x8xf32>
    %244 = arith.truncf %243 : vector<1x8x8xf32> to vector<1x8x8xbf16>
    "tpu.trace_start"() <{level = 10 : i32, message = "bqk,bkd->bqd"}> : () -> ()
    %cst_93 = arith.constant dense<0.000000e+00> : vector<1x8x8xf32>
    %245 = tpu.matmul %244, %232, %cst_93 {dimension_numbers = #tpu.dot_dimension_numbers<[2], [1], [1], [2], [0, 0, 0, 1, 1, 2], [0], [0]>} : vector<1x8x8xbf16>, vector<1x8x8xbf16>, vector<1x8x8xf32> -> vector<1x8x8xf32>
    "tpu.trace_stop"() : () -> ()
    %246 = tpu.concatenate %197, %213, %229, %245 in 2 : vector<1x8x8xf32>, vector<1x8x8xf32>, vector<1x8x8xf32>, vector<1x8x8xf32> -> vector<1x8x32xf32>
    %247 = vector.shape_cast %246 : vector<1x8x32xf32> to vector<8x32xf32>
    %248 = arith.truncf %247 : vector<8x32xf32> to vector<8x32xbf16>
    %c1_94 = arith.constant 1 : index
    %c0_95 = arith.constant 0 : index
    %c0_96 = arith.constant 0 : index
    %249 = vector.load %arg5[%c1_94, %c0_95, %c0_96] : memref<2x32x128xbf16, #tpu.memory_space<vmem>>, vector<1x32x128xbf16>
    %250 = vector.shape_cast %249 : vector<1x32x128xbf16> to vector<32x128xbf16>
    %cst_97 = arith.constant dense<0.000000e+00> : vector<8x128xf32>
    %251 = tpu.matmul %248, %250, %cst_97 {dimension_numbers = #tpu.dot_dimension_numbers<[1], [0], [0], [1], [0, 0, 1, 1], [], []>} : vector<8x32xbf16>, vector<32x128xbf16>, vector<8x128xf32> -> vector<8x128xf32>
    %c1_98 = arith.constant 1 : index
    %c0_99 = arith.constant 0 : index
    %c0_100 = arith.constant 0 : index
    %252 = vector.load %arg6[%c1_98, %c0_99, %c0_100] : memref<2x1x128xf32, #tpu.memory_space<vmem>>, vector<1x1x128xf32>
    %253 = vector.shape_cast %252 : vector<1x1x128xf32> to vector<1x128xf32>
    %254 = vector.broadcast %253 : vector<1x128xf32> to vector<8x128xf32>
    %255 = arith.addf %251, %254 : vector<8x128xf32>
    %256 = arith.addf %166, %255 : vector<8x128xf32>
    %c1_101 = arith.constant 1 : index
    %c0_102 = arith.constant 0 : index
    %c0_103 = arith.constant 0 : index
    %257 = vector.load %arg11[%c1_101, %c0_102, %c0_103] : memref<2x1x128xf32, #tpu.memory_space<vmem>>, vector<1x1x128xf32>
    %258 = vector.shape_cast %257 : vector<1x1x128xf32> to vector<1x128xf32>
    %c1_104 = arith.constant 1 : index
    %c0_105 = arith.constant 0 : index
    %c0_106 = arith.constant 0 : index
    %259 = vector.load %arg12[%c1_104, %c0_105, %c0_106] : memref<2x1x128xf32, #tpu.memory_space<vmem>>, vector<1x1x128xf32>
    %260 = vector.shape_cast %259 : vector<1x1x128xf32> to vector<1x128xf32>
    %cst_107 = arith.constant dense<0.000000e+00> : vector<8xf32>
    %261 = vector.multi_reduction <add>, %256, %cst_107 [1] : vector<8x128xf32> to vector<8xf32>
    %262 = vector.shape_cast %261 : vector<8xf32> to vector<8x1xf32>
    %cst_108 = arith.constant 3.125000e-02 : f32
    %263 = vector.broadcast %cst_108 : f32 to vector<8x1xf32>
    %264 = arith.mulf %262, %263 : vector<8x1xf32>
    %265 = arith.mulf %256, %256 : vector<8x128xf32>
    %cst_109 = arith.constant dense<0.000000e+00> : vector<8xf32>
    %266 = vector.multi_reduction <add>, %265, %cst_109 [1] : vector<8x128xf32> to vector<8xf32>
    %267 = vector.shape_cast %266 : vector<8xf32> to vector<8x1xf32>
    %cst_110 = arith.constant 3.125000e-02 : f32
    %268 = vector.broadcast %cst_110 : f32 to vector<8x1xf32>
    %269 = arith.mulf %267, %268 : vector<8x1xf32>
    %270 = arith.mulf %264, %264 : vector<8x1xf32>
    %271 = arith.subf %269, %270 : vector<8x1xf32>
    %272 = vector.broadcast %264 : vector<8x1xf32> to vector<8x128xf32>
    %273 = arith.subf %256, %272 : vector<8x128xf32>
    %cst_111 = arith.constant 9.99999974E-6 : f32
    %274 = vector.broadcast %cst_111 : f32 to vector<8x1xf32>
    %275 = arith.addf %271, %274 : vector<8x1xf32>
    %276 = math.rsqrt %275 : vector<8x1xf32>
    %277 = vector.broadcast %276 : vector<8x1xf32> to vector<8x128xf32>
    %278 = arith.mulf %273, %277 : vector<8x128xf32>
    %279 = vector.broadcast %258 : vector<1x128xf32> to vector<8x128xf32>
    %280 = arith.mulf %278, %279 : vector<8x128xf32>
    %281 = vector.broadcast %260 : vector<1x128xf32> to vector<8x128xf32>
    %282 = arith.addf %280, %281 : vector<8x128xf32>
    %283 = arith.truncf %282 : vector<8x128xf32> to vector<8x128xbf16>
    %c1_112 = arith.constant 1 : index
    %c0_113 = arith.constant 0 : index
    %c0_114 = arith.constant 0 : index
    %284 = vector.load %arg7[%c1_112, %c0_113, %c0_114] : memref<2x128x128xbf16, #tpu.memory_space<vmem>>, vector<1x128x128xbf16>
    %285 = vector.shape_cast %284 : vector<1x128x128xbf16> to vector<128x128xbf16>
    %cst_115 = arith.constant dense<0.000000e+00> : vector<8x128xf32>
    %286 = tpu.matmul %283, %285, %cst_115 {dimension_numbers = #tpu.dot_dimension_numbers<[1], [0], [0], [1], [0, 0, 1, 1], [], []>} : vector<8x128xbf16>, vector<128x128xbf16>, vector<8x128xf32> -> vector<8x128xf32>
    %c1_116 = arith.constant 1 : index
    %c0_117 = arith.constant 0 : index
    %c0_118 = arith.constant 0 : index
    %287 = vector.load %arg8[%c1_116, %c0_117, %c0_118] : memref<2x1x128xf32, #tpu.memory_space<vmem>>, vector<1x1x128xf32>
    %288 = vector.shape_cast %287 : vector<1x1x128xf32> to vector<1x128xf32>
    %289 = vector.broadcast %288 : vector<1x128xf32> to vector<8x128xf32>
    %290 = arith.addf %286, %289 : vector<8x128xf32>
    %cst_119 = arith.constant 0.000000e+00 : f32
    %291 = vector.broadcast %cst_119 : f32 to vector<8x128xf32>
    %292 = arith.maximumf %290, %291 : vector<8x128xf32>
    %293 = arith.truncf %292 : vector<8x128xf32> to vector<8x128xbf16>
    %c1_120 = arith.constant 1 : index
    %c0_121 = arith.constant 0 : index
    %c0_122 = arith.constant 0 : index
    %294 = vector.load %arg9[%c1_120, %c0_121, %c0_122] : memref<2x128x128xbf16, #tpu.memory_space<vmem>>, vector<1x128x128xbf16>
    %295 = vector.shape_cast %294 : vector<1x128x128xbf16> to vector<128x128xbf16>
    %cst_123 = arith.constant dense<0.000000e+00> : vector<8x128xf32>
    %296 = tpu.matmul %293, %295, %cst_123 {dimension_numbers = #tpu.dot_dimension_numbers<[1], [0], [0], [1], [0, 0, 1, 1], [], []>} : vector<8x128xbf16>, vector<128x128xbf16>, vector<8x128xf32> -> vector<8x128xf32>
    %c1_124 = arith.constant 1 : index
    %c0_125 = arith.constant 0 : index
    %c0_126 = arith.constant 0 : index
    %297 = vector.load %arg10[%c1_124, %c0_125, %c0_126] : memref<2x1x128xf32, #tpu.memory_space<vmem>>, vector<1x1x128xf32>
    %298 = vector.shape_cast %297 : vector<1x1x128xf32> to vector<1x128xf32>
    %299 = vector.broadcast %298 : vector<1x128xf32> to vector<8x128xf32>
    %300 = arith.addf %296, %299 : vector<8x128xf32>
    %301 = arith.addf %282, %300 : vector<8x128xf32>
    %c1_127 = arith.constant 1 : index
    %c0_128 = arith.constant 0 : index
    %c0_129 = arith.constant 0 : index
    %302 = vector.load %arg13[%c1_127, %c0_128, %c0_129] : memref<2x1x128xf32, #tpu.memory_space<vmem>>, vector<1x1x128xf32>
    %303 = vector.shape_cast %302 : vector<1x1x128xf32> to vector<1x128xf32>
    %c1_130 = arith.constant 1 : index
    %c0_131 = arith.constant 0 : index
    %c0_132 = arith.constant 0 : index
    %304 = vector.load %arg14[%c1_130, %c0_131, %c0_132] : memref<2x1x128xf32, #tpu.memory_space<vmem>>, vector<1x1x128xf32>
    %305 = vector.shape_cast %304 : vector<1x1x128xf32> to vector<1x128xf32>
    %cst_133 = arith.constant dense<0.000000e+00> : vector<8xf32>
    %306 = vector.multi_reduction <add>, %301, %cst_133 [1] : vector<8x128xf32> to vector<8xf32>
    %307 = vector.shape_cast %306 : vector<8xf32> to vector<8x1xf32>
    %cst_134 = arith.constant 3.125000e-02 : f32
    %308 = vector.broadcast %cst_134 : f32 to vector<8x1xf32>
    %309 = arith.mulf %307, %308 : vector<8x1xf32>
    %310 = arith.mulf %301, %301 : vector<8x128xf32>
    %cst_135 = arith.constant dense<0.000000e+00> : vector<8xf32>
    %311 = vector.multi_reduction <add>, %310, %cst_135 [1] : vector<8x128xf32> to vector<8xf32>
    %312 = vector.shape_cast %311 : vector<8xf32> to vector<8x1xf32>
    %cst_136 = arith.constant 3.125000e-02 : f32
    %313 = vector.broadcast %cst_136 : f32 to vector<8x1xf32>
    %314 = arith.mulf %312, %313 : vector<8x1xf32>
    %315 = arith.mulf %309, %309 : vector<8x1xf32>
    %316 = arith.subf %314, %315 : vector<8x1xf32>
    %317 = vector.broadcast %309 : vector<8x1xf32> to vector<8x128xf32>
    %318 = arith.subf %301, %317 : vector<8x128xf32>
    %cst_137 = arith.constant 9.99999974E-6 : f32
    %319 = vector.broadcast %cst_137 : f32 to vector<8x1xf32>
    %320 = arith.addf %316, %319 : vector<8x1xf32>
    %321 = math.rsqrt %320 : vector<8x1xf32>
    %322 = vector.broadcast %321 : vector<8x1xf32> to vector<8x128xf32>
    %323 = arith.mulf %318, %322 : vector<8x128xf32>
    %324 = vector.broadcast %303 : vector<1x128xf32> to vector<8x128xf32>
    %325 = arith.mulf %323, %324 : vector<8x128xf32>
    %326 = vector.broadcast %305 : vector<1x128xf32> to vector<8x128xf32>
    %327 = arith.addf %325, %326 : vector<8x128xf32>
    %328 = vector.shape_cast %327 : vector<8x128xf32> to vector<1x8x128xf32>
    %329 = arith.truncf %328 : vector<1x8x128xf32> to vector<1x8x128xbf16>
    %c0_138 = arith.constant 0 : index
    %c0_139 = arith.constant 0 : index
    %c0_140 = arith.constant 0 : index
    %330 = vector.load %arg15[%c0_138, %c0_139, %c0_140] : memref<1x8x128xbf16, #tpu.memory_space<vmem>>, vector<1x8x128xbf16>
    tpu.vector_store %arg15[%c0_138, %c0_139, %c0_140], %329 {strides = array<i32>} : memref<1x8x128xbf16, #tpu.memory_space<vmem>>, vector<1x8x128xbf16>,
    return
  }
  func.func @transform_0(%arg0: i32) -> (i32, i32, i32) {
    %c0_i32 = arith.constant 0 : i32
    %c0_i32_0 = arith.constant 0 : i32
    %c0_i32_1 = arith.constant 0 : i32
    return %arg0, %c0_i32, %c0_i32_0 : i32, i32, i32
  }
  func.func @transform_1(%arg0: i32) -> (i32, i32, i32) {
    %c0_i32 = arith.constant 0 : i32
    %c0_i32_0 = arith.constant 0 : i32
    %c0_i32_1 = arith.constant 0 : i32
    %c0_i32_2 = arith.constant 0 : i32
    return %c0_i32, %c0_i32_0, %c0_i32_1 : i32, i32, i32
  }
  func.func @transform_2(%arg0: i32) -> (i32, i32, i32) {
    %c0_i32 = arith.constant 0 : i32
    %c0_i32_0 = arith.constant 0 : i32
    %c0_i32_1 = arith.constant 0 : i32
    %c0_i32_2 = arith.constant 0 : i32
    return %c0_i32, %c0_i32_0, %c0_i32_1 : i32, i32, i32
  }
  func.func @transform_3(%arg0: i32) -> (i32, i32, i32) {
    %c0_i32 = arith.constant 0 : i32
    %c0_i32_0 = arith.constant 0 : i32
    %c0_i32_1 = arith.constant 0 : i32
    %c0_i32_2 = arith.constant 0 : i32
    return %c0_i32, %c0_i32_0, %c0_i32_1 : i32, i32, i32
  }
  func.func @transform_4(%arg0: i32) -> (i32, i32, i32) {
    %c0_i32 = arith.constant 0 : i32
    %c0_i32_0 = arith.constant 0 : i32
    %c0_i32_1 = arith.constant 0 : i32
    %c0_i32_2 = arith.constant 0 : i32
    return %c0_i32, %c0_i32_0, %c0_i32_1 : i32, i32, i32
  }
  func.func @transform_5(%arg0: i32) -> (i32, i32, i32) {
    %c0_i32 = arith.constant 0 : i32
    %c0_i32_0 = arith.constant 0 : i32
    %c0_i32_1 = arith.constant 0 : i32
    %c0_i32_2 = arith.constant 0 : i32
    return %c0_i32, %c0_i32_0, %c0_i32_1 : i32, i32, i32
  }
  func.func @transform_6(%arg0: i32) -> (i32, i32, i32) {
    %c0_i32 = arith.constant 0 : i32
    %c0_i32_0 = arith.constant 0 : i32
    %c0_i32_1 = arith.constant 0 : i32
    %c0_i32_2 = arith.constant 0 : i32
    return %c0_i32, %c0_i32_0, %c0_i32_1 : i32, i32, i32
  }
  func.func @transform_7(%arg0: i32) -> (i32, i32, i32) {
    %c0_i32 = arith.constant 0 : i32
    %c0_i32_0 = arith.constant 0 : i32
    %c0_i32_1 = arith.constant 0 : i32
    %c0_i32_2 = arith.constant 0 : i32
    return %c0_i32, %c0_i32_0, %c0_i32_1 : i32, i32, i32
  }
  func.func @transform_8(%arg0: i32) -> (i32, i32, i32) {
    %c0_i32 = arith.constant 0 : i32
    %c0_i32_0 = arith.constant 0 : i32
    %c0_i32_1 = arith.constant 0 : i32
    %c0_i32_2 = arith.constant 0 : i32
    return %c0_i32, %c0_i32_0, %c0_i32_1 : i32, i32, i32
  }
  func.func @transform_9(%arg0: i32) -> (i32, i32, i32) {
    %c0_i32 = arith.constant 0 : i32
    %c0_i32_0 = arith.constant 0 : i32
    %c0_i32_1 = arith.constant 0 : i32
    %c0_i32_2 = arith.constant 0 : i32
    return %c0_i32, %c0_i32_0, %c0_i32_1 : i32, i32, i32
  }
  func.func @transform_10(%arg0: i32) -> (i32, i32, i32) {
    %c0_i32 = arith.constant 0 : i32
    %c0_i32_0 = arith.constant 0 : i32
    %c0_i32_1 = arith.constant 0 : i32
    %c0_i32_2 = arith.constant 0 : i32
    return %c0_i32, %c0_i32_0, %c0_i32_1 : i32, i32, i32
  }
  func.func @transform_11(%arg0: i32) -> (i32, i32, i32) {
    %c0_i32 = arith.constant 0 : i32
    %c0_i32_0 = arith.constant 0 : i32
    %c0_i32_1 = arith.constant 0 : i32
    %c0_i32_2 = arith.constant 0 : i32
    return %c0_i32, %c0_i32_0, %c0_i32_1 : i32, i32, i32
  }
  func.func @transform_12(%arg0: i32) -> (i32, i32, i32) {
    %c0_i32 = arith.constant 0 : i32
    %c0_i32_0 = arith.constant 0 : i32
    %c0_i32_1 = arith.constant 0 : i32
    %c0_i32_2 = arith.constant 0 : i32
    return %c0_i32, %c0_i32_0, %c0_i32_1 : i32, i32, i32
  }
  func.func @transform_13(%arg0: i32) -> (i32, i32, i32) {
    %c0_i32 = arith.constant 0 : i32
    %c0_i32_0 = arith.constant 0 : i32
    %c0_i32_1 = arith.constant 0 : i32
    %c0_i32_2 = arith.constant 0 : i32
    return %c0_i32, %c0_i32_0, %c0_i32_1 : i32, i32, i32
  }
  func.func @transform_14(%arg0: i32) -> (i32, i32, i32) {
    %c0_i32 = arith.constant 0 : i32
    %c0_i32_0 = arith.constant 0 : i32
    %c0_i32_1 = arith.constant 0 : i32
    return %arg0, %c0_i32, %c0_i32_0 : i32, i32, i32
  }
}

</mosaic_0001>

<llo_original>
// kernel: tpu_custom_call.1
$region0: #{tpu_custom_call.1}
  #allocation0 [shape = 'u32[]', space=smem, size = 0x4, offset = 0x4, fixed_abs, tag = 'smem constant byte address 0x4 - core index']
  #allocation1 [shape = 'u32[72,128]{1,0:T(1,128)}', space=vmem, size = 0x9000, scoped, tag = 'internal scratch']
  %s0 = inlined_call_operand.hbm [shape: f32[2,8,32], index: 0, kind: input, shape index: {}]
  %s1 = inlined_call_operand.hbm [shape: f32[1,8,32], index: 1, kind: input, shape index: {}]
  %s2 = inlined_call_operand.hbm [shape: bf16[2,128,384], index: 2, kind: input, shape index: {}]
  %s3 = inlined_call_operand.hbm [shape: f32[2,1,384], index: 3, kind: input, shape index: {}]
  %s4 = inlined_call_operand.hbm [shape: bf16[2,32,128], index: 4, kind: input, shape index: {}]
  %s5 = inlined_call_operand.vmem [shape: f32[2,1,128], index: 5, kind: input, shape index: {}]
  %s6 = inlined_call_operand.hbm [shape: bf16[2,128,128], index: 6, kind: input, shape index: {}]
  %s7 = inlined_call_operand.vmem [shape: f32[2,1,128], index: 7, kind: input, shape index: {}]
  %s8 = inlined_call_operand.hbm [shape: bf16[2,128,128], index: 8, kind: input, shape index: {}]
  %s9 = inlined_call_operand.vmem [shape: f32[2,1,128], index: 9, kind: input, shape index: {}]
  %s10 = inlined_call_operand.vmem [shape: f32[2,1,128], index: 10, kind: input, shape index: {}]
  %s11 = inlined_call_operand.vmem [shape: f32[2,1,128], index: 11, kind: input, shape index: {}]
  %s12 = inlined_call_operand.hbm [shape: f32[2,1,128], index: 12, kind: input, shape index: {}]
  %s13 = inlined_call_operand.vmem [shape: f32[2,1,128], index: 13, kind: input, shape index: {}]
  %s14 = inlined_call_operand.hbm [shape: bf16[2,8,128], index: 14, kind: output, shape index: {}]
  %s15 = sld [smem:[#allocation0]]
  $region121: #{tpu_custom_call.1} parent=0
    _
  %s17 = ssub.s32 1, %s15
  %s18 = scalar_select 0, %s17, %s15
  $region1: #{tpu_custom_call.1} parent=0
    #allocation2 [shape = 'u8[8192]{0}', space=vmem, size = 0x2000, scoped, tag = 'input window, operand 0']
    #allocation3 [shape = 's32[2]{0}', space=sflag, size = 0x8, scoped, tag = 'scoped memory for tpu_custom_call.1']
    #allocation4 [shape = 's32[2]{0}', space=sflag, size = 0x8, scoped, tag = 'scoped memory for tpu_custom_call.1']
    #allocation5 [shape = 'u8[4096]{0}', space=vmem, size = 0x1000, scoped, tag = 'input window, operand 1, single buffered']
    #allocation6 [shape = 's32[1]{0}', space=sflag, size = 0x4, scoped, tag = 'scoped memory for tpu_custom_call.1']
    #allocation7 [shape = 'u8[196608]{0}', space=vmem, size = 0x30000, scoped, tag = 'input window, operand 2, single buffered']
    #allocation8 [shape = 'u8[3072]{0}', space=vmem, size = 0xc00, scoped, tag = 'input window, operand 3, single buffered']
    #allocation9 [shape = 's32[1]{0}', space=sflag, size = 0x4, scoped, tag = 'scoped memory for tpu_custom_call.1']
    #allocation10 [shape = 'u8[16384]{0}', space=vmem, size = 0x4000, scoped, tag = 'input window, operand 4, single buffered']
    #allocation11 [shape = 'u8[65536]{0}', space=vmem, size = 0x10000, scoped, tag = 'input window, operand 6, single buffered']
    #allocation12 [shape = 's32[1]{0}', space=sflag, size = 0x4, scoped, tag = 'scoped memory for tpu_custom_call.1']
    #allocation13 [shape = 'u8[65536]{0}', space=vmem, size = 0x10000, scoped, tag = 'input window, operand 8, single buffered']
    #allocation14 [shape = 'u8[1024]{0}', space=vmem, size = 0x400, scoped, tag = 'input window, operand 12, single buffered']
    #allocation15 [shape = 's32[1]{0}', space=sflag, size = 0x4, scoped, tag = 'scoped memory for tpu_custom_call.1']
    #allocation16 [shape = 'u8[4096]{0}', space=vmem, size = 0x1000, scoped, tag = 'output window, operand 0']
    %19 = vsyncpa [#allocation3], 0
    %s20 = scalar_lea.sflag [#allocation3], 1
    %21 = vsyncpa %s20, 0
    %22 = vsyncpa [#allocation6], 0
    %23 = vsyncpa [#allocation9], 0
    %24 = vsyncpa [#allocation12], 0
    %25 = vsyncpa [#allocation15], 0
    %26 = vsyncpa [#allocation4], 0
    %s27 = scalar_lea.sflag [#allocation4], 1
    %28 = vsyncpa %s27, 0
    loop: start=0, step=1, limit=4
    $region2: #{tpu_custom_call.1} parent=1 // loop_pre_header
      _
    $region3: #{tpu_custom_call.1} parent=1 // loop_header
      %s30 = sphi 0, %s34
      %p31 = scmp.ge.s32.totalorder %s30, 4
      %s40 = sphi 0, %s42
      %s43 = sphi 0, %s40
      %s44 = sphi 0, %s43
      %s60 = sphi 0, %s44
      %s64 = sphi 0, %s64
      %s66 = sphi 0, %s64
      %s67 = sphi 0, %s66
      %s81 = sphi 0, %s67
      %s85 = sphi 0, %s85
      %s87 = sphi 0, %s85
      %s88 = sphi 0, %s87
      %s102 = sphi 0, %s88
      %s106 = sphi 0, %s106
      %s108 = sphi 0, %s106
      %s109 = sphi 0, %s108
      %s123 = sphi 0, %s109
      %s127 = sphi 0, %s127
      %s129 = sphi 0, %s127
      %s130 = sphi 0, %s129
      %s144 = sphi 0, %s130
      %s148 = sphi 0, %s148
      %s150 = sphi 0, %s148
      %s151 = sphi 0, %s150
      %s165 = sphi 0, %s151
      %s169 = sphi 0, %s169
      %s171 = sphi 0, %s169
      %s172 = sphi 0, %s171
      %s186 = sphi 0, %s172
      %s190 = sphi 0, %s190
      %s192 = sphi 0, %s190
      %s193 = sphi 0, %s192
      %s207 = sphi 0, %s193
      %s211 = sphi 0, %s211
      %s213 = sphi 0, %s211
      %s214 = sphi 0, %s213
      %s228 = sphi 0, %s214
      %s232 = sphi 0, %s232
      %s234 = sphi 0, %s232
      %s235 = sphi 0, %s234
      %s249 = sphi 0, %s235
      %s253 = sphi 0, %s253
      %s255 = sphi 0, %s253
      %s256 = sphi 0, %s255
      %s270 = sphi 0, %s256
      %s274 = sphi 0, %s274
      %s276 = sphi 0, %s274
      %s277 = sphi 0, %s276
      %s291 = sphi 0, %s277
      %s295 = sphi 0, %s295
      %s297 = sphi 0, %s295
      %s298 = sphi 0, %s297
      %s312 = sphi 0, %s298
      %s316 = sphi 0, %s316
      %s318 = sphi 0, %s316
      %s319 = sphi 0, %s318
      %s333 = sphi 0, %s319
      %s339 = sphi 0, %s341
      %s342 = sphi 0, %s339
      %s343 = sphi 0, %s342
      %s359 = sphi 0, %s343
    $region4: #{tpu_custom_call.1} parent=1 // loop_header_branch
      %33 = sbr.rel (%p31) target = $region8
    $region5: #{tpu_custom_call.1} parent=1 // loop_body
      %s35 = ssub.s32 %s30, 1
      %s36 = ssub.s32 %s30, 2
      %s37 = sadd.s32 %s30, 1
      %s38 = ssub.s32 %s30, %s37
      %p39 = scmp.eq.s32.totalorder %s38, 0
      %s41 = sadd.s32 %s40, 1
      %s42 = scalar_select %p39, %s40, %s41
      %p45 = pneg %p39
      %p46 = scmp.eq.s32.totalorder %s30, 1
      %p47 = por %p45, %p46
      %p48 = scmp.ne.s32.totalorder %s40, %s43
      %p49 = scmp.eq.s32.totalorder %s30, 0
      %p50 = por %p48, %p49
      %p51 = scmp.ne.s32.totalorder %s40, %s43
      %p52 = scmp.eq.s32.totalorder %s35, 1
      %p53 = por %p51, %p52
      %p54 = scmp.ne.s32.totalorder %s43, %s44
      %p55 = scmp.eq.s32.totalorder %s35, 0
      %p56 = por %p54, %p55
      %p57 = scmp.ne.s32.totalorder %s43, %s44
      %p58 = scmp.eq.s32.totalorder %s36, 1
      %p59 = por %p57, %p58
      %p61 = scmp.ne.s32.totalorder %s44, %s60
      %p62 = scmp.eq.s32.totalorder %s36, 0
      %p63 = por %p61, %p62
      %s65 = sadd.s32 %s64, 1
      %p68 = scmp.eq.s32.totalorder %s30, 1
      %p69 = scmp.ne.s32.totalorder %s64, %s66
      %p70 = scmp.eq.s32.totalorder %s30, 0
      %p71 = por %p69, %p70
      %p72 = scmp.ne.s32.totalorder %s64, %s66
      %p73 = scmp.eq.s32.totalorder %s35, 1
      %p74 = por %p72, %p73
      %p75 = scmp.ne.s32.totalorder %s66, %s67
      %p76 = scmp.eq.s32.totalorder %s35, 0
      %p77 = por %p75, %p76
      %p78 = scmp.ne.s32.totalorder %s66, %s67
      %p79 = scmp.eq.s32.totalorder %s36, 1
      %p80 = por %p78, %p79
      %p82 = scmp.ne.s32.totalorder %s67, %s81
      %p83 = scmp.eq.s32.totalorder %s36, 0
      %p84 = por %p82, %p83
      %s86 = sadd.s32 %s85, 1
      %p89 = scmp.eq.s32.totalorder %s30, 1
      %p90 = scmp.ne.s32.totalorder %s85, %s87
      %p91 = scmp.eq.s32.totalorder %s30, 0
      %p92 = por %p90, %p91
      %p93 = scmp.ne.s32.totalorder %s85, %s87
      %p94 = scmp.eq.s32.totalorder %s35, 1
      %p95 = por %p93, %p94
      %p96 = scmp.ne.s32.totalorder %s87, %s88
      %p97 = scmp.eq.s32.totalorder %s35, 0
      %p98 = por %p96, %p97
      %p99 = scmp.ne.s32.totalorder %s87, %s88
      %p100 = scmp.eq.s32.totalorder %s36, 1
      %p101 = por %p99, %p100
      %p103 = scmp.ne.s32.totalorder %s88, %s102
      %p104 = scmp.eq.s32.totalorder %s36, 0
      %p105 = por %p103, %p104
      %s107 = sadd.s32 %s106, 1
      %p110 = scmp.eq.s32.totalorder %s30, 1
      %p111 = scmp.ne.s32.totalorder %s106, %s108
      %p112 = scmp.eq.s32.totalorder %s30, 0
      %p113 = por %p111, %p112
      %p114 = scmp.ne.s32.totalorder %s106, %s108
      %p115 = scmp.eq.s32.totalorder %s35, 1
      %p116 = por %p114, %p115
      %p117 = scmp.ne.s32.totalorder %s108, %s109
      %p118 = scmp.eq.s32.totalorder %s35, 0
      %p119 = por %p117, %p118
      %p120 = scmp.ne.s32.totalorder %s108, %s109
      %p121 = scmp.eq.s32.totalorder %s36, 1
      %p122 = por %p120, %p121
      %p124 = scmp.ne.s32.totalorder %s109, %s123
      %p125 = scmp.eq.s32.totalorder %s36, 0
      %p126 = por %p124, %p125
      %s128 = sadd.s32 %s127, 1
      %p131 = scmp.eq.s32.totalorder %s30, 1
      %p132 = scmp.ne.s32.totalorder %s127, %s129
      %p133 = scmp.eq.s32.totalorder %s30, 0
      %p134 = por %p132, %p133
      %p135 = scmp.ne.s32.totalorder %s127, %s129
      %p136 = scmp.eq.s32.totalorder %s35, 1
      %p137 = por %p135, %p136
      %p138 = scmp.ne.s32.totalorder %s129, %s130
      %p139 = scmp.eq.s32.totalorder %s35, 0
      %p140 = por %p138, %p139
      %p141 = scmp.ne.s32.totalorder %s129, %s130
      %p142 = scmp.eq.s32.totalorder %s36, 1
      %p143 = por %p141, %p142
      %p145 = scmp.ne.s32.totalorder %s130, %s144
      %p146 = scmp.eq.s32.totalorder %s36, 0
      %p147 = por %p145, %p146
      %s149 = sadd.s32 %s148, 1
      %p152 = scmp.eq.s32.totalorder %s30, 1
      %p153 = scmp.ne.s32.totalorder %s148, %s150
      %p154 = scmp.eq.s32.totalorder %s30, 0
      %p155 = por %p153, %p154
      %p156 = scmp.ne.s32.totalorder %s148, %s150
      %p157 = scmp.eq.s32.totalorder %s35, 1
      %p158 = por %p156, %p157
      %p159 = scmp.ne.s32.totalorder %s150, %s151
      %p160 = scmp.eq.s32.totalorder %s35, 0
      %p161 = por %p159, %p160
      %p162 = scmp.ne.s32.totalorder %s150, %s151
      %p163 = scmp.eq.s32.totalorder %s36, 1
      %p164 = por %p162, %p163
      %p166 = scmp.ne.s32.totalorder %s151, %s165
      %p167 = scmp.eq.s32.totalorder %s36, 0
      %p168 = por %p166, %p167
      %s170 = sadd.s32 %s169, 1
      %p173 = scmp.eq.s32.totalorder %s30, 1
      %p174 = scmp.ne.s32.totalorder %s169, %s171
      %p175 = scmp.eq.s32.totalorder %s30, 0
      %p176 = por %p174, %p175
      %p177 = scmp.ne.s32.totalorder %s169, %s171
      %p178 = scmp.eq.s32.totalorder %s35, 1
      %p179 = por %p177, %p178
      %p180 = scmp.ne.s32.totalorder %s171, %s172
      %p181 = scmp.eq.s32.totalorder %s35, 0
      %p182 = por %p180, %p181
      %p183 = scmp.ne.s32.totalorder %s171, %s172
      %p184 = scmp.eq.s32.totalorder %s36, 1
      %p185 = por %p183, %p184
      %p187 = scmp.ne.s32.totalorder %s172, %s186
      %p188 = scmp.eq.s32.totalorder %s36, 0
      %p189 = por %p187, %p188
      %s191 = sadd.s32 %s190, 1
      %p194 = scmp.eq.s32.totalorder %s30, 1
      %p195 = scmp.ne.s32.totalorder %s190, %s192
      %p196 = scmp.eq.s32.totalorder %s30, 0
      %p197 = por %p195, %p196
      %p198 = scmp.ne.s32.totalorder %s190, %s192
      %p199 = scmp.eq.s32.totalorder %s35, 1
      %p200 = por %p198, %p199
      %p201 = scmp.ne.s32.totalorder %s192, %s193
      %p202 = scmp.eq.s32.totalorder %s35, 0
      %p203 = por %p201, %p202
      %p204 = scmp.ne.s32.totalorder %s192, %s193
      %p205 = scmp.eq.s32.totalorder %s36, 1
      %p206 = por %p204, %p205
      %p208 = scmp.ne.s32.totalorder %s193, %s207
      %p209 = scmp.eq.s32.totalorder %s36, 0
      %p210 = por %p208, %p209
      %s212 = sadd.s32 %s211, 1
      %p215 = scmp.eq.s32.totalorder %s30, 1
      %p216 = scmp.ne.s32.totalorder %s211, %s213
      %p217 = scmp.eq.s32.totalorder %s30, 0
      %p218 = por %p216, %p217
      %p219 = scmp.ne.s32.totalorder %s211, %s213
      %p220 = scmp.eq.s32.totalorder %s35, 1
      %p221 = por %p219, %p220
      %p222 = scmp.ne.s32.totalorder %s213, %s214
      %p223 = scmp.eq.s32.totalorder %s35, 0
      %p224 = por %p222, %p223
      %p225 = scmp.ne.s32.totalorder %s213, %s214
      %p226 = scmp.eq.s32.totalorder %s36, 1
      %p227 = por %p225, %p226
      %p229 = scmp.ne.s32.totalorder %s214, %s228
      %p230 = scmp.eq.s32.totalorder %s36, 0
      %p231 = por %p229, %p230
      %s233 = sadd.s32 %s232, 1
      %p236 = scmp.eq.s32.totalorder %s30, 1
      %p237 = scmp.ne.s32.totalorder %s232, %s234
      %p238 = scmp.eq.s32.totalorder %s30, 0
      %p239 = por %p237, %p238
      %p240 = scmp.ne.s32.totalorder %s232, %s234
      %p241 = scmp.eq.s32.totalorder %s35, 1
      %p242 = por %p240, %p241
      %p243 = scmp.ne.s32.totalorder %s234, %s235
      %p244 = scmp.eq.s32.totalorder %s35, 0
      %p245 = por %p243, %p244
      %p246 = scmp.ne.s32.totalorder %s234, %s235
      %p247 = scmp.eq.s32.totalorder %s36, 1
      %p248 = por %p246, %p247
      %p250 = scmp.ne.s32.totalorder %s235, %s249
      %p251 = scmp.eq.s32.totalorder %s36, 0
      %p252 = por %p250, %p251
      %s254 = sadd.s32 %s253, 1
      %p257 = scmp.eq.s32.totalorder %s30, 1
      %p258 = scmp.ne.s32.totalorder %s253, %s255
      %p259 = scmp.eq.s32.totalorder %s30, 0
      %p260 = por %p258, %p259
      %p261 = scmp.ne.s32.totalorder %s253, %s255
      %p262 = scmp.eq.s32.totalorder %s35, 1
      %p263 = por %p261, %p262
      %p264 = scmp.ne.s32.totalorder %s255, %s256
      %p265 = scmp.eq.s32.totalorder %s35, 0
      %p266 = por %p264, %p265
      %p267 = scmp.ne.s32.totalorder %s255, %s256
      %p268 = scmp.eq.s32.totalorder %s36, 1
      %p269 = por %p267, %p268
      %p271 = scmp.ne.s32.totalorder %s256, %s270
      %p272 = scmp.eq.s32.totalorder %s36, 0
      %p273 = por %p271, %p272
      %s275 = sadd.s32 %s274, 1
      %p278 = scmp.eq.s32.totalorder %s30, 1
      %p279 = scmp.ne.s32.totalorder %s274, %s276
      %p280 = scmp.eq.s32.totalorder %s30, 0
      %p281 = por %p279, %p280
      %p282 = scmp.ne.s32.totalorder %s274, %s276
      %p283 = scmp.eq.s32.totalorder %s35, 1
      %p284 = por %p282, %p283
      %p285 = scmp.ne.s32.totalorder %s276, %s277
      %p286 = scmp.eq.s32.totalorder %s35, 0
      %p287 = por %p285, %p286
      %p288 = scmp.ne.s32.totalorder %s276, %s277
      %p289 = scmp.eq.s32.totalorder %s36, 1
      %p290 = por %p288, %p289
      %p292 = scmp.ne.s32.totalorder %s277, %s291
      %p293 = scmp.eq.s32.totalorder %s36, 0
      %p294 = por %p292, %p293
      %s296 = sadd.s32 %s295, 1
      %p299 = scmp.eq.s32.totalorder %s30, 1
      %p300 = scmp.ne.s32.totalorder %s295, %s297
      %p301 = scmp.eq.s32.totalorder %s30, 0
      %p302 = por %p300, %p301
      %p303 = scmp.ne.s32.totalorder %s295, %s297
      %p304 = scmp.eq.s32.totalorder %s35, 1
      %p305 = por %p303, %p304
      %p306 = scmp.ne.s32.totalorder %s297, %s298
      %p307 = scmp.eq.s32.totalorder %s35, 0
      %p308 = por %p306, %p307
      %p309 = scmp.ne.s32.totalorder %s297, %s298
      %p310 = scmp.eq.s32.totalorder %s36, 1
      %p311 = por %p309, %p310
      %p313 = scmp.ne.s32.totalorder %s298, %s312
      %p314 = scmp.eq.s32.totalorder %s36, 0
      %p315 = por %p313, %p314
      %s317 = sadd.s32 %s316, 1
      %p320 = scmp.eq.s32.totalorder %s30, 1
      %p321 = scmp.ne.s32.totalorder %s316, %s318
      %p322 = scmp.eq.s32.totalorder %s30, 0
      %p323 = por %p321, %p322
      %p324 = scmp.ne.s32.totalorder %s316, %s318
      %p325 = scmp.eq.s32.totalorder %s35, 1
      %p326 = por %p324, %p325
      %p327 = scmp.ne.s32.totalorder %s318, %s319
      %p328 = scmp.eq.s32.totalorder %s35, 0
      %p329 = por %p327, %p328
      %p330 = scmp.ne.s32.totalorder %s318, %s319
      %p331 = scmp.eq.s32.totalorder %s36, 1
      %p332 = por %p330, %p331
      %p334 = scmp.ne.s32.totalorder %s319, %s333
      %p335 = scmp.eq.s32.totalorder %s36, 0
      %p336 = por %p334, %p335
      %s337 = ssub.s32 %s30, %s37
      %p338 = scmp.eq.s32.totalorder %s337, 0
      %s340 = sadd.s32 %s339, 1
      %s341 = scalar_select %p338, %s339, %s340
      %p344 = pneg %p338
      %p345 = scmp.eq.s32.totalorder %s30, 1
      %p346 = por %p344, %p345
      %p347 = scmp.ne.s32.totalorder %s339, %s342
      %p348 = scmp.eq.s32.totalorder %s30, 0
      %p349 = por %p347, %p348
      %p350 = scmp.ne.s32.totalorder %s339, %s342
      %p351 = scmp.eq.s32.totalorder %s35, 1
      %p352 = por %p350, %p351
      %p353 = scmp.ne.s32.totalorder %s342, %s343
      %p354 = scmp.eq.s32.totalorder %s35, 0
      %p355 = por %p353, %p354
      %p356 = scmp.ne.s32.totalorder %s342, %s343
      %p357 = scmp.eq.s32.totalorder %s36, 1
      %p358 = por %p356, %p357
      %p360 = scmp.ne.s32.totalorder %s343, %s359
      %p361 = scmp.eq.s32.totalorder %s36, 0
      %p362 = por %p360, %p361
      %p363 = scmp.le.s32.totalorder 1, %s30
      %p364 = scmp.lt.s32.totalorder %s30, 3
      %p365 = pnand %p363, %p364
      %p366 = pneg %p365
      // Predicated region
      $region9: #{tpu_custom_call.1} parent=5 // pred_check
        _
      $region10: #{tpu_custom_call.1} parent=5 // pred_check_branch
        %368 = sbr.rel (%p365) target = $region12
      $region11: #{tpu_custom_call.1} parent=5 // pred_region
        %s369 = ssub.s32 %s30, 1
        // Predicated region
        $region13: #{tpu_custom_call.1} parent=11 // pred_check
          %p370 = pneg %p77
        $region14: #{tpu_custom_call.1} parent=11 // pred_check_branch
          %372 = sbr.rel (%p370) target = $region16
        $region15: #{tpu_custom_call.1} parent=11 // pred_region
          %374 = vsyncadd [#allocation6], 0
          %s376 = sshll.u32 %s1, 4
          %s377 = int_to_ptr.hbm [resolvable:$true] %s376
          %s378 = sshll.u32 [#allocation5], 4
          %s379 = int_to_ptr.vmem [resolvable:$true] %s378
          %381 = dma.hbm_to_vmem [thread:$0]  %s377, 128, %s379, [#allocation6]
        $region16: #{tpu_custom_call.1} parent=11 // pred_fallthru
          _
        // Predicated region
        $region17: #{tpu_custom_call.1} parent=11 // pred_check
          %p382 = pneg %p98
        $region18: #{tpu_custom_call.1} parent=11 // pred_check_branch
          %384 = sbr.rel (%p382) target = $region20
        $region19: #{tpu_custom_call.1} parent=11 // pred_region
          %386 = vsyncadd [#allocation6], 0
          %s387 = sshll.u32 %s2, 4
          %s388 = int_to_ptr.hbm [resolvable:$true] %s387
          %s389 = sshll.u32 [#allocation7], 4
          %s390 = int_to_ptr.vmem [resolvable:$true] %s389
          %395 = dma.hbm_to_vmem [thread:$0]  %s388, 6144, %s390, [#allocation6], 192, 192, 12
        $region20: #{tpu_custom_call.1} parent=11 // pred_fallthru
          _
        // Predicated region
        $region21: #{tpu_custom_call.1} parent=11 // pred_check
          %p396 = pneg %p119
        $region22: #{tpu_custom_call.1} parent=11 // pred_check_branch
          %398 = sbr.rel (%p396) target = $region24
        $region23: #{tpu_custom_call.1} parent=11 // pred_region
          %400 = vsyncadd [#allocation9], 0
          %s401 = sshll.u32 %s3, 4
          %s402 = int_to_ptr.hbm [resolvable:$true] %s401
          %s403 = sshll.u32 [#allocation8], 4
          %s404 = int_to_ptr.vmem [resolvable:$true] %s403
          %409 = dma.hbm_to_vmem [thread:$0]  %s402, 96, %s404, [#allocation9], 48, 48, 3
        $region24: #{tpu_custom_call.1} parent=11 // pred_fallthru
          _
        // Predicated region
        $region25: #{tpu_custom_call.1} parent=11 // pred_check
          %p410 = pneg %p140
        $region26: #{tpu_custom_call.1} parent=11 // pred_check_branch
          %412 = sbr.rel (%p410) target = $region28
        $region27: #{tpu_custom_call.1} parent=11 // pred_region
          %414 = vsyncadd [#allocation9], 0
          %s415 = sshll.u32 %s4, 4
          %s416 = int_to_ptr.hbm [resolvable:$true] %s415
          %s417 = sshll.u32 [#allocation10], 4
          %s418 = int_to_ptr.vmem [resolvable:$true] %s417
          %423 = dma.hbm_to_vmem [thread:$0]  %s416, 512, %s418, [#allocation9], 64, 64, 4
        $region28: #{tpu_custom_call.1} parent=11 // pred_fallthru
          _
        // Predicated region
        $region29: #{tpu_custom_call.1} parent=11 // pred_check
          %p424 = pneg %p161
        $region30: #{tpu_custom_call.1} parent=11 // pred_check_branch
          %426 = sbr.rel (%p424) target = $region32
        $region31: #{tpu_custom_call.1} parent=11 // pred_region
          _
        $region32: #{tpu_custom_call.1} parent=11 // pred_fallthru
          _
        // Predicated region
        $region33: #{tpu_custom_call.1} parent=11 // pred_check
          %p427 = pneg %p182
        $region34: #{tpu_custom_call.1} parent=11 // pred_check_branch
          %429 = sbr.rel (%p427) target = $region36
        $region35: #{tpu_custom_call.1} parent=11 // pred_region
          %431 = vsyncadd [#allocation12], 0
          %s432 = sshll.u32 %s6, 4
          %s433 = int_to_ptr.hbm [resolvable:$true] %s432
          %s434 = sshll.u32 [#allocation11], 4
          %s435 = int_to_ptr.vmem [resolvable:$true] %s434
          %440 = dma.hbm_to_vmem [thread:$0]  %s433, 2048, %s435, [#allocation12], 64, 64, 4
        $region36: #{tpu_custom_call.1} parent=11 // pred_fallthru
          _
        // Predicated region
        $region37: #{tpu_custom_call.1} parent=11 // pred_check
          %p441 = pneg %p203
        $region38: #{tpu_custom_call.1} parent=11 // pred_check_branch
          %443 = sbr.rel (%p441) target = $region40
        $region39: #{tpu_custom_call.1} parent=11 // pred_region
          _
        $region40: #{tpu_custom_call.1} parent=11 // pred_fallthru
          _
        // Predicated region
        $region41: #{tpu_custom_call.1} parent=11 // pred_check
          %p444 = pneg %p224
        $region42: #{tpu_custom_call.1} parent=11 // pred_check_branch
          %446 = sbr.rel (%p444) target = $region44
        $region43: #{tpu_custom_call.1} parent=11 // pred_region
          %448 = vsyncadd [#allocation12], 0
          %s449 = sshll.u32 %s8, 4
          %s450 = int_to_ptr.hbm [resolvable:$true] %s449
          %s451 = sshll.u32 [#allocation13], 4
          %s452 = int_to_ptr.vmem [resolvable:$true] %s451
          %457 = dma.hbm_to_vmem [thread:$0]  %s450, 2048, %s452, [#allocation12], 64, 64, 4
        $region44: #{tpu_custom_call.1} parent=11 // pred_fallthru
          _
        // Predicated region
        $region45: #{tpu_custom_call.1} parent=11 // pred_check
          %p458 = pneg %p245
        $region46: #{tpu_custom_call.1} parent=11 // pred_check_branch
          %460 = sbr.rel (%p458) target = $region48
        $region47: #{tpu_custom_call.1} parent=11 // pred_region
          _
        $region48: #{tpu_custom_call.1} parent=11 // pred_fallthru
          _
        // Predicated region
        $region49: #{tpu_custom_call.1} parent=11 // pred_check
          %p461 = pneg %p266
        $region50: #{tpu_custom_call.1} parent=11 // pred_check_branch
          %463 = sbr.rel (%p461) target = $region52
        $region51: #{tpu_custom_call.1} parent=11 // pred_region
          _
        $region52: #{tpu_custom_call.1} parent=11 // pred_fallthru
          _
        // Predicated region
        $region53: #{tpu_custom_call.1} parent=11 // pred_check
          %p464 = pneg %p287
        $region54: #{tpu_custom_call.1} parent=11 // pred_check_branch
          %466 = sbr.rel (%p464) target = $region56
        $region55: #{tpu_custom_call.1} parent=11 // pred_region
          _
        $region56: #{tpu_custom_call.1} parent=11 // pred_fallthru
          _
        // Predicated region
        $region57: #{tpu_custom_call.1} parent=11 // pred_check
          %p467 = pneg %p308
        $region58: #{tpu_custom_call.1} parent=11 // pred_check_branch
          %469 = sbr.rel (%p467) target = $region60
        $region59: #{tpu_custom_call.1} parent=11 // pred_region
          %471 = vsyncadd [#allocation15], 0
          %s472 = sshll.u32 %s12, 4
          %s473 = int_to_ptr.hbm [resolvable:$true] %s472
          %s474 = sshll.u32 [#allocation14], 4
          %s475 = int_to_ptr.vmem [resolvable:$true] %s474
          %480 = dma.hbm_to_vmem [thread:$0]  %s473, 32, %s475, [#allocation15], 16, 16, 1
        $region60: #{tpu_custom_call.1} parent=11 // pred_fallthru
          _
        // Predicated region
        $region61: #{tpu_custom_call.1} parent=11 // pred_check
          %p481 = pneg %p329
        $region62: #{tpu_custom_call.1} parent=11 // pred_check_branch
          %483 = sbr.rel (%p481) target = $region64
        $region63: #{tpu_custom_call.1} parent=11 // pred_region
          _
        $region64: #{tpu_custom_call.1} parent=11 // pred_fallthru
          _
      $region12: #{tpu_custom_call.1} parent=5 // pred_fallthru
        _
      %p484 = scmp.lt.s32.totalorder %s30, 2
      // Predicated region
      $region65: #{tpu_custom_call.1} parent=5 // pred_check
        %p485 = pneg %p484
      $region66: #{tpu_custom_call.1} parent=5 // pred_check_branch
        %487 = sbr.rel (%p485) target = $region68
      $region67: #{tpu_custom_call.1} parent=5 // pred_region
        // Predicated region
        $region69: #{tpu_custom_call.1} parent=67 // pred_check
          %p488 = pneg %p50
        $region70: #{tpu_custom_call.1} parent=67 // pred_check_branch
          %490 = sbr.rel (%p488) target = $region72
        $region71: #{tpu_custom_call.1} parent=67 // pred_region
          %s491 = sand.u32 %s40, 1
          %s492 = scalar_lea.sflag [#allocation3], %s491
          %s493 = sand.u32 %s40, 1
          %s494 = smul.addr %s493, 8
          %s495 = scalar_lea.vmem [#allocation2], %s494
          %497 = vsyncadd %s492, 0
          %s498 = smul.addr %s30, 8
          %s499 = scalar_lea.hbm %s0, %s498
          %s501 = sshll.u32 %s499, 4
          %s502 = int_to_ptr.hbm [resolvable:$true] %s501
          %s503 = sshll.u32 %s495, 4
          %s504 = int_to_ptr.vmem [resolvable:$true] %s503
          %506 = dma.hbm_to_vmem [thread:$0]  %s502, 128, %s504, %s492
        $region72: #{tpu_custom_call.1} parent=67 // pred_fallthru
          _
      $region68: #{tpu_custom_call.1} parent=5 // pred_fallthru
        _
      %p507 = scmp.le.s32.totalorder 1, %s30
      %p508 = scmp.lt.s32.totalorder %s30, 3
      %p509 = pnand %p507, %p508
      %p510 = pneg %p509
      // Predicated region
      $region73: #{tpu_custom_call.1} parent=5 // pred_check
        _
      $region74: #{tpu_custom_call.1} parent=5 // pred_check_branch
        %512 = sbr.rel (%p509) target = $region76
      $region75: #{tpu_custom_call.1} parent=5 // pred_region
        %s513 = ssub.s32 %s30, 1
        %s514 = sand.u32 %s43, 1
        %s515 = scalar_lea.sflag [#allocation3], %s514
        %s516 = sand.u32 %s43, 1
        %s517 = smul.addr %s516, 8
        %s518 = scalar_lea.vmem [#allocation2], %s517
        // Predicated region
        $region77: #{tpu_custom_call.1} parent=75 // pred_check
          %p519 = pneg %p56
        $region78: #{tpu_custom_call.1} parent=75 // pred_check_branch
          %521 = sbr.rel (%p519) target = $region80
        $region79: #{tpu_custom_call.1} parent=75 // pred_region
          %523 = dma.done %s515, 128
        $region80: #{tpu_custom_call.1} parent=75 // pred_fallthru
          _
        // Predicated region
        $region81: #{tpu_custom_call.1} parent=75 // pred_check
          %p524 = pneg %p77
        $region82: #{tpu_custom_call.1} parent=75 // pred_check_branch
          %526 = sbr.rel (%p524) target = $region84
        $region83: #{tpu_custom_call.1} parent=75 // pred_region
          %528 = dma.done [#allocation6], 128
        $region84: #{tpu_custom_call.1} parent=75 // pred_fallthru
          _
        // Predicated region
        $region85: #{tpu_custom_call.1} parent=75 // pred_check
          %p529 = pneg %p98
        $region86: #{tpu_custom_call.1} parent=75 // pred_check_branch
          %531 = sbr.rel (%p529) target = $region88
        $region87: #{tpu_custom_call.1} parent=75 // pred_region
          %533 = dma.done [#allocation6], 6144
        $region88: #{tpu_custom_call.1} parent=75 // pred_fallthru
          _
        // Predicated region
        $region89: #{tpu_custom_call.1} parent=75 // pred_check
          %p534 = pneg %p119
        $region90: #{tpu_custom_call.1} parent=75 // pred_check_branch
          %536 = sbr.rel (%p534) target = $region92
        $region91: #{tpu_custom_call.1} parent=75 // pred_region
          %538 = dma.done [#allocation9], 96
        $region92: #{tpu_custom_call.1} parent=75 // pred_fallthru
          _
        // Predicated region
        $region93: #{tpu_custom_call.1} parent=75 // pred_check
          %p539 = pneg %p140
        $region94: #{tpu_custom_call.1} parent=75 // pred_check_branch
          %541 = sbr.rel (%p539) target = $region96
        $region95: #{tpu_custom_call.1} parent=75 // pred_region
          %543 = dma.done [#allocation9], 512
        $region96: #{tpu_custom_call.1} parent=75 // pred_fallthru
          _
        // Predicated region
        $region97: #{tpu_custom_call.1} parent=75 // pred_check
          %p544 = pneg %p182
        $region98: #{tpu_custom_call.1} parent=75 // pred_check_branch
          %546 = sbr.rel (%p544) target = $region100
        $region99: #{tpu_custom_call.1} parent=75 // pred_region
          %548 = dma.done [#allocation12], 2048
        $region100: #{tpu_custom_call.1} parent=75 // pred_fallthru
          _
        // Predicated region
        $region101: #{tpu_custom_call.1} parent=75 // pred_check
          %p549 = pneg %p224
        $region102: #{tpu_custom_call.1} parent=75 // pred_check_branch
          %551 = sbr.rel (%p549) target = $region104
        $region103: #{tpu_custom_call.1} parent=75 // pred_region
          %553 = dma.done [#allocation12], 2048
        $region104: #{tpu_custom_call.1} parent=75 // pred_fallthru
          _
        // Predicated region
        $region105: #{tpu_custom_call.1} parent=75 // pred_check
          %p554 = pneg %p308
        $region106: #{tpu_custom_call.1} parent=75 // pred_check_branch
          %556 = sbr.rel (%p554) target = $region108
        $region107: #{tpu_custom_call.1} parent=75 // pred_region
          %558 = dma.done [#allocation15], 32
        $region108: #{tpu_custom_call.1} parent=75 // pred_fallthru
          _
        %s559 = sand.u32 %s43, 1
        %s560 = scalar_lea.sflag [#allocation3], %s559
        %s561 = sand.u32 %s43, 1
        %s562 = smul.addr %s561, 8
        %s563 = scalar_lea.vmem [#allocation2], %s562
        %p564 = pneg %p56
        %p565 = pneg %p53
        %p566 = pneg %p77
        %p567 = pneg %p74
        %p568 = pneg %p98
        %p569 = pneg %p95
        %p570 = pneg %p119
        %p571 = pneg %p116
        %p572 = pneg %p140
        %p573 = pneg %p137
        %p574 = pneg %p161
        %p575 = pneg %p158
        %p576 = pneg %p182
        %p577 = pneg %p179
        %p578 = pneg %p203
        %p579 = pneg %p200
        %p580 = pneg %p224
        %p581 = pneg %p221
        %p582 = pneg %p245
        %p583 = pneg %p242
        %p584 = pneg %p266
        %p585 = pneg %p263
        %p586 = pneg %p287
        %p587 = pneg %p284
        %p588 = pneg %p308
        %p589 = pneg %p305
        %p590 = pneg %p329
        %p591 = pneg %p326
        %p592 = pneg %p355
        %p593 = pneg %p352
        %s594 = sand.u32 %s342, 1
        %s595 = scalar_lea.sflag [#allocation4], %s594
        %s596 = sand.u32 %s342, 1
        %s597 = smul.addr %s596, 4
        %s598 = scalar_lea.vmem [#allocation16], %s597
        %v600 = vld [vmem:[%s518] sm:$0xff]
        %v601 = vld [vmem:[#allocation5] sm:$0xff]
        %v602 = vadd.f32 %v600, %v601
        %vm603 = vcmask 261120
        %v604 = vsel %vm603, %v602, 0.0
        %v605 = vpack.c.bf16 %v604, %v604
        %v606 = vld [vmem:[#allocation7] sm:$0xff]
        %v607 = vld [vmem:[#allocation7 + $0x8] sm:$0xf]
        %v608 = vld [vmem:[#allocation7 + $0xc] sm:$0xff]
        %v609 = vld [vmem:[#allocation7 + $0x14] sm:$0xf]
        %v610 = vld [vmem:[#allocation7 + $0x18] sm:$0xff]
        %v611 = vld [vmem:[#allocation7 + $0x20] sm:$0xf]
        %v612 = vld [vmem:[#allocation7 + $0x24] sm:$0xff]
        %v613 = vld [vmem:[#allocation7 + $0x2c] sm:$0xf]
        %v614 = vld [vmem:[#allocation7 + $0x30] sm:$0xff]
        %v615 = vld [vmem:[#allocation7 + $0x38] sm:$0xf]
        %v616 = vld [vmem:[#allocation7 + $0x3c] sm:$0xff]
        %v617 = vld [vmem:[#allocation7 + $0x44] sm:$0xf]
        %v618 = vld [vmem:[#allocation7 + $0x48] sm:$0xff]
        %v619 = vld [vmem:[#allocation7 + $0x50] sm:$0xf]
        %v620 = vld [vmem:[#allocation7 + $0x54] sm:$0xff]
        %v621 = vld [vmem:[#allocation7 + $0x5c] sm:$0xf]
        %v622 = vld [vmem:[#allocation7 + $0x60] sm:$0xff]
        %v623 = vld [vmem:[#allocation7 + $0x68] sm:$0xf]
        %v624 = vld [vmem:[#allocation7 + $0x6c] sm:$0xff]
        %v625 = vld [vmem:[#allocation7 + $0x74] sm:$0xf]
        %v626 = vld [vmem:[#allocation7 + $0x78] sm:$0xff]
        %v627 = vld [vmem:[#allocation7 + $0x80] sm:$0xf]
        %v628 = vld [vmem:[#allocation7 + $0x84] sm:$0xff]
        %v629 = vld [vmem:[#allocation7 + $0x8c] sm:$0xf]
        %v630 = vld [vmem:[#allocation7 + $0x90] sm:$0xff]
        %v631 = vld [vmem:[#allocation7 + $0x98] sm:$0xf]
        %v632 = vld [vmem:[#allocation7 + $0x9c] sm:$0xff]
        %v633 = vld [vmem:[#allocation7 + $0xa4] sm:$0xf]
        %v634 = vld [vmem:[#allocation7 + $0xa8] sm:$0xff]
        %v635 = vld [vmem:[#allocation7 + $0xb0] sm:$0xf]
        %v636 = vld [vmem:[#allocation7 + $0xb4] sm:$0xff]
        %v637 = vld [vmem:[#allocation7 + $0xbc] sm:$0xf]
        %v638 = vld [vmem:[#allocation8] sm:$0x7]
        %v640 = vperm.slane %v638, 0
        %v641 = vperm.slane %v638, 1
        %v642 = vperm.slane %v638, 2
        %v678 = vunpack.c.l.b16 %v606
        %v679 = vunpack.c.h.b16 %v606
        %v680 = vunpack.c.l.b16 %v607
        %v681 = vunpack.c.l.b16 %v608
        %v682 = vunpack.c.h.b16 %v608
        %v683 = vunpack.c.l.b16 %v609
        %v684 = vunpack.c.l.b16 %v610
        %v685 = vunpack.c.h.b16 %v610
        %v686 = vunpack.c.l.b16 %v611
        %v687 = vunpack.c.l.b16 %v612
        %v688 = vunpack.c.h.b16 %v612
        %v689 = vunpack.c.l.b16 %v613
        %v690 = vunpack.c.l.b16 %v614
        %v691 = vunpack.c.h.b16 %v614
        %v692 = vunpack.c.l.b16 %v615
        %v693 = vunpack.c.l.b16 %v616
        %v694 = vunpack.c.h.b16 %v616
        %v695 = vunpack.c.l.b16 %v617
        %v696 = vunpack.c.l.b16 %v618
        %v697 = vunpack.c.h.b16 %v618
        %v698 = vunpack.c.l.b16 %v619
        %v699 = vunpack.c.l.b16 %v620
        %v700 = vunpack.c.h.b16 %v620
        %v701 = vunpack.c.l.b16 %v621
        %v702 = vunpack.c.l.b16 %v622
        %v703 = vunpack.c.h.b16 %v622
        %v704 = vunpack.c.l.b16 %v623
        %v705 = vunpack.c.l.b16 %v624
        %v706 = vunpack.c.h.b16 %v624
        %v707 = vunpack.c.l.b16 %v625
        %v708 = vunpack.c.l.b16 %v626
        %v709 = vunpack.c.h.b16 %v626
        %v710 = vunpack.c.l.b16 %v627
        %v711 = vunpack.c.l.b16 %v628
        %v712 = vunpack.c.h.b16 %v628
        %v713 = vunpack.c.l.b16 %v629
        %v714 = vunpack.c.l.b16 %v630
        %v715 = vunpack.c.h.b16 %v630
        %v716 = vunpack.c.l.b16 %v631
        %v717 = vunpack.c.l.b16 %v632
        %v718 = vunpack.c.h.b16 %v632
        %v719 = vunpack.c.l.b16 %v633
        %v720 = vunpack.c.l.b16 %v634
        %v721 = vunpack.c.h.b16 %v634
        %v722 = vunpack.c.l.b16 %v635
        %v723 = vunpack.c.l.b16 %v636
        %v724 = vunpack.c.h.b16 %v636
        %v725 = vunpack.c.l.b16 %v637
        %v726 = vpack.c.b16 %v681, %v678
        %v727 = vpack.c.b16 %v682, %v679
        %v728 = vpack.c.b16 %v683, %v680
        %v729 = vpack.c.b16 %v687, %v684
        %v730 = vpack.c.b16 %v688, %v685
        %v731 = vpack.c.b16 %v689, %v686
        %v732 = vpack.c.b16 %v693, %v690
        %v733 = vpack.c.b16 %v694, %v691
        %v734 = vpack.c.b16 %v695, %v692
        %v735 = vpack.c.b16 %v699, %v696
        %v736 = vpack.c.b16 %v700, %v697
        %v737 = vpack.c.b16 %v701, %v698
        %v738 = vpack.c.b16 %v705, %v702
        %v739 = vpack.c.b16 %v706, %v703
        %v740 = vpack.c.b16 %v707, %v704
        %v741 = vpack.c.b16 %v711, %v708
        %v742 = vpack.c.b16 %v712, %v709
        %v743 = vpack.c.b16 %v713, %v710
        %v744 = vpack.c.b16 %v717, %v714
        %v745 = vpack.c.b16 %v718, %v715
        %v746 = vpack.c.b16 %v719, %v716
        %v747 = vpack.c.b16 %v723, %v720
        %v748 = vpack.c.b16 %v724, %v721
        %v749 = vpack.c.b16 %v725, %v722
        %774 = vmatpush.bf16.msra.mxu0 %v747
        %775 = vmatpush.bf16.msra.mxu0 %v744
        %776 = vmatpush.bf16.msra.mxu0 %v741
        %777 = vmatpush.bf16.msra.mxu0 %v738
        %778 = vmatpush.bf16.msra.mxu0 %v735
        %779 = vmatpush.bf16.msra.mxu0 %v732
        %780 = vmatpush.bf16.msra.mxu0 %v729
        %781 = vmatpush.bf16.msra.mxu0 %v726
        %782 = vmatmul.bf16.gmra.mxu0 %v605
        %v783 = vpop.f32.mrf.mxu0
        %v784 = vadd.f32 %v640, %v783
        %v785 = vpop.f32.mrf.mxu0
        %786 = vdwg.mxu0
        %787 = vmatpush.bf16.msra.mxu0 %v748
        %788 = vmatpush.bf16.msra.mxu0 %v745
        %789 = vmatpush.bf16.msra.mxu0 %v742
        %790 = vmatpush.bf16.msra.mxu0 %v739
        %791 = vmatpush.bf16.msra.mxu0 %v736
        %792 = vmatpush.bf16.msra.mxu0 %v733
        %793 = vmatpush.bf16.msra.mxu0 %v730
        %794 = vmatpush.bf16.msra.mxu0 %v727
        %795 = vmatmul.bf16.gmra.mxu0 %v605
        %v796 = vpop.f32.mrf.mxu0
        %v797 = vadd.f32 %v641, %v796
        %v798 = vpop.f32.mrf.mxu0
        %799 = vdwg.mxu0
        %800 = vmatpush.bf16.msra.mxu0 %v749
        %801 = vmatpush.bf16.msra.mxu0 %v746
        %802 = vmatpush.bf16.msra.mxu0 %v743
        %803 = vmatpush.bf16.msra.mxu0 %v740
        %804 = vmatpush.bf16.msra.mxu0 %v737
        %805 = vmatpush.bf16.msra.mxu0 %v734
        %806 = vmatpush.bf16.msra.mxu0 %v731
        %807 = vmatpush.bf16.msra.mxu0 %v728
        %808 = vmatmul.bf16.gmra.mxu0 %v605
        %v809 = vpop.f32.mrf.mxu0
        %v810 = vadd.f32 %v642, %v809
        %v811 = vpop.f32.mrf.mxu0
        %812 = vdwg.mxu0
        %v813 = vpack.c.bf16 %v797, %v784
        %v814 = vpack.c.bf16 %v810, %v810
        %v816 = vrot.slane %v813, 4
        %vm817 = vcmask 64512
        %v819 = vsel %vm817, %v813, 0
        %v822 = vsel %vm817, %v816, 0
        %824 = vmatpush.bf16.xpose.msra.mxu0 0
        %825 = vmatpush.bf16.xpose.msra.mxu0 0
        %826 = vmatpush.bf16.xpose.msra.mxu0 0
        %827 = vmatpush.bf16.xpose.msra.mxu0 0
        %828 = vmatpush.bf16.xpose.msra.mxu0 0
        %829 = vmatpush.bf16.xpose.msra.mxu0 0
        %830 = vmatpush.bf16.xpose.msra.mxu0 0
        %831 = vmatpush.bf16.xpose.msra.mxu0 %v822
        %832 = vmatmul.bf16.gmra.mxu0 %v819
        %v833 = vpop.f32.mrf.mxu0
        %v834 = vadd.f32 0.0, %v833
        %v835 = vpop.f32.mrf.mxu0
        %836 = vdwg.mxu0
        %v837 = vsel %vm817, %v834, -inf
        %838 = vmax.xlane.f32.xlu0 %v837
        %v839 = vpop.xlane.xlu0 %838
        %v840 = vsub.f32 %v834, %v839
        %v841 = vmul.f32 %v840, 1.442695
        %v842 = vpow.pop %v841
        %v843 = vsel %vm817, %v842, 0.0
        %844 = vadd.xlane.f32.xlu0 %v843
        %v845 = vpop.xlane.xlu0 %844
        %v846 = vrcp.pop %v845
        %v847 = vmul.f32 %v842, %v846
        %v848 = vpack.c.bf16 %v847, %v847
        %v850 = vsel %vm817, %v848, 0
        %vm852 = vcmask 1043456
        %v854 = vsel %vm852, %v814, 0
        %856 = vmatpush.bf16.msra.mxu0 0
        %857 = vmatpush.bf16.msra.mxu0 0
        %858 = vmatpush.bf16.msra.mxu0 0
        %859 = vmatpush.bf16.msra.mxu0 0
        %860 = vmatpush.bf16.msra.mxu0 0
        %861 = vmatpush.bf16.msra.mxu0 0
        %862 = vmatpush.bf16.msra.mxu0 0
        %863 = vmatpush.bf16.msra.mxu0 %v854
        %864 = vmatmul.bf16.gmra.mxu0 %v850
        %v865 = vpop.f32.mrf.mxu0
        %v866 = vadd.f32 0.0, %v865
        %v867 = vpop.f32.mrf.mxu0
        %868 = vdwg.mxu0
        %v869 = vunpack.c.l.b16 %v813
        %v870 = vpack.c.b16 %v869, %v869
        %871 = vrot.lane.b32.xlu0 %v870, 120
        %v872 = vpop.permute.xlu0 %871
        %v873 = vunpack.c.l.b16 %v816
        %v874 = vpack.c.b16 %v873, %v873
        %875 = vrot.lane.b32.xlu0 %v874, 120
        %v876 = vpop.permute.xlu0 %875
        %v878 = vsel %vm817, %v872, 0
        %v881 = vsel %vm817, %v876, 0
        %883 = vmatpush.bf16.xpose.msra.mxu0 0
        %884 = vmatpush.bf16.xpose.msra.mxu0 0
        %885 = vmatpush.bf16.xpose.msra.mxu0 0
        %886 = vmatpush.bf16.xpose.msra.mxu0 0
        %887 = vmatpush.bf16.xpose.msra.mxu0 0
        %888 = vmatpush.bf16.xpose.msra.mxu0 0
        %889 = vmatpush.bf16.xpose.msra.mxu0 0
        %890 = vmatpush.bf16.xpose.msra.mxu0 %v881
        %891 = vmatmul.bf16.gmra.mxu0 %v878
        %v892 = vpop.f32.mrf.mxu0
        %v893 = vadd.f32 0.0, %v892
        %v894 = vpop.f32.mrf.mxu0
        %895 = vdwg.mxu0
        %v896 = vsel %vm817, %v893, -inf
        %897 = vmax.xlane.f32.xlu0 %v896
        %v898 = vpop.xlane.xlu0 %897
        %v899 = vsub.f32 %v893, %v898
        %v900 = vmul.f32 %v899, 1.442695
        %v901 = vpow.pop %v900
        %v902 = vsel %vm817, %v901, 0.0
        %903 = vadd.xlane.f32.xlu0 %v902
        %v904 = vpop.xlane.xlu0 %903
        %v905 = vrcp.pop %v904
        %v906 = vmul.f32 %v901, %v905
        %v907 = vpack.c.bf16 %v906, %v906
        %v909 = vunpack.c.l.b16 %v814
        %v910 = vpack.c.b16 %v909, %v909
        %911 = vrot.lane.b32.xlu0 %v910, 120
        %v912 = vpop.permute.xlu0 %911
        %v914 = vsel %vm817, %v907, 0
        %v917 = vsel %vm852, %v912, 0
        %919 = vmatpush.bf16.msra.mxu0 0
        %920 = vmatpush.bf16.msra.mxu0 0
        %921 = vmatpush.bf16.msra.mxu0 0
        %922 = vmatpush.bf16.msra.mxu0 0
        %923 = vmatpush.bf16.msra.mxu0 0
        %924 = vmatpush.bf16.msra.mxu0 0
        %925 = vmatpush.bf16.msra.mxu0 0
        %926 = vmatpush.bf16.msra.mxu0 %v917
        %927 = vmatmul.bf16.gmra.mxu0 %v914
        %v928 = vpop.f32.mrf.mxu0
        %v929 = vadd.f32 0.0, %v928
        %v930 = vpop.f32.mrf.mxu0
        %931 = vdwg.mxu0
        %932 = vrot.lane.b32.xlu0 %v870, 112
        %v933 = vpop.permute.xlu0 %932
        %934 = vrot.lane.b32.xlu0 %v874, 112
        %v935 = vpop.permute.xlu0 %934
        %v937 = vsel %vm817, %v933, 0
        %v940 = vsel %vm817, %v935, 0
        %942 = vmatpush.bf16.xpose.msra.mxu0 0
        %943 = vmatpush.bf16.xpose.msra.mxu0 0
        %944 = vmatpush.bf16.xpose.msra.mxu0 0
        %945 = vmatpush.bf16.xpose.msra.mxu0 0
        %946 = vmatpush.bf16.xpose.msra.mxu0 0
        %947 = vmatpush.bf16.xpose.msra.mxu0 0
        %948 = vmatpush.bf16.xpose.msra.mxu0 0
        %949 = vmatpush.bf16.xpose.msra.mxu0 %v940
        %950 = vmatmul.bf16.gmra.mxu0 %v937
        %v951 = vpop.f32.mrf.mxu0
        %v952 = vadd.f32 0.0, %v951
        %v953 = vpop.f32.mrf.mxu0
        %954 = vdwg.mxu0
        %v955 = vsel %vm817, %v952, -inf
        %956 = vmax.xlane.f32.xlu0 %v955
        %v957 = vpop.xlane.xlu0 %956
        %v958 = vsub.f32 %v952, %v957
        %v959 = vmul.f32 %v958, 1.442695
        %v960 = vpow.pop %v959
        %v961 = vsel %vm817, %v960, 0.0
        %962 = vadd.xlane.f32.xlu0 %v961
        %v963 = vpop.xlane.xlu0 %962
        %v964 = vrcp.pop %v963
        %v965 = vmul.f32 %v960, %v964
        %v966 = vpack.c.bf16 %v965, %v965
        %967 = vrot.lane.b32.xlu0 %v910, 112
        %v968 = vpop.permute.xlu0 %967
        %v970 = vsel %vm817, %v966, 0
        %v973 = vsel %vm852, %v968, 0
        %975 = vmatpush.bf16.msra.mxu0 0
        %976 = vmatpush.bf16.msra.mxu0 0
        %977 = vmatpush.bf16.msra.mxu0 0
        %978 = vmatpush.bf16.msra.mxu0 0
        %979 = vmatpush.bf16.msra.mxu0 0
        %980 = vmatpush.bf16.msra.mxu0 0
        %981 = vmatpush.bf16.msra.mxu0 0
        %982 = vmatpush.bf16.msra.mxu0 %v973
        %983 = vmatmul.bf16.gmra.mxu0 %v970
        %v984 = vpop.f32.mrf.mxu0
        %v985 = vadd.f32 0.0, %v984
        %v986 = vpop.f32.mrf.mxu0
        %987 = vdwg.mxu0
        %988 = vrot.lane.b32.xlu0 %v870, 104
        %v989 = vpop.permute.xlu0 %988
        %990 = vrot.lane.b32.xlu0 %v874, 104
        %v991 = vpop.permute.xlu0 %990
        %v993 = vsel %vm817, %v989, 0
        %v996 = vsel %vm817, %v991, 0
        %998 = vmatpush.bf16.xpose.msra.mxu0 0
        %999 = vmatpush.bf16.xpose.msra.mxu0 0
        %1000 = vmatpush.bf16.xpose.msra.mxu0 0
        %1001 = vmatpush.bf16.xpose.msra.mxu0 0
        %1002 = vmatpush.bf16.xpose.msra.mxu0 0
        %1003 = vmatpush.bf16.xpose.msra.mxu0 0
        %1004 = vmatpush.bf16.xpose.msra.mxu0 0
        %1005 = vmatpush.bf16.xpose.msra.mxu0 %v996
        %1006 = vmatmul.bf16.gmra.mxu0 %v993
        %v1007 = vpop.f32.mrf.mxu0
        %v1008 = vadd.f32 0.0, %v1007
        %v1009 = vpop.f32.mrf.mxu0
        %1010 = vdwg.mxu0
        %v1011 = vsel %vm817, %v1008, -inf
        %1012 = vmax.xlane.f32.xlu0 %v1011
        %v1013 = vpop.xlane.xlu0 %1012
        %v1014 = vsub.f32 %v1008, %v1013
        %v1015 = vmul.f32 %v1014, 1.442695
        %v1016 = vpow.pop %v1015
        %v1017 = vsel %vm817, %v1016, 0.0
        %1018 = vadd.xlane.f32.xlu0 %v1017
        %v1019 = vpop.xlane.xlu0 %1018
        %v1020 = vrcp.pop %v1019
        %v1021 = vmul.f32 %v1016, %v1020
        %v1022 = vpack.c.bf16 %v1021, %v1021
        %1023 = vrot.lane.b32.xlu0 %v910, 104
        %v1024 = vpop.permute.xlu0 %1023
        %v1026 = vsel %vm817, %v1022, 0
        %v1029 = vsel %vm852, %v1024, 0
        %1031 = vmatpush.bf16.msra.mxu0 0
        %1032 = vmatpush.bf16.msra.mxu0 0
        %1033 = vmatpush.bf16.msra.mxu0 0
        %1034 = vmatpush.bf16.msra.mxu0 0
        %1035 = vmatpush.bf16.msra.mxu0 0
        %1036 = vmatpush.bf16.msra.mxu0 0
        %1037 = vmatpush.bf16.msra.mxu0 0
        %1038 = vmatpush.bf16.msra.mxu0 %v1029
        %1039 = vmatmul.bf16.gmra.mxu0 %v1026
        %v1040 = vpop.f32.mrf.mxu0
        %v1041 = vadd.f32 0.0, %v1040
        %v1042 = vpop.f32.mrf.mxu0
        %1043 = vdwg.mxu0
        %1045 = vrot.lane.b32.xlu0 %v929, 8
        %v1046 = vpop.permute.xlu0 %1045
        %1049 = vrot.lane.b32.xlu0 %v985, 16
        %v1050 = vpop.permute.xlu0 %1049
        %1053 = vrot.lane.b32.xlu0 %v1041, 24
        %v1054 = vpop.permute.xlu0 %1053
        %v1056 = vsel %vm817, %v866, %v1046
        %vm1057 = vcmask 130048
        %v1058 = vsel %vm1057, %v1056, %v1050
        %vm1059 = vcmask 195584
        %v1060 = vsel %vm1059, %v1058, %v1054
        %v1061 = vpack.c.bf16 %v1060, %v1060
        %v1062 = vld [vmem:[#allocation10] sm:$0xf]
        %v1063 = vld [vmem:[#allocation10 + $0x4] sm:$0xf]
        %v1064 = vld [vmem:[#allocation10 + $0x8] sm:$0xf]
        %v1065 = vld [vmem:[#allocation10 + $0xc] sm:$0xf]
        %v1066 = vld [vmem:[%s5] sm:$0x1]
        %v1068 = vperm.slane %v1066, 0
        %v1074 = vunpack.c.l.b16 %v1062
        %v1075 = vunpack.c.l.b16 %v1063
        %v1076 = vunpack.c.l.b16 %v1064
        %v1077 = vunpack.c.l.b16 %v1065
        %v1078 = vpack.c.b16 %v1075, %v1074
        %v1079 = vpack.c.b16 %v1077, %v1076
        %v1083 = vsel %vm603, %v1061, 0
        %1085 = vmatpush.bf16.msra.mxu0 0
        %1086 = vmatpush.bf16.msra.mxu0 0
        %1087 = vmatpush.bf16.msra.mxu0 0
        %1088 = vmatpush.bf16.msra.mxu0 0
        %1089 = vmatpush.bf16.msra.mxu0 0
        %1090 = vmatpush.bf16.msra.mxu0 0
        %1091 = vmatpush.bf16.msra.mxu0 %v1079
        %1092 = vmatpush.bf16.msra.mxu0 %v1078
        %1093 = vmatmul.bf16.gmra.mxu0 %v1083
        %v1094 = vpop.f32.mrf.mxu0
        %v1095 = vadd.f32 %v1068, %v1094
        %v1096 = vpop.f32.mrf.mxu0
        %1097 = vdwg.mxu0
        %v1098 = vadd.f32 %v604, %v1095
        %v1099 = vld [vmem:[%s10] sm:$0x1]
        %v1100 = vld [vmem:[%s11] sm:$0x1]
        %1101 = vadd.xlane.f32.xlu0 %v1098
        %v1102 = vpop.xlane.xlu0 %1101
        %v1103 = vmul.f32 %v1102, 0.03125
        %v1104 = vmul.f32 %v1098, %v1098
        %1105 = vadd.xlane.f32.xlu0 %v1104
        %v1106 = vpop.xlane.xlu0 %1105
        %v1107 = vmul.f32 %v1106, 0.03125
        %v1108 = vmul.f32 %v1103, %v1103
        %v1109 = vsub.f32 %v1107, %v1108
        %v1110 = vsub.f32 %v1098, %v1103
        %v1111 = vadd.f32 %v1109, 1e-05
        %v1112 = vrsqrt.pop %v1111
        %v1113 = vmul.f32 %v1112, %v1111
        %v1114 = vmul.f32 %v1113, %v1112
        %v1115 = vmul.f32 0.5, %v1114
        %v1116 = vsub.f32 1.5, %v1115
        %v1117 = vmul.f32 %v1112, %v1116
        %vm1118 = vweird.f32 %v1111
        %vm1119 = vweird.f32 %v1112
        %vm1120 = vmor %vm1118, %vm1119
        %v1121 = vsel %vm1120, %v1112, %v1117
        %v1122 = vmul.f32 %v1110, %v1121
        %v1124 = vperm.slane %v1099, 0
        %v1126 = vmul.f32 %v1122, %v1124
        %v1128 = vperm.slane %v1100, 0
        %v1130 = vadd.f32 %v1126, %v1128
        %v1131 = vpack.c.bf16 %v1130, %v1130
        %v1132 = vld [vmem:[#allocation11] sm:$0xf]
        %v1133 = vld [vmem:[#allocation11 + $0x4] sm:$0xf]
        %v1134 = vld [vmem:[#allocation11 + $0x8] sm:$0xf]
        %v1135 = vld [vmem:[#allocation11 + $0xc] sm:$0xf]
        %v1136 = vld [vmem:[#allocation11 + $0x10] sm:$0xf]
        %v1137 = vld [vmem:[#allocation11 + $0x14] sm:$0xf]
        %v1138 = vld [vmem:[#allocation11 + $0x18] sm:$0xf]
        %v1139 = vld [vmem:[#allocation11 + $0x1c] sm:$0xf]
        %v1140 = vld [vmem:[#allocation11 + $0x20] sm:$0xf]
        %v1141 = vld [vmem:[#allocation11 + $0x24] sm:$0xf]
        %v1142 = vld [vmem:[#allocation11 + $0x28] sm:$0xf]
        %v1143 = vld [vmem:[#allocation11 + $0x2c] sm:$0xf]
        %v1144 = vld [vmem:[#allocation11 + $0x30] sm:$0xf]
        %v1145 = vld [vmem:[#allocation11 + $0x34] sm:$0xf]
        %v1146 = vld [vmem:[#allocation11 + $0x38] sm:$0xf]
        %v1147 = vld [vmem:[#allocation11 + $0x3c] sm:$0xf]
        %v1148 = vld [vmem:[%s7] sm:$0x1]
        %v1150 = vperm.slane %v1148, 0
        %v1168 = vunpack.c.l.b16 %v1132
        %v1169 = vunpack.c.l.b16 %v1133
        %v1170 = vunpack.c.l.b16 %v1134
        %v1171 = vunpack.c.l.b16 %v1135
        %v1172 = vunpack.c.l.b16 %v1136
        %v1173 = vunpack.c.l.b16 %v1137
        %v1174 = vunpack.c.l.b16 %v1138
        %v1175 = vunpack.c.l.b16 %v1139
        %v1176 = vunpack.c.l.b16 %v1140
        %v1177 = vunpack.c.l.b16 %v1141
        %v1178 = vunpack.c.l.b16 %v1142
        %v1179 = vunpack.c.l.b16 %v1143
        %v1180 = vunpack.c.l.b16 %v1144
        %v1181 = vunpack.c.l.b16 %v1145
        %v1182 = vunpack.c.l.b16 %v1146
        %v1183 = vunpack.c.l.b16 %v1147
        %v1184 = vpack.c.b16 %v1169, %v1168
        %v1185 = vpack.c.b16 %v1171, %v1170
        %v1186 = vpack.c.b16 %v1173, %v1172
        %v1187 = vpack.c.b16 %v1175, %v1174
        %v1188 = vpack.c.b16 %v1177, %v1176
        %v1189 = vpack.c.b16 %v1179, %v1178
        %v1190 = vpack.c.b16 %v1181, %v1180
        %v1191 = vpack.c.b16 %v1183, %v1182
        %1200 = vmatpush.bf16.msra.mxu0 %v1191
        %1201 = vmatpush.bf16.msra.mxu0 %v1190
        %1202 = vmatpush.bf16.msra.mxu0 %v1189
        %1203 = vmatpush.bf16.msra.mxu0 %v1188
        %1204 = vmatpush.bf16.msra.mxu0 %v1187
        %1205 = vmatpush.bf16.msra.mxu0 %v1186
        %1206 = vmatpush.bf16.msra.mxu0 %v1185
        %1207 = vmatpush.bf16.msra.mxu0 %v1184
        %1208 = vmatmul.bf16.gmra.mxu0 %v1131
        %v1209 = vpop.f32.mrf.mxu0
        %v1210 = vadd.f32 %v1150, %v1209
        %v1211 = vpop.f32.mrf.mxu0
        %1212 = vdwg.mxu0
        %v1213 = vmax.f32 %v1210, 0.0
        %v1214 = vpack.c.bf16 %v1213, %v1213
        %v1215 = vld [vmem:[#allocation13] sm:$0xf]
        %v1216 = vld [vmem:[#allocation13 + $0x4] sm:$0xf]
        %v1217 = vld [vmem:[#allocation13 + $0x8] sm:$0xf]
        %v1218 = vld [vmem:[#allocation13 + $0xc] sm:$0xf]
        %v1219 = vld [vmem:[#allocation13 + $0x10] sm:$0xf]
        %v1220 = vld [vmem:[#allocation13 + $0x14] sm:$0xf]
        %v1221 = vld [vmem:[#allocation13 + $0x18] sm:$0xf]
        %v1222 = vld [vmem:[#allocation13 + $0x1c] sm:$0xf]
        %v1223 = vld [vmem:[#allocation13 + $0x20] sm:$0xf]
        %v1224 = vld [vmem:[#allocation13 + $0x24] sm:$0xf]
        %v1225 = vld [vmem:[#allocation13 + $0x28] sm:$0xf]
        %v1226 = vld [vmem:[#allocation13 + $0x2c] sm:$0xf]
        %v1227 = vld [vmem:[#allocation13 + $0x30] sm:$0xf]
        %v1228 = vld [vmem:[#allocation13 + $0x34] sm:$0xf]
        %v1229 = vld [vmem:[#allocation13 + $0x38] sm:$0xf]
        %v1230 = vld [vmem:[#allocation13 + $0x3c] sm:$0xf]
        %v1231 = vld [vmem:[%s9] sm:$0x1]
        %v1233 = vperm.slane %v1231, 0
        %v1251 = vunpack.c.l.b16 %v1215
        %v1252 = vunpack.c.l.b16 %v1216
        %v1253 = vunpack.c.l.b16 %v1217
        %v1254 = vunpack.c.l.b16 %v1218
        %v1255 = vunpack.c.l.b16 %v1219
        %v1256 = vunpack.c.l.b16 %v1220
        %v1257 = vunpack.c.l.b16 %v1221
        %v1258 = vunpack.c.l.b16 %v1222
        %v1259 = vunpack.c.l.b16 %v1223
        %v1260 = vunpack.c.l.b16 %v1224
        %v1261 = vunpack.c.l.b16 %v1225
        %v1262 = vunpack.c.l.b16 %v1226
        %v1263 = vunpack.c.l.b16 %v1227
        %v1264 = vunpack.c.l.b16 %v1228
        %v1265 = vunpack.c.l.b16 %v1229
        %v1266 = vunpack.c.l.b16 %v1230
        %v1267 = vpack.c.b16 %v1252, %v1251
        %v1268 = vpack.c.b16 %v1254, %v1253
        %v1269 = vpack.c.b16 %v1256, %v1255
        %v1270 = vpack.c.b16 %v1258, %v1257
        %v1271 = vpack.c.b16 %v1260, %v1259
        %v1272 = vpack.c.b16 %v1262, %v1261
        %v1273 = vpack.c.b16 %v1264, %v1263
        %v1274 = vpack.c.b16 %v1266, %v1265
        %1283 = vmatpush.bf16.msra.mxu0 %v1274
        %1284 = vmatpush.bf16.msra.mxu0 %v1273
        %1285 = vmatpush.bf16.msra.mxu0 %v1272
        %1286 = vmatpush.bf16.msra.mxu0 %v1271
        %1287 = vmatpush.bf16.msra.mxu0 %v1270
        %1288 = vmatpush.bf16.msra.mxu0 %v1269
        %1289 = vmatpush.bf16.msra.mxu0 %v1268
        %1290 = vmatpush.bf16.msra.mxu0 %v1267
        %1291 = vmatmul.bf16.gmra.mxu0 %v1214
        %v1292 = vpop.f32.mrf.mxu0
        %v1293 = vadd.f32 %v1233, %v1292
        %v1294 = vpop.f32.mrf.mxu0
        %1295 = vdwg.mxu0
        %v1296 = vadd.f32 %v1130, %v1293
        %v1297 = vld [vmem:[#allocation14] sm:$0x1]
        %v1298 = vld [vmem:[%s13] sm:$0x1]
        %1299 = vadd.xlane.f32.xlu0 %v1296
        %v1300 = vpop.xlane.xlu0 %1299
        %v1301 = vmul.f32 %v1300, 0.03125
        %v1302 = vmul.f32 %v1296, %v1296
        %1303 = vadd.xlane.f32.xlu0 %v1302
        %v1304 = vpop.xlane.xlu0 %1303
        %v1305 = vmul.f32 %v1304, 0.03125
        %v1306 = vmul.f32 %v1301, %v1301
        %v1307 = vsub.f32 %v1305, %v1306
        %v1308 = vsub.f32 %v1296, %v1301
        %v1309 = vadd.f32 %v1307, 1e-05
        %v1310 = vrsqrt.pop %v1309
        %v1311 = vmul.f32 %v1310, %v1309
        %v1312 = vmul.f32 %v1311, %v1310
        %v1313 = vmul.f32 0.5, %v1312
        %v1314 = vsub.f32 1.5, %v1313
        %v1315 = vmul.f32 %v1310, %v1314
        %vm1316 = vweird.f32 %v1309
        %vm1317 = vweird.f32 %v1310
        %vm1318 = vmor %vm1316, %vm1317
        %v1319 = vsel %vm1318, %v1310, %v1315
        %v1320 = vmul.f32 %v1308, %v1319
        %v1322 = vperm.slane %v1297, 0
        %v1324 = vmul.f32 %v1320, %v1322
        %v1326 = vperm.slane %v1298, 0
        %v1328 = vadd.f32 %v1324, %v1326
        %v1329 = vpack.c.bf16 %v1328, %v1328
        %s1330 = scalar_lea.vmem [#allocation7], 192
        %v1331 = vld [vmem:[%s1330] sm:$0xff]
        %v1332 = vld [vmem:[%s1330 + $0x8] sm:$0xf]
        %v1333 = vld [vmem:[%s1330 + $0xc] sm:$0xff]
        %v1334 = vld [vmem:[%s1330 + $0x14] sm:$0xf]
        %v1335 = vld [vmem:[%s1330 + $0x18] sm:$0xff]
        %v1336 = vld [vmem:[%s1330 + $0x20] sm:$0xf]
        %v1337 = vld [vmem:[%s1330 + $0x24] sm:$0xff]
        %v1338 = vld [vmem:[%s1330 + $0x2c] sm:$0xf]
        %v1339 = vld [vmem:[%s1330 + $0x30] sm:$0xff]
        %v1340 = vld [vmem:[%s1330 + $0x38] sm:$0xf]
        %v1341 = vld [vmem:[%s1330 + $0x3c] sm:$0xff]
        %v1342 = vld [vmem:[%s1330 + $0x44] sm:$0xf]
        %v1343 = vld [vmem:[%s1330 + $0x48] sm:$0xff]
        %v1344 = vld [vmem:[%s1330 + $0x50] sm:$0xf]
        %v1345 = vld [vmem:[%s1330 + $0x54] sm:$0xff]
        %v1346 = vld [vmem:[%s1330 + $0x5c] sm:$0xf]
        %v1347 = vld [vmem:[%s1330 + $0x60] sm:$0xff]
        %v1348 = vld [vmem:[%s1330 + $0x68] sm:$0xf]
        %v1349 = vld [vmem:[%s1330 + $0x6c] sm:$0xff]
        %v1350 = vld [vmem:[%s1330 + $0x74] sm:$0xf]
        %v1351 = vld [vmem:[%s1330 + $0x78] sm:$0xff]
        %v1352 = vld [vmem:[%s1330 + $0x80] sm:$0xf]
        %v1353 = vld [vmem:[%s1330 + $0x84] sm:$0xff]
        %v1354 = vld [vmem:[%s1330 + $0x8c] sm:$0xf]
        %v1355 = vld [vmem:[%s1330 + $0x90] sm:$0xff]
        %v1356 = vld [vmem:[%s1330 + $0x98] sm:$0xf]
        %v1357 = vld [vmem:[%s1330 + $0x9c] sm:$0xff]
        %v1358 = vld [vmem:[%s1330 + $0xa4] sm:$0xf]
        %v1359 = vld [vmem:[%s1330 + $0xa8] sm:$0xff]
        %v1360 = vld [vmem:[%s1330 + $0xb0] sm:$0xf]
        %v1361 = vld [vmem:[%s1330 + $0xb4] sm:$0xff]
        %v1362 = vld [vmem:[%s1330 + $0xbc] sm:$0xf]
        %s1363 = scalar_lea.vmem [#allocation8], 3
        %v1364 = vld [vmem:[%s1363] sm:$0x7]
        %v1366 = vperm.slane %v1364, 0
        %v1367 = vperm.slane %v1364, 1
        %v1368 = vperm.slane %v1364, 2
        %v1404 = vunpack.c.l.b16 %v1331
        %v1405 = vunpack.c.h.b16 %v1331
        %v1406 = vunpack.c.l.b16 %v1332
        %v1407 = vunpack.c.l.b16 %v1333
        %v1408 = vunpack.c.h.b16 %v1333
        %v1409 = vunpack.c.l.b16 %v1334
        %v1410 = vunpack.c.l.b16 %v1335
        %v1411 = vunpack.c.h.b16 %v1335
        %v1412 = vunpack.c.l.b16 %v1336
        %v1413 = vunpack.c.l.b16 %v1337
        %v1414 = vunpack.c.h.b16 %v1337
        %v1415 = vunpack.c.l.b16 %v1338
        %v1416 = vunpack.c.l.b16 %v1339
        %v1417 = vunpack.c.h.b16 %v1339
        %v1418 = vunpack.c.l.b16 %v1340
        %v1419 = vunpack.c.l.b16 %v1341
        %v1420 = vunpack.c.h.b16 %v1341
        %v1421 = vunpack.c.l.b16 %v1342
        %v1422 = vunpack.c.l.b16 %v1343
        %v1423 = vunpack.c.h.b16 %v1343
        %v1424 = vunpack.c.l.b16 %v1344
        %v1425 = vunpack.c.l.b16 %v1345
        %v1426 = vunpack.c.h.b16 %v1345
        %v1427 = vunpack.c.l.b16 %v1346
        %v1428 = vunpack.c.l.b16 %v1347
        %v1429 = vunpack.c.h.b16 %v1347
        %v1430 = vunpack.c.l.b16 %v1348
        %v1431 = vunpack.c.l.b16 %v1349
        %v1432 = vunpack.c.h.b16 %v1349
        %v1433 = vunpack.c.l.b16 %v1350
        %v1434 = vunpack.c.l.b16 %v1351
        %v1435 = vunpack.c.h.b16 %v1351
        %v1436 = vunpack.c.l.b16 %v1352
        %v1437 = vunpack.c.l.b16 %v1353
        %v1438 = vunpack.c.h.b16 %v1353
        %v1439 = vunpack.c.l.b16 %v1354
        %v1440 = vunpack.c.l.b16 %v1355
        %v1441 = vunpack.c.h.b16 %v1355
        %v1442 = vunpack.c.l.b16 %v1356
        %v1443 = vunpack.c.l.b16 %v1357
        %v1444 = vunpack.c.h.b16 %v1357
        %v1445 = vunpack.c.l.b16 %v1358
        %v1446 = vunpack.c.l.b16 %v1359
        %v1447 = vunpack.c.h.b16 %v1359
        %v1448 = vunpack.c.l.b16 %v1360
        %v1449 = vunpack.c.l.b16 %v1361
        %v1450 = vunpack.c.h.b16 %v1361
        %v1451 = vunpack.c.l.b16 %v1362
        %v1452 = vpack.c.b16 %v1407, %v1404
        %v1453 = vpack.c.b16 %v1408, %v1405
        %v1454 = vpack.c.b16 %v1409, %v1406
        %v1455 = vpack.c.b16 %v1413, %v1410
        %v1456 = vpack.c.b16 %v1414, %v1411
        %v1457 = vpack.c.b16 %v1415, %v1412
        %v1458 = vpack.c.b16 %v1419, %v1416
        %v1459 = vpack.c.b16 %v1420, %v1417
        %v1460 = vpack.c.b16 %v1421, %v1418
        %v1461 = vpack.c.b16 %v1425, %v1422
        %v1462 = vpack.c.b16 %v1426, %v1423
        %v1463 = vpack.c.b16 %v1427, %v1424
        %v1464 = vpack.c.b16 %v1431, %v1428
        %v1465 = vpack.c.b16 %v1432, %v1429
        %v1466 = vpack.c.b16 %v1433, %v1430
        %v1467 = vpack.c.b16 %v1437, %v1434
        %v1468 = vpack.c.b16 %v1438, %v1435
        %v1469 = vpack.c.b16 %v1439, %v1436
        %v1470 = vpack.c.b16 %v1443, %v1440
        %v1471 = vpack.c.b16 %v1444, %v1441
        %v1472 = vpack.c.b16 %v1445, %v1442
        %v1473 = vpack.c.b16 %v1449, %v1446
        %v1474 = vpack.c.b16 %v1450, %v1447
        %v1475 = vpack.c.b16 %v1451, %v1448
        %1500 = vmatpush.bf16.msra.mxu0 %v1473
        %1501 = vmatpush.bf16.msra.mxu0 %v1470
        %1502 = vmatpush.bf16.msra.mxu0 %v1467
        %1503 = vmatpush.bf16.msra.mxu0 %v1464
        %1504 = vmatpush.bf16.msra.mxu0 %v1461
        %1505 = vmatpush.bf16.msra.mxu0 %v1458
        %1506 = vmatpush.bf16.msra.mxu0 %v1455
        %1507 = vmatpush.bf16.msra.mxu0 %v1452
        %1508 = vmatmul.bf16.gmra.mxu0 %v1329
        %v1509 = vpop.f32.mrf.mxu0
        %v1510 = vadd.f32 %v1366, %v1509
        %v1511 = vpop.f32.mrf.mxu0
        %1512 = vdwg.mxu0
        %1513 = vmatpush.bf16.msra.mxu0 %v1474
        %1514 = vmatpush.bf16.msra.mxu0 %v1471
        %1515 = vmatpush.bf16.msra.mxu0 %v1468
        %1516 = vmatpush.bf16.msra.mxu0 %v1465
        %1517 = vmatpush.bf16.msra.mxu0 %v1462
        %1518 = vmatpush.bf16.msra.mxu0 %v1459
        %1519 = vmatpush.bf16.msra.mxu0 %v1456
        %1520 = vmatpush.bf16.msra.mxu0 %v1453
        %1521 = vmatmul.bf16.gmra.mxu0 %v1329
        %v1522 = vpop.f32.mrf.mxu0
        %v1523 = vadd.f32 %v1367, %v1522
        %v1524 = vpop.f32.mrf.mxu0
        %1525 = vdwg.mxu0
        %1526 = vmatpush.bf16.msra.mxu0 %v1475
        %1527 = vmatpush.bf16.msra.mxu0 %v1472
        %1528 = vmatpush.bf16.msra.mxu0 %v1469
        %1529 = vmatpush.bf16.msra.mxu0 %v1466
        %1530 = vmatpush.bf16.msra.mxu0 %v1463
        %1531 = vmatpush.bf16.msra.mxu0 %v1460
        %1532 = vmatpush.bf16.msra.mxu0 %v1457
        %1533 = vmatpush.bf16.msra.mxu0 %v1454
        %1534 = vmatmul.bf16.gmra.mxu0 %v1329
        %v1535 = vpop.f32.mrf.mxu0
        %v1536 = vadd.f32 %v1368, %v1535
        %v1537 = vpop.f32.mrf.mxu0
        %1538 = vdwg.mxu0
        %v1539 = vpack.c.bf16 %v1523, %v1510
        %v1540 = vpack.c.bf16 %v1536, %v1536
        %v1542 = vrot.slane %v1539, 4
        %v1544 = vsel %vm817, %v1539, 0
        %v1547 = vsel %vm817, %v1542, 0
        %1549 = vmatpush.bf16.xpose.msra.mxu0 0
        %1550 = vmatpush.bf16.xpose.msra.mxu0 0
        %1551 = vmatpush.bf16.xpose.msra.mxu0 0
        %1552 = vmatpush.bf16.xpose.msra.mxu0 0
        %1553 = vmatpush.bf16.xpose.msra.mxu0 0
        %1554 = vmatpush.bf16.xpose.msra.mxu0 0
        %1555 = vmatpush.bf16.xpose.msra.mxu0 0
        %1556 = vmatpush.bf16.xpose.msra.mxu0 %v1547
        %1557 = vmatmul.bf16.gmra.mxu0 %v1544
        %v1558 = vpop.f32.mrf.mxu0
        %v1559 = vadd.f32 0.0, %v1558
        %v1560 = vpop.f32.mrf.mxu0
        %1561 = vdwg.mxu0
        %v1562 = vsel %vm817, %v1559, -inf
        %1563 = vmax.xlane.f32.xlu0 %v1562
        %v1564 = vpop.xlane.xlu0 %1563
        %v1565 = vsub.f32 %v1559, %v1564
        %v1566 = vmul.f32 %v1565, 1.442695
        %v1567 = vpow.pop %v1566
        %v1568 = vsel %vm817, %v1567, 0.0
        %1569 = vadd.xlane.f32.xlu0 %v1568
        %v1570 = vpop.xlane.xlu0 %1569
        %v1571 = vrcp.pop %v1570
        %v1572 = vmul.f32 %v1567, %v1571
        %v1573 = vpack.c.bf16 %v1572, %v1572
        %v1575 = vsel %vm817, %v1573, 0
        %v1578 = vsel %vm852, %v1540, 0
        %1580 = vmatpush.bf16.msra.mxu0 0
        %1581 = vmatpush.bf16.msra.mxu0 0
        %1582 = vmatpush.bf16.msra.mxu0 0
        %1583 = vmatpush.bf16.msra.mxu0 0
        %1584 = vmatpush.bf16.msra.mxu0 0
        %1585 = vmatpush.bf16.msra.mxu0 0
        %1586 = vmatpush.bf16.msra.mxu0 0
        %1587 = vmatpush.bf16.msra.mxu0 %v1578
        %1588 = vmatmul.bf16.gmra.mxu0 %v1575
        %v1589 = vpop.f32.mrf.mxu0
        %v1590 = vadd.f32 0.0, %v1589
        %v1591 = vpop.f32.mrf.mxu0
        %1592 = vdwg.mxu0
        %v1593 = vunpack.c.l.b16 %v1539
        %v1594 = vpack.c.b16 %v1593, %v1593
        %1595 = vrot.lane.b32.xlu0 %v1594, 120
        %v1596 = vpop.permute.xlu0 %1595
        %v1597 = vunpack.c.l.b16 %v1542
        %v1598 = vpack.c.b16 %v1597, %v1597
        %1599 = vrot.lane.b32.xlu0 %v1598, 120
        %v1600 = vpop.permute.xlu0 %1599
        %v1602 = vsel %vm817, %v1596, 0
        %v1605 = vsel %vm817, %v1600, 0
        %1607 = vmatpush.bf16.xpose.msra.mxu0 0
        %1608 = vmatpush.bf16.xpose.msra.mxu0 0
        %1609 = vmatpush.bf16.xpose.msra.mxu0 0
        %1610 = vmatpush.bf16.xpose.msra.mxu0 0
        %1611 = vmatpush.bf16.xpose.msra.mxu0 0
        %1612 = vmatpush.bf16.xpose.msra.mxu0 0
        %1613 = vmatpush.bf16.xpose.msra.mxu0 0
        %1614 = vmatpush.bf16.xpose.msra.mxu0 %v1605
        %1615 = vmatmul.bf16.gmra.mxu0 %v1602
        %v1616 = vpop.f32.mrf.mxu0
        %v1617 = vadd.f32 0.0, %v1616
        %v1618 = vpop.f32.mrf.mxu0
        %1619 = vdwg.mxu0
        %v1620 = vsel %vm817, %v1617, -inf
        %1621 = vmax.xlane.f32.xlu0 %v1620
        %v1622 = vpop.xlane.xlu0 %1621
        %v1623 = vsub.f32 %v1617, %v1622
        %v1624 = vmul.f32 %v1623, 1.442695
        %v1625 = vpow.pop %v1624
        %v1626 = vsel %vm817, %v1625, 0.0
        %1627 = vadd.xlane.f32.xlu0 %v1626
        %v1628 = vpop.xlane.xlu0 %1627
        %v1629 = vrcp.pop %v1628
        %v1630 = vmul.f32 %v1625, %v1629
        %v1631 = vpack.c.bf16 %v1630, %v1630
        %v1633 = vunpack.c.l.b16 %v1540
        %v1634 = vpack.c.b16 %v1633, %v1633
        %1635 = vrot.lane.b32.xlu0 %v1634, 120
        %v1636 = vpop.permute.xlu0 %1635
        %v1638 = vsel %vm817, %v1631, 0
        %v1641 = vsel %vm852, %v1636, 0
        %1643 = vmatpush.bf16.msra.mxu0 0
        %1644 = vmatpush.bf16.msra.mxu0 0
        %1645 = vmatpush.bf16.msra.mxu0 0
        %1646 = vmatpush.bf16.msra.mxu0 0
        %1647 = vmatpush.bf16.msra.mxu0 0
        %1648 = vmatpush.bf16.msra.mxu0 0
        %1649 = vmatpush.bf16.msra.mxu0 0
        %1650 = vmatpush.bf16.msra.mxu0 %v1641
        %1651 = vmatmul.bf16.gmra.mxu0 %v1638
        %v1652 = vpop.f32.mrf.mxu0
        %v1653 = vadd.f32 0.0, %v1652
        %v1654 = vpop.f32.mrf.mxu0
        %1655 = vdwg.mxu0
        %1656 = vrot.lane.b32.xlu0 %v1594, 112
        %v1657 = vpop.permute.xlu0 %1656
        %1658 = vrot.lane.b32.xlu0 %v1598, 112
        %v1659 = vpop.permute.xlu0 %1658
        %v1661 = vsel %vm817, %v1657, 0
        %v1664 = vsel %vm817, %v1659, 0
        %1666 = vmatpush.bf16.xpose.msra.mxu0 0
        %1667 = vmatpush.bf16.xpose.msra.mxu0 0
        %1668 = vmatpush.bf16.xpose.msra.mxu0 0
        %1669 = vmatpush.bf16.xpose.msra.mxu0 0
        %1670 = vmatpush.bf16.xpose.msra.mxu0 0
        %1671 = vmatpush.bf16.xpose.msra.mxu0 0
        %1672 = vmatpush.bf16.xpose.msra.mxu0 0
        %1673 = vmatpush.bf16.xpose.msra.mxu0 %v1664
        %1674 = vmatmul.bf16.gmra.mxu0 %v1661
        %v1675 = vpop.f32.mrf.mxu0
        %v1676 = vadd.f32 0.0, %v1675
        %v1677 = vpop.f32.mrf.mxu0
        %1678 = vdwg.mxu0
        %v1679 = vsel %vm817, %v1676, -inf
        %1680 = vmax.xlane.f32.xlu0 %v1679
        %v1681 = vpop.xlane.xlu0 %1680
        %v1682 = vsub.f32 %v1676, %v1681
        %v1683 = vmul.f32 %v1682, 1.442695
        %v1684 = vpow.pop %v1683
        %v1685 = vsel %vm817, %v1684, 0.0
        %1686 = vadd.xlane.f32.xlu0 %v1685
        %v1687 = vpop.xlane.xlu0 %1686
        %v1688 = vrcp.pop %v1687
        %v1689 = vmul.f32 %v1684, %v1688
        %v1690 = vpack.c.bf16 %v1689, %v1689
        %1691 = vrot.lane.b32.xlu0 %v1634, 112
        %v1692 = vpop.permute.xlu0 %1691
        %v1694 = vsel %vm817, %v1690, 0
        %v1697 = vsel %vm852, %v1692, 0
        %1699 = vmatpush.bf16.msra.mxu0 0
        %1700 = vmatpush.bf16.msra.mxu0 0
        %1701 = vmatpush.bf16.msra.mxu0 0
        %1702 = vmatpush.bf16.msra.mxu0 0
        %1703 = vmatpush.bf16.msra.mxu0 0
        %1704 = vmatpush.bf16.msra.mxu0 0
        %1705 = vmatpush.bf16.msra.mxu0 0
        %1706 = vmatpush.bf16.msra.mxu0 %v1697
        %1707 = vmatmul.bf16.gmra.mxu0 %v1694
        %v1708 = vpop.f32.mrf.mxu0
        %v1709 = vadd.f32 0.0, %v1708
        %v1710 = vpop.f32.mrf.mxu0
        %1711 = vdwg.mxu0
        %1712 = vrot.lane.b32.xlu0 %v1594, 104
        %v1713 = vpop.permute.xlu0 %1712
        %1714 = vrot.lane.b32.xlu0 %v1598, 104
        %v1715 = vpop.permute.xlu0 %1714
        %v1717 = vsel %vm817, %v1713, 0
        %v1720 = vsel %vm817, %v1715, 0
        %1722 = vmatpush.bf16.xpose.msra.mxu0 0
        %1723 = vmatpush.bf16.xpose.msra.mxu0 0
        %1724 = vmatpush.bf16.xpose.msra.mxu0 0
        %1725 = vmatpush.bf16.xpose.msra.mxu0 0
        %1726 = vmatpush.bf16.xpose.msra.mxu0 0
        %1727 = vmatpush.bf16.xpose.msra.mxu0 0
        %1728 = vmatpush.bf16.xpose.msra.mxu0 0
        %1729 = vmatpush.bf16.xpose.msra.mxu0 %v1720
        %1730 = vmatmul.bf16.gmra.mxu0 %v1717
        %v1731 = vpop.f32.mrf.mxu0
        %v1732 = vadd.f32 0.0, %v1731
        %v1733 = vpop.f32.mrf.mxu0
        %1734 = vdwg.mxu0
        %v1735 = vsel %vm817, %v1732, -inf
        %1736 = vmax.xlane.f32.xlu0 %v1735
        %v1737 = vpop.xlane.xlu0 %1736
        %v1738 = vsub.f32 %v1732, %v1737
        %v1739 = vmul.f32 %v1738, 1.442695
        %v1740 = vpow.pop %v1739
        %v1741 = vsel %vm817, %v1740, 0.0
        %1742 = vadd.xlane.f32.xlu0 %v1741
        %v1743 = vpop.xlane.xlu0 %1742
        %v1744 = vrcp.pop %v1743
        %v1745 = vmul.f32 %v1740, %v1744
        %v1746 = vpack.c.bf16 %v1745, %v1745
        %1747 = vrot.lane.b32.xlu0 %v1634, 104
        %v1748 = vpop.permute.xlu0 %1747
        %v1750 = vsel %vm817, %v1746, 0
        %v1753 = vsel %vm852, %v1748, 0
        %1755 = vmatpush.bf16.msra.mxu0 0
        %1756 = vmatpush.bf16.msra.mxu0 0
        %1757 = vmatpush.bf16.msra.mxu0 0
        %1758 = vmatpush.bf16.msra.mxu0 0
        %1759 = vmatpush.bf16.msra.mxu0 0
        %1760 = vmatpush.bf16.msra.mxu0 0
        %1761 = vmatpush.bf16.msra.mxu0 0
        %1762 = vmatpush.bf16.msra.mxu0 %v1753
        %1763 = vmatmul.bf16.gmra.mxu0 %v1750
        %v1764 = vpop.f32.mrf.mxu0
        %v1765 = vadd.f32 0.0, %v1764
        %v1766 = vpop.f32.mrf.mxu0
        %1767 = vdwg.mxu0
        %1769 = vrot.lane.b32.xlu0 %v1653, 8
        %v1770 = vpop.permute.xlu0 %1769
        %1773 = vrot.lane.b32.xlu0 %v1709, 16
        %v1774 = vpop.permute.xlu0 %1773
        %1777 = vrot.lane.b32.xlu0 %v1765, 24
        %v1778 = vpop.permute.xlu0 %1777
        %v1780 = vsel %vm817, %v1590, %v1770
        %v1781 = vsel %vm1057, %v1780, %v1774
        %v1782 = vsel %vm1059, %v1781, %v1778
        %v1783 = vpack.c.bf16 %v1782, %v1782
        %s1784 = scalar_lea.vmem [#allocation10], 16
        %v1785 = vld [vmem:[%s1784] sm:$0xf]
        %v1786 = vld [vmem:[%s1784 + $0x4] sm:$0xf]
        %v1787 = vld [vmem:[%s1784 + $0x8] sm:$0xf]
        %v1788 = vld [vmem:[%s1784 + $0xc] sm:$0xf]
        %s1789 = scalar_lea.vmem %s5, 1
        %v1790 = vld [vmem:[%s1789] sm:$0x1]
        %v1792 = vperm.slane %v1790, 0
        %v1798 = vunpack.c.l.b16 %v1785
        %v1799 = vunpack.c.l.b16 %v1786
        %v1800 = vunpack.c.l.b16 %v1787
        %v1801 = vunpack.c.l.b16 %v1788
        %v1802 = vpack.c.b16 %v1799, %v1798
        %v1803 = vpack.c.b16 %v1801, %v1800
        %v1807 = vsel %vm603, %v1783, 0
        %1809 = vmatpush.bf16.msra.mxu0 0
        %1810 = vmatpush.bf16.msra.mxu0 0
        %1811 = vmatpush.bf16.msra.mxu0 0
        %1812 = vmatpush.bf16.msra.mxu0 0
        %1813 = vmatpush.bf16.msra.mxu0 0
        %1814 = vmatpush.bf16.msra.mxu0 0
        %1815 = vmatpush.bf16.msra.mxu0 %v1803
        %1816 = vmatpush.bf16.msra.mxu0 %v1802
        %1817 = vmatmul.bf16.gmra.mxu0 %v1807
        %v1818 = vpop.f32.mrf.mxu0
        %v1819 = vadd.f32 %v1792, %v1818
        %v1820 = vpop.f32.mrf.mxu0
        %1821 = vdwg.mxu0
        %v1822 = vadd.f32 %v1328, %v1819
        %s1823 = scalar_lea.vmem %s10, 1
        %v1824 = vld [vmem:[%s1823] sm:$0x1]
        %s1825 = scalar_lea.vmem %s11, 1
        %v1826 = vld [vmem:[%s1825] sm:$0x1]
        %1827 = vadd.xlane.f32.xlu0 %v1822
        %v1828 = vpop.xlane.xlu0 %1827
        %v1829 = vmul.f32 %v1828, 0.03125
        %v1830 = vmul.f32 %v1822, %v1822
        %1831 = vadd.xlane.f32.xlu0 %v1830
        %v1832 = vpop.xlane.xlu0 %1831
        %v1833 = vmul.f32 %v1832, 0.03125
        %v1834 = vmul.f32 %v1829, %v1829
        %v1835 = vsub.f32 %v1833, %v1834
        %v1836 = vsub.f32 %v1822, %v1829
        %v1837 = vadd.f32 %v1835, 1e-05
        %v1838 = vrsqrt.pop %v1837
        %v1839 = vmul.f32 %v1838, %v1837
        %v1840 = vmul.f32 %v1839, %v1838
        %v1841 = vmul.f32 0.5, %v1840
        %v1842 = vsub.f32 1.5, %v1841
        %v1843 = vmul.f32 %v1838, %v1842
        %vm1844 = vweird.f32 %v1837
        %vm1845 = vweird.f32 %v1838
        %vm1846 = vmor %vm1844, %vm1845
        %v1847 = vsel %vm1846, %v1838, %v1843
        %v1848 = vmul.f32 %v1836, %v1847
        %v1850 = vperm.slane %v1824, 0
        %v1852 = vmul.f32 %v1848, %v1850
        %v1854 = vperm.slane %v1826, 0
        %v1856 = vadd.f32 %v1852, %v1854
        %v1857 = vpack.c.bf16 %v1856, %v1856
        %s1858 = scalar_lea.vmem [#allocation11], 64
        %v1859 = vld [vmem:[%s1858] sm:$0xf]
        %v1860 = vld [vmem:[%s1858 + $0x4] sm:$0xf]
        %v1861 = vld [vmem:[%s1858 + $0x8] sm:$0xf]
        %v1862 = vld [vmem:[%s1858 + $0xc] sm:$0xf]
        %v1863 = vld [vmem:[%s1858 + $0x10] sm:$0xf]
        %v1864 = vld [vmem:[%s1858 + $0x14] sm:$0xf]
        %v1865 = vld [vmem:[%s1858 + $0x18] sm:$0xf]
        %v1866 = vld [vmem:[%s1858 + $0x1c] sm:$0xf]
        %v1867 = vld [vmem:[%s1858 + $0x20] sm:$0xf]
        %v1868 = vld [vmem:[%s1858 + $0x24] sm:$0xf]
        %v1869 = vld [vmem:[%s1858 + $0x28] sm:$0xf]
        %v1870 = vld [vmem:[%s1858 + $0x2c] sm:$0xf]
        %v1871 = vld [vmem:[%s1858 + $0x30] sm:$0xf]
        %v1872 = vld [vmem:[%s1858 + $0x34] sm:$0xf]
        %v1873 = vld [vmem:[%s1858 + $0x38] sm:$0xf]
        %v1874 = vld [vmem:[%s1858 + $0x3c] sm:$0xf]
        %s1875 = scalar_lea.vmem %s7, 1
        %v1876 = vld [vmem:[%s1875] sm:$0x1]
        %v1878 = vperm.slane %v1876, 0
        %v1896 = vunpack.c.l.b16 %v1859
        %v1897 = vunpack.c.l.b16 %v1860
        %v1898 = vunpack.c.l.b16 %v1861
        %v1899 = vunpack.c.l.b16 %v1862
        %v1900 = vunpack.c.l.b16 %v1863
        %v1901 = vunpack.c.l.b16 %v1864
        %v1902 = vunpack.c.l.b16 %v1865
        %v1903 = vunpack.c.l.b16 %v1866
        %v1904 = vunpack.c.l.b16 %v1867
        %v1905 = vunpack.c.l.b16 %v1868
        %v1906 = vunpack.c.l.b16 %v1869
        %v1907 = vunpack.c.l.b16 %v1870
        %v1908 = vunpack.c.l.b16 %v1871
        %v1909 = vunpack.c.l.b16 %v1872
        %v1910 = vunpack.c.l.b16 %v1873
        %v1911 = vunpack.c.l.b16 %v1874
        %v1912 = vpack.c.b16 %v1897, %v1896
        %v1913 = vpack.c.b16 %v1899, %v1898
        %v1914 = vpack.c.b16 %v1901, %v1900
        %v1915 = vpack.c.b16 %v1903, %v1902
        %v1916 = vpack.c.b16 %v1905, %v1904
        %v1917 = vpack.c.b16 %v1907, %v1906
        %v1918 = vpack.c.b16 %v1909, %v1908
        %v1919 = vpack.c.b16 %v1911, %v1910
        %1928 = vmatpush.bf16.msra.mxu0 %v1919
        %1929 = vmatpush.bf16.msra.mxu0 %v1918
        %1930 = vmatpush.bf16.msra.mxu0 %v1917
        %1931 = vmatpush.bf16.msra.mxu0 %v1916
        %1932 = vmatpush.bf16.msra.mxu0 %v1915
        %1933 = vmatpush.bf16.msra.mxu0 %v1914
        %1934 = vmatpush.bf16.msra.mxu0 %v1913
        %1935 = vmatpush.bf16.msra.mxu0 %v1912
        %1936 = vmatmul.bf16.gmra.mxu0 %v1857
        %v1937 = vpop.f32.mrf.mxu0
        %v1938 = vadd.f32 %v1878, %v1937
        %v1939 = vpop.f32.mrf.mxu0
        %1940 = vdwg.mxu0
        %v1941 = vmax.f32 %v1938, 0.0
        %v1942 = vpack.c.bf16 %v1941, %v1941
        %s1943 = scalar_lea.vmem [#allocation13], 64
        %v1944 = vld [vmem:[%s1943] sm:$0xf]
        %v1945 = vld [vmem:[%s1943 + $0x4] sm:$0xf]
        %v1946 = vld [vmem:[%s1943 + $0x8] sm:$0xf]
        %v1947 = vld [vmem:[%s1943 + $0xc] sm:$0xf]
        %v1948 = vld [vmem:[%s1943 + $0x10] sm:$0xf]
        %v1949 = vld [vmem:[%s1943 + $0x14] sm:$0xf]
        %v1950 = vld [vmem:[%s1943 + $0x18] sm:$0xf]
        %v1951 = vld [vmem:[%s1943 + $0x1c] sm:$0xf]
        %v1952 = vld [vmem:[%s1943 + $0x20] sm:$0xf]
        %v1953 = vld [vmem:[%s1943 + $0x24] sm:$0xf]
        %v1954 = vld [vmem:[%s1943 + $0x28] sm:$0xf]
        %v1955 = vld [vmem:[%s1943 + $0x2c] sm:$0xf]
        %v1956 = vld [vmem:[%s1943 + $0x30] sm:$0xf]
        %v1957 = vld [vmem:[%s1943 + $0x34] sm:$0xf]
        %v1958 = vld [vmem:[%s1943 + $0x38] sm:$0xf]
        %v1959 = vld [vmem:[%s1943 + $0x3c] sm:$0xf]
        %s1960 = scalar_lea.vmem %s9, 1
        %v1961 = vld [vmem:[%s1960] sm:$0x1]
        %v1963 = vperm.slane %v1961, 0
        %v1981 = vunpack.c.l.b16 %v1944
        %v1982 = vunpack.c.l.b16 %v1945
        %v1983 = vunpack.c.l.b16 %v1946
        %v1984 = vunpack.c.l.b16 %v1947
        %v1985 = vunpack.c.l.b16 %v1948
        %v1986 = vunpack.c.l.b16 %v1949
        %v1987 = vunpack.c.l.b16 %v1950
        %v1988 = vunpack.c.l.b16 %v1951
        %v1989 = vunpack.c.l.b16 %v1952
        %v1990 = vunpack.c.l.b16 %v1953
        %v1991 = vunpack.c.l.b16 %v1954
        %v1992 = vunpack.c.l.b16 %v1955
        %v1993 = vunpack.c.l.b16 %v1956
        %v1994 = vunpack.c.l.b16 %v1957
        %v1995 = vunpack.c.l.b16 %v1958
        %v1996 = vunpack.c.l.b16 %v1959
        %v1997 = vpack.c.b16 %v1982, %v1981
        %v1998 = vpack.c.b16 %v1984, %v1983
        %v1999 = vpack.c.b16 %v1986, %v1985
        %v2000 = vpack.c.b16 %v1988, %v1987
        %v2001 = vpack.c.b16 %v1990, %v1989
        %v2002 = vpack.c.b16 %v1992, %v1991
        %v2003 = vpack.c.b16 %v1994, %v1993
        %v2004 = vpack.c.b16 %v1996, %v1995
        %2013 = vmatpush.bf16.msra.mxu0 %v2004
        %2014 = vmatpush.bf16.msra.mxu0 %v2003
        %2015 = vmatpush.bf16.msra.mxu0 %v2002
        %2016 = vmatpush.bf16.msra.mxu0 %v2001
        %2017 = vmatpush.bf16.msra.mxu0 %v2000
        %2018 = vmatpush.bf16.msra.mxu0 %v1999
        %2019 = vmatpush.bf16.msra.mxu0 %v1998
        %2020 = vmatpush.bf16.msra.mxu0 %v1997
        %2021 = vmatmul.bf16.gmra.mxu0 %v1942
        %v2022 = vpop.f32.mrf.mxu0
        %v2023 = vadd.f32 %v1963, %v2022
        %v2024 = vpop.f32.mrf.mxu0
        %2025 = vdwg.mxu0
        %v2026 = vadd.f32 %v1856, %v2023
        %s2027 = scalar_lea.vmem [#allocation14], 1
        %v2028 = vld [vmem:[%s2027] sm:$0x1]
        %s2029 = scalar_lea.vmem %s13, 1
        %v2030 = vld [vmem:[%s2029] sm:$0x1]
        %2031 = vadd.xlane.f32.xlu0 %v2026
        %v2032 = vpop.xlane.xlu0 %2031
        %v2033 = vmul.f32 %v2032, 0.03125
        %v2034 = vmul.f32 %v2026, %v2026
        %2035 = vadd.xlane.f32.xlu0 %v2034
        %v2036 = vpop.xlane.xlu0 %2035
        %v2037 = vmul.f32 %v2036, 0.03125
        %v2038 = vmul.f32 %v2033, %v2033
        %v2039 = vsub.f32 %v2037, %v2038
        %v2040 = vsub.f32 %v2026, %v2033
        %v2041 = vadd.f32 %v2039, 1e-05
        %v2042 = vrsqrt.pop %v2041
        %v2043 = vmul.f32 %v2042, %v2041
        %v2044 = vmul.f32 %v2043, %v2042
        %v2045 = vmul.f32 0.5, %v2044
        %v2046 = vsub.f32 1.5, %v2045
        %v2047 = vmul.f32 %v2042, %v2046
        %vm2048 = vweird.f32 %v2041
        %vm2049 = vweird.f32 %v2042
        %vm2050 = vmor %vm2048, %vm2049
        %v2051 = vsel %vm2050, %v2042, %v2047
        %v2052 = vmul.f32 %v2040, %v2051
        %v2054 = vperm.slane %v2028, 0
        %v2056 = vmul.f32 %v2052, %v2054
        %v2058 = vperm.slane %v2030, 0
        %v2060 = vadd.f32 %v2056, %v2058
        %v2061 = vpack.c.bf16 %v2060, %v2060
        %2062 = vst [vmem:[%s598] sm:$0xf] %v2061
        %s2063 = sand.u32 %s342, 1
        %s2064 = scalar_lea.sflag [#allocation4], %s2063
        %s2065 = sand.u32 %s342, 1
        %s2066 = smul.addr %s2065, 4
        %s2067 = scalar_lea.vmem [#allocation16], %s2066
        // Predicated region
        $region109: #{tpu_custom_call.1} parent=75 // pred_check
          %p2068 = pneg %p352
        $region110: #{tpu_custom_call.1} parent=75 // pred_check_branch
          %2070 = sbr.rel (%p2068) target = $region112
        $region111: #{tpu_custom_call.1} parent=75 // pred_region
          %2072 = vsyncadd %s2064, 0
          %s2073 = smul.addr %s35, 4
          %s2074 = scalar_lea.hbm %s14, %s2073
          %s2076 = sshll.u32 %s2067, 4
          %s2077 = int_to_ptr.vmem [resolvable:$true] %s2076
          %s2078 = sshll.u32 %s2074, 4
          %s2079 = int_to_ptr.hbm [resolvable:$true] %s2078
          %2081 = dma.vmem_to_hbm [thread:$0]  %s2077, 64, %s2079, %s2064
        $region112: #{tpu_custom_call.1} parent=75 // pred_fallthru
          _
      $region76: #{tpu_custom_call.1} parent=5 // pred_fallthru
        _
      %p2082 = scmp.le.s32.totalorder 2, %s30
      // Predicated region
      $region113: #{tpu_custom_call.1} parent=5 // pred_check
        %p2083 = pneg %p2082
      $region114: #{tpu_custom_call.1} parent=5 // pred_check_branch
        %2085 = sbr.rel (%p2083) target = $region116
      $region115: #{tpu_custom_call.1} parent=5 // pred_region
        %s2086 = ssub.s32 %s30, 2
        // Predicated region
        $region117: #{tpu_custom_call.1} parent=115 // pred_check
          %p2087 = pneg %p358
        $region118: #{tpu_custom_call.1} parent=115 // pred_check_branch
          %2089 = sbr.rel (%p2087) target = $region120
        $region119: #{tpu_custom_call.1} parent=115 // pred_region
          %s2090 = sand.u32 %s343, 1
          %s2091 = scalar_lea.sflag [#allocation4], %s2090
          %s2092 = sand.u32 %s343, 1
          %s2093 = smul.addr %s2092, 4
          %s2094 = scalar_lea.vmem [#allocation16], %s2093
          %2096 = dma.done %s2091, 64
        $region120: #{tpu_custom_call.1} parent=115 // pred_fallthru
          _
      $region116: #{tpu_custom_call.1} parent=5 // pred_fallthru
        _
    $region6: #{tpu_custom_call.1} parent=1 // loop_footer
      %s34 = sadd.s32 1, %s30
    $region7: #{tpu_custom_call.1} parent=1 // loop_footer_branch
      %29 = sbr.rel target = $region3
    $region8: #{tpu_custom_call.1} parent=1 // loop_exit
      _
    %2097 = vsyncpa [#allocation3], 1
    %s2098 = scalar_lea.sflag [#allocation3], 1
    %2099 = vsyncpa %s2098, 1
    %2100 = vsyncpa [#allocation6], 1
    %2101 = vsyncpa [#allocation9], 1
    %2102 = vsyncpa [#allocation12], 1
    %2103 = vsyncpa [#allocation15], 1
    %2104 = vsyncpa [#allocation4], 1
    %s2105 = scalar_lea.sflag [#allocation4], 1
    %2106 = vsyncpa %s2105, 1

// kernel: tpu_custom_call.1
$region0: #{tpu_custom_call.1}
  #allocation0 [shape = 'u32[]', space=smem, size = 0x4, offset = 0x4, fixed_abs, tag = 'smem constant byte address 0x4 - core index']
  #allocation1 [shape = 'u32[72,128]{1,0:T(1,128)}', space=vmem, size = 0x9000, scoped, tag = 'internal scratch']
  %s0 = inlined_call_operand.hbm [shape: f32[2,8,32], index: 0, kind: input, shape index: {}]
  %s1 = inlined_call_operand.hbm [shape: f32[1,8,32], index: 1, kind: input, shape index: {}]
  %s2 = inlined_call_operand.hbm [shape: bf16[2,128,384], index: 2, kind: input, shape index: {}]
  %s3 = inlined_call_operand.hbm [shape: f32[2,1,384], index: 3, kind: input, shape index: {}]
  %s4 = inlined_call_operand.hbm [shape: bf16[2,32,128], index: 4, kind: input, shape index: {}]
  %s5 = inlined_call_operand.vmem [shape: f32[2,1,128], index: 5, kind: input, shape index: {}]
  %s6 = inlined_call_operand.hbm [shape: bf16[2,128,128], index: 6, kind: input, shape index: {}]
  %s7 = inlined_call_operand.vmem [shape: f32[2,1,128], index: 7, kind: input, shape index: {}]
  %s8 = inlined_call_operand.hbm [shape: bf16[2,128,128], index: 8, kind: input, shape index: {}]
  %s9 = inlined_call_operand.vmem [shape: f32[2,1,128], index: 9, kind: input, shape index: {}]
  %s10 = inlined_call_operand.vmem [shape: f32[2,1,128], index: 10, kind: input, shape index: {}]
  %s11 = inlined_call_operand.vmem [shape: f32[2,1,128], index: 11, kind: input, shape index: {}]
  %s12 = inlined_call_operand.hbm [shape: f32[2,1,128], index: 12, kind: input, shape index: {}]
  %s13 = inlined_call_operand.vmem [shape: f32[2,1,128], index: 13, kind: input, shape index: {}]
  %s14 = inlined_call_operand.hbm [shape: bf16[2,8,128], index: 14, kind: output, shape index: {}]
  %s15 = sld [smem:[#allocation0]]
  $region121: #{tpu_custom_call.1} parent=0
    _
  %s17 = ssub.s32 1, %s15
  %s18 = scalar_select 0, %s17, %s15
  $region1: #{tpu_custom_call.1} parent=0
    #allocation2 [shape = 'u8[8192]{0}', space=vmem, size = 0x2000, scoped, tag = 'input window, operand 0']
    #allocation3 [shape = 's32[2]{0}', space=sflag, size = 0x8, scoped, tag = 'scoped memory for tpu_custom_call.1']
    #allocation4 [shape = 's32[2]{0}', space=sflag, size = 0x8, scoped, tag = 'scoped memory for tpu_custom_call.1']
    #allocation5 [shape = 'u8[4096]{0}', space=vmem, size = 0x1000, scoped, tag = 'input window, operand 1, single buffered']
    #allocation6 [shape = 's32[1]{0}', space=sflag, size = 0x4, scoped, tag = 'scoped memory for tpu_custom_call.1']
    #allocation7 [shape = 'u8[196608]{0}', space=vmem, size = 0x30000, scoped, tag = 'input window, operand 2, single buffered']
    #allocation8 [shape = 'u8[3072]{0}', space=vmem, size = 0xc00, scoped, tag = 'input window, operand 3, single buffered']
    #allocation9 [shape = 's32[1]{0}', space=sflag, size = 0x4, scoped, tag = 'scoped memory for tpu_custom_call.1']
    #allocation10 [shape = 'u8[16384]{0}', space=vmem, size = 0x4000, scoped, tag = 'input window, operand 4, single buffered']
    #allocation11 [shape = 'u8[65536]{0}', space=vmem, size = 0x10000, scoped, tag = 'input window, operand 6, single buffered']
    #allocation12 [shape = 's32[1]{0}', space=sflag, size = 0x4, scoped, tag = 'scoped memory for tpu_custom_call.1']
    #allocation13 [shape = 'u8[65536]{0}', space=vmem, size = 0x10000, scoped, tag = 'input window, operand 8, single buffered']
    #allocation14 [shape = 'u8[1024]{0}', space=vmem, size = 0x400, scoped, tag = 'input window, operand 12, single buffered']
    #allocation15 [shape = 's32[1]{0}', space=sflag, size = 0x4, scoped, tag = 'scoped memory for tpu_custom_call.1']
    #allocation16 [shape = 'u8[4096]{0}', space=vmem, size = 0x1000, scoped, tag = 'output window, operand 0']
    %19 = vsyncpa [#allocation3], 0
    %s20 = scalar_lea.sflag [#allocation3], 1
    %21 = vsyncpa %s20, 0
    %22 = vsyncpa [#allocation6], 0
    %23 = vsyncpa [#allocation9], 0
    %24 = vsyncpa [#allocation12], 0
    %25 = vsyncpa [#allocation15], 0
    %26 = vsyncpa [#allocation4], 0
    %s27 = scalar_lea.sflag [#allocation4], 1
    %28 = vsyncpa %s27, 0
    loop: start=0, step=1, limit=4
    $region2: #{tpu_custom_call.1} parent=1 // loop_pre_header
      _
    $region3: #{tpu_custom_call.1} parent=1 // loop_header
      %s30 = sphi 0, %s34
      %p31 = scmp.ge.s32.totalorder %s30, 4
      %s40 = sphi 0, %s42
      %s43 = sphi 0, %s40
      %s44 = sphi 0, %s43
      %s60 = sphi 0, %s44
      %s64 = sphi 0, %s64
      %s66 = sphi 0, %s64
      %s67 = sphi 0, %s66
      %s81 = sphi 0, %s67
      %s85 = sphi 0, %s85
      %s87 = sphi 0, %s85
      %s88 = sphi 0, %s87
      %s102 = sphi 0, %s88
      %s106 = sphi 0, %s106
      %s108 = sphi 0, %s106
      %s109 = sphi 0, %s108
      %s123 = sphi 0, %s109
      %s127 = sphi 0, %s127
      %s129 = sphi 0, %s127
      %s130 = sphi 0, %s129
      %s144 = sphi 0, %s130
      %s148 = sphi 0, %s148
      %s150 = sphi 0, %s148
      %s151 = sphi 0, %s150
      %s165 = sphi 0, %s151
      %s169 = sphi 0, %s169
      %s171 = sphi 0, %s169
      %s172 = sphi 0, %s171
      %s186 = sphi 0, %s172
      %s190 = sphi 0, %s190
      %s192 = sphi 0, %s190
      %s193 = sphi 0, %s192
      %s207 = sphi 0, %s193
      %s211 = sphi 0, %s211
      %s213 = sphi 0, %s211
      %s214 = sphi 0, %s213
      %s228 = sphi 0, %s214
      %s232 = sphi 0, %s232
      %s234 = sphi 0, %s232
      %s235 = sphi 0, %s234
      %s249 = sphi 0, %s235
      %s253 = sphi 0, %s253
      %s255 = sphi 0, %s253
      %s256 = sphi 0, %s255
      %s270 = sphi 0, %s256
      %s274 = sphi 0, %s274
      %s276 = sphi 0, %s274
      %s277 = sphi 0, %s276
      %s291 = sphi 0, %s277
      %s295 = sphi 0, %s295
      %s297 = sphi 0, %s295
      %s298 = sphi 0, %s297
      %s312 = sphi 0, %s298
      %s316 = sphi 0, %s316
      %s318 = sphi 0, %s316
      %s319 = sphi 0, %s318
      %s333 = sphi 0, %s319
      %s339 = sphi 0, %s341
      %s342 = sphi 0, %s339
      %s343 = sphi 0, %s342
      %s359 = sphi 0, %s343
    $region4: #{tpu_custom_call.1} parent=1 // loop_header_branch
      %33 = sbr.rel (%p31) target = $region8
    $region5: #{tpu_custom_call.1} parent=1 // loop_body
      %s35 = ssub.s32 %s30, 1
      %s36 = ssub.s32 %s30, 2
      %s37 = sadd.s32 %s30, 1
      %s38 = ssub.s32 %s30, %s37
      %p39 = scmp.eq.s32.totalorder %s38, 0
      %s41 = sadd.s32 %s40, 1
      %s42 = scalar_select %p39, %s40, %s41
      %p45 = pneg %p39
      %p46 = scmp.eq.s32.totalorder %s30, 1
      %p47 = por %p45, %p46
      %p48 = scmp.ne.s32.totalorder %s40, %s43
      %p49 = scmp.eq.s32.totalorder %s30, 0
      %p50 = por %p48, %p49
      %p51 = scmp.ne.s32.totalorder %s40, %s43
      %p52 = scmp.eq.s32.totalorder %s35, 1
      %p53 = por %p51, %p52
      %p54 = scmp.ne.s32.totalorder %s43, %s44
      %p55 = scmp.eq.s32.totalorder %s35, 0
      %p56 = por %p54, %p55
      %p57 = scmp.ne.s32.totalorder %s43, %s44
      %p58 = scmp.eq.s32.totalorder %s36, 1
      %p59 = por %p57, %p58
      %p61 = scmp.ne.s32.totalorder %s44, %s60
      %p62 = scmp.eq.s32.totalorder %s36, 0
      %p63 = por %p61, %p62
      %s65 = sadd.s32 %s64, 1
      %p68 = scmp.eq.s32.totalorder %s30, 1
      %p69 = scmp.ne.s32.totalorder %s64, %s66
      %p70 = scmp.eq.s32.totalorder %s30, 0
      %p71 = por %p69, %p70
      %p72 = scmp.ne.s32.totalorder %s64, %s66
      %p73 = scmp.eq.s32.totalorder %s35, 1
      %p74 = por %p72, %p73
      %p75 = scmp.ne.s32.totalorder %s66, %s67
      %p76 = scmp.eq.s32.totalorder %s35, 0
      %p77 = por %p75, %p76
      %p78 = scmp.ne.s32.totalorder %s66, %s67
      %p79 = scmp.eq.s32.totalorder %s36, 1
      %p80 = por %p78, %p79
      %p82 = scmp.ne.s32.totalorder %s67, %s81
      %p83 = scmp.eq.s32.totalorder %s36, 0
      %p84 = por %p82, %p83
      %s86 = sadd.s32 %s85, 1
      %p89 = scmp.eq.s32.totalorder %s30, 1
      %p90 = scmp.ne.s32.totalorder %s85, %s87
      %p91 = scmp.eq.s32.totalorder %s30, 0
      %p92 = por %p90, %p91
      %p93 = scmp.ne.s32.totalorder %s85, %s87
      %p94 = scmp.eq.s32.totalorder %s35, 1
      %p95 = por %p93, %p94
      %p96 = scmp.ne.s32.totalorder %s87, %s88
      %p97 = scmp.eq.s32.totalorder %s35, 0
      %p98 = por %p96, %p97
      %p99 = scmp.ne.s32.totalorder %s87, %s88
      %p100 = scmp.eq.s32.totalorder %s36, 1
      %p101 = por %p99, %p100
      %p103 = scmp.ne.s32.totalorder %s88, %s102
      %p104 = scmp.eq.s32.totalorder %s36, 0
      %p105 = por %p103, %p104
      %s107 = sadd.s32 %s106, 1
      %p110 = scmp.eq.s32.totalorder %s30, 1
      %p111 = scmp.ne.s32.totalorder %s106, %s108
      %p112 = scmp.eq.s32.totalorder %s30, 0
      %p113 = por %p111, %p112
      %p114 = scmp.ne.s32.totalorder %s106, %s108
      %p115 = scmp.eq.s32.totalorder %s35, 1
      %p116 = por %p114, %p115
      %p117 = scmp.ne.s32.totalorder %s108, %s109
      %p118 = scmp.eq.s32.totalorder %s35, 0
      %p119 = por %p117, %p118
      %p120 = scmp.ne.s32.totalorder %s108, %s109
      %p121 = scmp.eq.s32.totalorder %s36, 1
      %p122 = por %p120, %p121
      %p124 = scmp.ne.s32.totalorder %s109, %s123
      %p125 = scmp.eq.s32.totalorder %s36, 0
      %p126 = por %p124, %p125
      %s128 = sadd.s32 %s127, 1
      %p131 = scmp.eq.s32.totalorder %s30, 1
      %p132 = scmp.ne.s32.totalorder %s127, %s129
      %p133 = scmp.eq.s32.totalorder %s30, 0
      %p134 = por %p132, %p133
      %p135 = scmp.ne.s32.totalorder %s127, %s129
      %p136 = scmp.eq.s32.totalorder %s35, 1
      %p137 = por %p135, %p136
      %p138 = scmp.ne.s32.totalorder %s129, %s130
      %p139 = scmp.eq.s32.totalorder %s35, 0
      %p140 = por %p138, %p139
      %p141 = scmp.ne.s32.totalorder %s129, %s130
      %p142 = scmp.eq.s32.totalorder %s36, 1
      %p143 = por %p141, %p142
      %p145 = scmp.ne.s32.totalorder %s130, %s144
      %p146 = scmp.eq.s32.totalorder %s36, 0
      %p147 = por %p145, %p146
      %s149 = sadd.s32 %s148, 1
      %p152 = scmp.eq.s32.totalorder %s30, 1
      %p153 = scmp.ne.s32.totalorder %s148, %s150
      %p154 = scmp.eq.s32.totalorder %s30, 0
      %p155 = por %p153, %p154
      %p156 = scmp.ne.s32.totalorder %s148, %s150
      %p157 = scmp.eq.s32.totalorder %s35, 1
      %p158 = por %p156, %p157
      %p159 = scmp.ne.s32.totalorder %s150, %s151
      %p160 = scmp.eq.s32.totalorder %s35, 0
      %p161 = por %p159, %p160
      %p162 = scmp.ne.s32.totalorder %s150, %s151
      %p163 = scmp.eq.s32.totalorder %s36, 1
      %p164 = por %p162, %p163
      %p166 = scmp.ne.s32.totalorder %s151, %s165
      %p167 = scmp.eq.s32.totalorder %s36, 0
      %p168 = por %p166, %p167
      %s170 = sadd.s32 %s169, 1
      %p173 = scmp.eq.s32.totalorder %s30, 1
      %p174 = scmp.ne.s32.totalorder %s169, %s171
      %p175 = scmp.eq.s32.totalorder %s30, 0
      %p176 = por %p174, %p175
      %p177 = scmp.ne.s32.totalorder %s169, %s171
      %p178 = scmp.eq.s32.totalorder %s35, 1
      %p179 = por %p177, %p178
      %p180 = scmp.ne.s32.totalorder %s171, %s172
      %p181 = scmp.eq.s32.totalorder %s35, 0
      %p182 = por %p180, %p181
      %p183 = scmp.ne.s32.totalorder %s171, %s172
      %p184 = scmp.eq.s32.totalorder %s36, 1
      %p185 = por %p183, %p184
      %p187 = scmp.ne.s32.totalorder %s172, %s186
      %p188 = scmp.eq.s32.totalorder %s36, 0
      %p189 = por %p187, %p188
      %s191 = sadd.s32 %s190, 1
      %p194 = scmp.eq.s32.totalorder %s30, 1
      %p195 = scmp.ne.s32.totalorder %s190, %s192
      %p196 = scmp.eq.s32.totalorder %s30, 0
      %p197 = por %p195, %p196
      %p198 = scmp.ne.s32.totalorder %s190, %s192
      %p199 = scmp.eq.s32.totalorder %s35, 1
      %p200 = por %p198, %p199
      %p201 = scmp.ne.s32.totalorder %s192, %s193
      %p202 = scmp.eq.s32.totalorder %s35, 0
      %p203 = por %p201, %p202
      %p204 = scmp.ne.s32.totalorder %s192, %s193
      %p205 = scmp.eq.s32.totalorder %s36, 1
      %p206 = por %p204, %p205
      %p208 = scmp.ne.s32.totalorder %s193, %s207
      %p209 = scmp.eq.s32.totalorder %s36, 0
      %p210 = por %p208, %p209
      %s212 = sadd.s32 %s211, 1
      %p215 = scmp.eq.s32.totalorder %s30, 1
      %p216 = scmp.ne.s32.totalorder %s211, %s213
      %p217 = scmp.eq.s32.totalorder %s30, 0
      %p218 = por %p216, %p217
      %p219 = scmp.ne.s32.totalorder %s211, %s213
      %p220 = scmp.eq.s32.totalorder %s35, 1
      %p221 = por %p219, %p220
      %p222 = scmp.ne.s32.totalorder %s213, %s214
      %p223 = scmp.eq.s32.totalorder %s35, 0
      %p224 = por %p222, %p223
      %p225 = scmp.ne.s32.totalorder %s213, %s214
      %p226 = scmp.eq.s32.totalorder %s36, 1
      %p227 = por %p225, %p226
      %p229 = scmp.ne.s32.totalorder %s214, %s228
      %p230 = scmp.eq.s32.totalorder %s36, 0
      %p231 = por %p229, %p230
      %s233 = sadd.s32 %s232, 1
      %p236 = scmp.eq.s32.totalorder %s30, 1
      %p237 = scmp.ne.s32.totalorder %s232, %s234
      %p238 = scmp.eq.s32.totalorder %s30, 0
      %p239 = por %p237, %p238
      %p240 = scmp.ne.s32.totalorder %s232, %s234
      %p241 = scmp.eq.s32.totalorder %s35, 1
      %p242 = por %p240, %p241
      %p243 = scmp.ne.s32.totalorder %s234, %s235
      %p244 = scmp.eq.s32.totalorder %s35, 0
      %p245 = por %p243, %p244
      %p246 = scmp.ne.s32.totalorder %s234, %s235
      %p247 = scmp.eq.s32.totalorder %s36, 1
      %p248 = por %p246, %p247
      %p250 = scmp.ne.s32.totalorder %s235, %s249
      %p251 = scmp.eq.s32.totalorder %s36, 0
      %p252 = por %p250, %p251
      %s254 = sadd.s32 %s253, 1
      %p257 = scmp.eq.s32.totalorder %s30, 1
      %p258 = scmp.ne.s32.totalorder %s253, %s255
      %p259 = scmp.eq.s32.totalorder %s30, 0
      %p260 = por %p258, %p259
      %p261 = scmp.ne.s32.totalorder %s253, %s255
      %p262 = scmp.eq.s32.totalorder %s35, 1
      %p263 = por %p261, %p262
      %p264 = scmp.ne.s32.totalorder %s255, %s256
      %p265 = scmp.eq.s32.totalorder %s35, 0
      %p266 = por %p264, %p265
      %p267 = scmp.ne.s32.totalorder %s255, %s256
      %p268 = scmp.eq.s32.totalorder %s36, 1
      %p269 = por %p267, %p268
      %p271 = scmp.ne.s32.totalorder %s256, %s270
      %p272 = scmp.eq.s32.totalorder %s36, 0
      %p273 = por %p271, %p272
      %s275 = sadd.s32 %s274, 1
      %p278 = scmp.eq.s32.totalorder %s30, 1
      %p279 = scmp.ne.s32.totalorder %s274, %s276
      %p280 = scmp.eq.s32.totalorder %s30, 0
      %p281 = por %p279, %p280
      %p282 = scmp.ne.s32.totalorder %s274, %s276
      %p283 = scmp.eq.s32.totalorder %s35, 1
      %p284 = por %p282, %p283
      %p285 = scmp.ne.s32.totalorder %s276, %s277
      %p286 = scmp.eq.s32.totalorder %s35, 0
      %p287 = por %p285, %p286
      %p288 = scmp.ne.s32.totalorder %s276, %s277
      %p289 = scmp.eq.s32.totalorder %s36, 1
      %p290 = por %p288, %p289
      %p292 = scmp.ne.s32.totalorder %s277, %s291
      %p293 = scmp.eq.s32.totalorder %s36, 0
      %p294 = por %p292, %p293
      %s296 = sadd.s32 %s295, 1
      %p299 = scmp.eq.s32.totalorder %s30, 1
      %p300 = scmp.ne.s32.totalorder %s295, %s297
      %p301 = scmp.eq.s32.totalorder %s30, 0
      %p302 = por %p300, %p301
      %p303 = scmp.ne.s32.totalorder %s295, %s297
      %p304 = scmp.eq.s32.totalorder %s35, 1
      %p305 = por %p303, %p304
      %p306 = scmp.ne.s32.totalorder %s297, %s298
      %p307 = scmp.eq.s32.totalorder %s35, 0
      %p308 = por %p306, %p307
      %p309 = scmp.ne.s32.totalorder %s297, %s298
      %p310 = scmp.eq.s32.totalorder %s36, 1
      %p311 = por %p309, %p310
      %p313 = scmp.ne.s32.totalorder %s298, %s312
      %p314 = scmp.eq.s32.totalorder %s36, 0
      %p315 = por %p313, %p314
      %s317 = sadd.s32 %s316, 1
      %p320 = scmp.eq.s32.totalorder %s30, 1
      %p321 = scmp.ne.s32.totalorder %s316, %s318
      %p322 = scmp.eq.s32.totalorder %s30, 0
      %p323 = por %p321, %p322
      %p324 = scmp.ne.s32.totalorder %s316, %s318
      %p325 = scmp.eq.s32.totalorder %s35, 1
      %p326 = por %p324, %p325
      %p327 = scmp.ne.s32.totalorder %s318, %s319
      %p328 = scmp.eq.s32.totalorder %s35, 0
      %p329 = por %p327, %p328
      %p330 = scmp.ne.s32.totalorder %s318, %s319
      %p331 = scmp.eq.s32.totalorder %s36, 1
      %p332 = por %p330, %p331
      %p334 = scmp.ne.s32.totalorder %s319, %s333
      %p335 = scmp.eq.s32.totalorder %s36, 0
      %p336 = por %p334, %p335
      %s337 = ssub.s32 %s30, %s37
      %p338 = scmp.eq.s32.totalorder %s337, 0
      %s340 = sadd.s32 %s339, 1
      %s341 = scalar_select %p338, %s339, %s340
      %p344 = pneg %p338
      %p345 = scmp.eq.s32.totalorder %s30, 1
      %p346 = por %p344, %p345
      %p347 = scmp.ne.s32.totalorder %s339, %s342
      %p348 = scmp.eq.s32.totalorder %s30, 0
      %p349 = por %p347, %p348
      %p350 = scmp.ne.s32.totalorder %s339, %s342
      %p351 = scmp.eq.s32.totalorder %s35, 1
      %p352 = por %p350, %p351
      %p353 = scmp.ne.s32.totalorder %s342, %s343
      %p354 = scmp.eq.s32.totalorder %s35, 0
      %p355 = por %p353, %p354
      %p356 = scmp.ne.s32.totalorder %s342, %s343
      %p357 = scmp.eq.s32.totalorder %s36, 1
      %p358 = por %p356, %p357
      %p360 = scmp.ne.s32.totalorder %s343, %s359
      %p361 = scmp.eq.s32.totalorder %s36, 0
      %p362 = por %p360, %p361
      %p363 = scmp.le.s32.totalorder 1, %s30
      %p364 = scmp.lt.s32.totalorder %s30, 3
      %p365 = pnand %p363, %p364
      %p366 = pneg %p365
      // Predicated region
      $region9: #{tpu_custom_call.1} parent=5 // pred_check
        _
      $region10: #{tpu_custom_call.1} parent=5 // pred_check_branch
        %368 = sbr.rel (%p365) target = $region12
      $region11: #{tpu_custom_call.1} parent=5 // pred_region
        %s369 = ssub.s32 %s30, 1
        // Predicated region
        $region13: #{tpu_custom_call.1} parent=11 // pred_check
          %p370 = pneg %p77
        $region14: #{tpu_custom_call.1} parent=11 // pred_check_branch
          %372 = sbr.rel (%p370) target = $region16
        $region15: #{tpu_custom_call.1} parent=11 // pred_region
          %374 = vsyncadd [#allocation6], 0
          %s376 = sshll.u32 %s1, 4
          %s377 = int_to_ptr.hbm [resolvable:$true] %s376
          %s378 = sshll.u32 [#allocation5], 4
          %s379 = int_to_ptr.vmem [resolvable:$true] %s378
          %381 = dma.hbm_to_vmem [thread:$0]  %s377, 128, %s379, [#allocation6]
        $region16: #{tpu_custom_call.1} parent=11 // pred_fallthru
          _
        // Predicated region
        $region17: #{tpu_custom_call.1} parent=11 // pred_check
          %p382 = pneg %p98
        $region18: #{tpu_custom_call.1} parent=11 // pred_check_branch
          %384 = sbr.rel (%p382) target = $region20
        $region19: #{tpu_custom_call.1} parent=11 // pred_region
          %386 = vsyncadd [#allocation6], 0
          %s387 = sshll.u32 %s2, 4
          %s388 = int_to_ptr.hbm [resolvable:$true] %s387
          %s389 = sshll.u32 [#allocation7], 4
          %s390 = int_to_ptr.vmem [resolvable:$true] %s389
          %395 = dma.hbm_to_vmem [thread:$0]  %s388, 6144, %s390, [#allocation6], 192, 192, 12
        $region20: #{tpu_custom_call.1} parent=11 // pred_fallthru
          _
        // Predicated region
        $region21: #{tpu_custom_call.1} parent=11 // pred_check
          %p396 = pneg %p119
        $region22: #{tpu_custom_call.1} parent=11 // pred_check_branch
          %398 = sbr.rel (%p396) target = $region24
        $region23: #{tpu_custom_call.1} parent=11 // pred_region
          %400 = vsyncadd [#allocation9], 0
          %s401 = sshll.u32 %s3, 4
          %s402 = int_to_ptr.hbm [resolvable:$true] %s401
          %s403 = sshll.u32 [#allocation8], 4
          %s404 = int_to_ptr.vmem [resolvable:$true] %s403
          %409 = dma.hbm_to_vmem [thread:$0]  %s402, 96, %s404, [#allocation9], 48, 48, 3
        $region24: #{tpu_custom_call.1} parent=11 // pred_fallthru
          _
        // Predicated region
        $region25: #{tpu_custom_call.1} parent=11 // pred_check
          %p410 = pneg %p140
        $region26: #{tpu_custom_call.1} parent=11 // pred_check_branch
          %412 = sbr.rel (%p410) target = $region28
        $region27: #{tpu_custom_call.1} parent=11 // pred_region
          %414 = vsyncadd [#allocation9], 0
          %s415 = sshll.u32 %s4, 4
          %s416 = int_to_ptr.hbm [resolvable:$true] %s415
          %s417 = sshll.u32 [#allocation10], 4
          %s418 = int_to_ptr.vmem [resolvable:$true] %s417
          %423 = dma.hbm_to_vmem [thread:$0]  %s416, 512, %s418, [#allocation9], 64, 64, 4
        $region28: #{tpu_custom_call.1} parent=11 // pred_fallthru
          _
        // Predicated region
        $region29: #{tpu_custom_call.1} parent=11 // pred_check
          %p424 = pneg %p161
        $region30: #{tpu_custom_call.1} parent=11 // pred_check_branch
          %426 = sbr.rel (%p424) target = $region32
        $region31: #{tpu_custom_call.1} parent=11 // pred_region
          _
        $region32: #{tpu_custom_call.1} parent=11 // pred_fallthru
          _
        // Predicated region
        $region33: #{tpu_custom_call.1} parent=11 // pred_check
          %p427 = pneg %p182
        $region34: #{tpu_custom_call.1} parent=11 // pred_check_branch
          %429 = sbr.rel (%p427) target = $region36
        $region35: #{tpu_custom_call.1} parent=11 // pred_region
          %431 = vsyncadd [#allocation12], 0
          %s432 = sshll.u32 %s6, 4
          %s433 = int_to_ptr.hbm [resolvable:$true] %s432
          %s434 = sshll.u32 [#allocation11], 4
          %s435 = int_to_ptr.vmem [resolvable:$true] %s434
          %440 = dma.hbm_to_vmem [thread:$0]  %s433, 2048, %s435, [#allocation12], 64, 64, 4
        $region36: #{tpu_custom_call.1} parent=11 // pred_fallthru
          _
        // Predicated region
        $region37: #{tpu_custom_call.1} parent=11 // pred_check
          %p441 = pneg %p203
        $region38: #{tpu_custom_call.1} parent=11 // pred_check_branch
          %443 = sbr.rel (%p441) target = $region40
        $region39: #{tpu_custom_call.1} parent=11 // pred_region
          _
        $region40: #{tpu_custom_call.1} parent=11 // pred_fallthru
          _
        // Predicated region
        $region41: #{tpu_custom_call.1} parent=11 // pred_check
          %p444 = pneg %p224
        $region42: #{tpu_custom_call.1} parent=11 // pred_check_branch
          %446 = sbr.rel (%p444) target = $region44
        $region43: #{tpu_custom_call.1} parent=11 // pred_region
          %448 = vsyncadd [#allocation12], 0
          %s449 = sshll.u32 %s8, 4
          %s450 = int_to_ptr.hbm [resolvable:$true] %s449
          %s451 = sshll.u32 [#allocation13], 4
          %s452 = int_to_ptr.vmem [resolvable:$true] %s451
          %457 = dma.hbm_to_vmem [thread:$0]  %s450, 2048, %s452, [#allocation12], 64, 64, 4
        $region44: #{tpu_custom_call.1} parent=11 // pred_fallthru
          _
        // Predicated region
        $region45: #{tpu_custom_call.1} parent=11 // pred_check
          %p458 = pneg %p245
        $region46: #{tpu_custom_call.1} parent=11 // pred_check_branch
          %460 = sbr.rel (%p458) target = $region48
        $region47: #{tpu_custom_call.1} parent=11 // pred_region
          _
        $region48: #{tpu_custom_call.1} parent=11 // pred_fallthru
          _
        // Predicated region
        $region49: #{tpu_custom_call.1} parent=11 // pred_check
          %p461 = pneg %p266
        $region50: #{tpu_custom_call.1} parent=11 // pred_check_branch
          %463 = sbr.rel (%p461) target = $region52
        $region51: #{tpu_custom_call.1} parent=11 // pred_region
          _
        $region52: #{tpu_custom_call.1} parent=11 // pred_fallthru
          _
        // Predicated region
        $region53: #{tpu_custom_call.1} parent=11 // pred_check
          %p464 = pneg %p287
        $region54: #{tpu_custom_call.1} parent=11 // pred_check_branch
          %466 = sbr.rel (%p464) target = $region56
        $region55: #{tpu_custom_call.1} parent=11 // pred_region
          _
        $region56: #{tpu_custom_call.1} parent=11 // pred_fallthru
          _
        // Predicated region
        $region57: #{tpu_custom_call.1} parent=11 // pred_check
          %p467 = pneg %p308
        $region58: #{tpu_custom_call.1} parent=11 // pred_check_branch
          %469 = sbr.rel (%p467) target = $region60
        $region59: #{tpu_custom_call.1} parent=11 // pred_region
          %471 = vsyncadd [#allocation15], 0
          %s472 = sshll.u32 %s12, 4
          %s473 = int_to_ptr.hbm [resolvable:$true] %s472
          %s474 = sshll.u32 [#allocation14], 4
          %s475 = int_to_ptr.vmem [resolvable:$true] %s474
          %480 = dma.hbm_to_vmem [thread:$0]  %s473, 32, %s475, [#allocation15], 16, 16, 1
        $region60: #{tpu_custom_call.1} parent=11 // pred_fallthru
          _
        // Predicated region
        $region61: #{tpu_custom_call.1} parent=11 // pred_check
          %p481 = pneg %p329
        $region62: #{tpu_custom_call.1} parent=11 // pred_check_branch
          %483 = sbr.rel (%p481) target = $region64
        $region63: #{tpu_custom_call.1} parent=11 // pred_region
          _
        $region64: #{tpu_custom_call.1} parent=11 // pred_fallthru
          _
      $region12: #{tpu_custom_call.1} parent=5 // pred_fallthru
        _
      %p484 = scmp.lt.s32.totalorder %s30, 2
      // Predicated region
      $region65: #{tpu_custom_call.1} parent=5 // pred_check
        %p485 = pneg %p484
      $region66: #{tpu_custom_call.1} parent=5 // pred_check_branch
        %487 = sbr.rel (%p485) target = $region68
      $region67: #{tpu_custom_call.1} parent=5 // pred_region
        // Predicated region
        $region69: #{tpu_custom_call.1} parent=67 // pred_check
          %p488 = pneg %p50
        $region70: #{tpu_custom_call.1} parent=67 // pred_check_branch
          %490 = sbr.rel (%p488) target = $region72
        $region71: #{tpu_custom_call.1} parent=67 // pred_region
          %s491 = sand.u32 %s40, 1
          %s492 = scalar_lea.sflag [#allocation3], %s491
          %s493 = sand.u32 %s40, 1
          %s494 = smul.addr %s493, 8
          %s495 = scalar_lea.vmem [#allocation2], %s494
          %497 = vsyncadd %s492, 0
          %s498 = smul.addr %s30, 8
          %s499 = scalar_lea.hbm %s0, %s498
          %s501 = sshll.u32 %s499, 4
          %s502 = int_to_ptr.hbm [resolvable:$true] %s501
          %s503 = sshll.u32 %s495, 4
          %s504 = int_to_ptr.vmem [resolvable:$true] %s503
          %506 = dma.hbm_to_vmem [thread:$0]  %s502, 128, %s504, %s492
        $region72: #{tpu_custom_call.1} parent=67 // pred_fallthru
          _
      $region68: #{tpu_custom_call.1} parent=5 // pred_fallthru
        _
      %p507 = scmp.le.s32.totalorder 1, %s30
      %p508 = scmp.lt.s32.totalorder %s30, 3
      %p509 = pnand %p507, %p508
      %p510 = pneg %p509
      // Predicated region
      $region73: #{tpu_custom_call.1} parent=5 // pred_check
        _
      $region74: #{tpu_custom_call.1} parent=5 // pred_check_branch
        %512 = sbr.rel (%p509) target = $region76
      $region75: #{tpu_custom_call.1} parent=5 // pred_region
        %s513 = ssub.s32 %s30, 1
        %s514 = sand.u32 %s43, 1
        %s515 = scalar_lea.sflag [#allocation3], %s514
        %s516 = sand.u32 %s43, 1
        %s517 = smul.addr %s516, 8
        %s518 = scalar_lea.vmem [#allocation2], %s517
        // Predicated region
        $region77: #{tpu_custom_call.1} parent=75 // pred_check
          %p519 = pneg %p56
        $region78: #{tpu_custom_call.1} parent=75 // pred_check_branch
          %521 = sbr.rel (%p519) target = $region80
        $region79: #{tpu_custom_call.1} parent=75 // pred_region
          %523 = dma.done %s515, 128
        $region80: #{tpu_custom_call.1} parent=75 // pred_fallthru
          _
        // Predicated region
        $region81: #{tpu_custom_call.1} parent=75 // pred_check
          %p524 = pneg %p77
        $region82: #{tpu_custom_call.1} parent=75 // pred_check_branch
          %526 = sbr.rel (%p524) target = $region84
        $region83: #{tpu_custom_call.1} parent=75 // pred_region
          %528 = dma.done [#allocation6], 128
        $region84: #{tpu_custom_call.1} parent=75 // pred_fallthru
          _
        // Predicated region
        $region85: #{tpu_custom_call.1} parent=75 // pred_check
          %p529 = pneg %p98
        $region86: #{tpu_custom_call.1} parent=75 // pred_check_branch
          %531 = sbr.rel (%p529) target = $region88
        $region87: #{tpu_custom_call.1} parent=75 // pred_region
          %533 = dma.done [#allocation6], 6144
        $region88: #{tpu_custom_call.1} parent=75 // pred_fallthru
          _
        // Predicated region
        $region89: #{tpu_custom_call.1} parent=75 // pred_check
          %p534 = pneg %p119
        $region90: #{tpu_custom_call.1} parent=75 // pred_check_branch
          %536 = sbr.rel (%p534) target = $region92
        $region91: #{tpu_custom_call.1} parent=75 // pred_region
          %538 = dma.done [#allocation9], 96
        $region92: #{tpu_custom_call.1} parent=75 // pred_fallthru
          _
        // Predicated region
        $region93: #{tpu_custom_call.1} parent=75 // pred_check
          %p539 = pneg %p140
        $region94: #{tpu_custom_call.1} parent=75 // pred_check_branch
          %541 = sbr.rel (%p539) target = $region96
        $region95: #{tpu_custom_call.1} parent=75 // pred_region
          %543 = dma.done [#allocation9], 512
        $region96: #{tpu_custom_call.1} parent=75 // pred_fallthru
          _
        // Predicated region
        $region97: #{tpu_custom_call.1} parent=75 // pred_check
          %p544 = pneg %p182
        $region98: #{tpu_custom_call.1} parent=75 // pred_check_branch
          %546 = sbr.rel (%p544) target = $region100
        $region99: #{tpu_custom_call.1} parent=75 // pred_region
          %548 = dma.done [#allocation12], 2048
        $region100: #{tpu_custom_call.1} parent=75 // pred_fallthru
          _
        // Predicated region
        $region101: #{tpu_custom_call.1} parent=75 // pred_check
          %p549 = pneg %p224
        $region102: #{tpu_custom_call.1} parent=75 // pred_check_branch
          %551 = sbr.rel (%p549) target = $region104
        $region103: #{tpu_custom_call.1} parent=75 // pred_region
          %553 = dma.done [#allocation12], 2048
        $region104: #{tpu_custom_call.1} parent=75 // pred_fallthru
          _
        // Predicated region
        $region105: #{tpu_custom_call.1} parent=75 // pred_check
          %p554 = pneg %p308
        $region106: #{tpu_custom_call.1} parent=75 // pred_check_branch
          %556 = sbr.rel (%p554) target = $region108
        $region107: #{tpu_custom_call.1} parent=75 // pred_region
          %558 = dma.done [#allocation15], 32
        $region108: #{tpu_custom_call.1} parent=75 // pred_fallthru
          _
        %s559 = sand.u32 %s43, 1
        %s560 = scalar_lea.sflag [#allocation3], %s559
        %s561 = sand.u32 %s43, 1
        %s562 = smul.addr %s561, 8
        %s563 = scalar_lea.vmem [#allocation2], %s562
        %p564 = pneg %p56
        %p565 = pneg %p53
        %p566 = pneg %p77
        %p567 = pneg %p74
        %p568 = pneg %p98
        %p569 = pneg %p95
        %p570 = pneg %p119
        %p571 = pneg %p116
        %p572 = pneg %p140
        %p573 = pneg %p137
        %p574 = pneg %p161
        %p575 = pneg %p158
        %p576 = pneg %p182
        %p577 = pneg %p179
        %p578 = pneg %p203
        %p579 = pneg %p200
        %p580 = pneg %p224
        %p581 = pneg %p221
        %p582 = pneg %p245
        %p583 = pneg %p242
        %p584 = pneg %p266
        %p585 = pneg %p263
        %p586 = pneg %p287
        %p587 = pneg %p284
        %p588 = pneg %p308
        %p589 = pneg %p305
        %p590 = pneg %p329
        %p591 = pneg %p326
        %p592 = pneg %p355
        %p593 = pneg %p352
        %s594 = sand.u32 %s342, 1
        %s595 = scalar_lea.sflag [#allocation4], %s594
        %s596 = sand.u32 %s342, 1
        %s597 = smul.addr %s596, 4
        %s598 = scalar_lea.vmem [#allocation16], %s597
        %v600 = vld [vmem:[%s518] sm:$0xff]
        %v601 = vld [vmem:[#allocation5] sm:$0xff]
        %v602 = vadd.f32 %v600, %v601
        %vm603 = vcmask 261120
        %v604 = vsel %vm603, %v602, 0.0
        %v605 = vpack.c.bf16 %v604, %v604
        %v606 = vld [vmem:[#allocation7] sm:$0xff]
        %v607 = vld [vmem:[#allocation7 + $0x8] sm:$0xf]
        %v608 = vld [vmem:[#allocation7 + $0xc] sm:$0xff]
        %v609 = vld [vmem:[#allocation7 + $0x14] sm:$0xf]
        %v610 = vld [vmem:[#allocation7 + $0x18] sm:$0xff]
        %v611 = vld [vmem:[#allocation7 + $0x20] sm:$0xf]
        %v612 = vld [vmem:[#allocation7 + $0x24] sm:$0xff]
        %v613 = vld [vmem:[#allocation7 + $0x2c] sm:$0xf]
        %v614 = vld [vmem:[#allocation7 + $0x30] sm:$0xff]
        %v615 = vld [vmem:[#allocation7 + $0x38] sm:$0xf]
        %v616 = vld [vmem:[#allocation7 + $0x3c] sm:$0xff]
        %v617 = vld [vmem:[#allocation7 + $0x44] sm:$0xf]
        %v618 = vld [vmem:[#allocation7 + $0x48] sm:$0xff]
        %v619 = vld [vmem:[#allocation7 + $0x50] sm:$0xf]
        %v620 = vld [vmem:[#allocation7 + $0x54] sm:$0xff]
        %v621 = vld [vmem:[#allocation7 + $0x5c] sm:$0xf]
        %v622 = vld [vmem:[#allocation7 + $0x60] sm:$0xff]
        %v623 = vld [vmem:[#allocation7 + $0x68] sm:$0xf]
        %v624 = vld [vmem:[#allocation7 + $0x6c] sm:$0xff]
        %v625 = vld [vmem:[#allocation7 + $0x74] sm:$0xf]
        %v626 = vld [vmem:[#allocation7 + $0x78] sm:$0xff]
        %v627 = vld [vmem:[#allocation7 + $0x80] sm:$0xf]
        %v628 = vld [vmem:[#allocation7 + $0x84] sm:$0xff]
        %v629 = vld [vmem:[#allocation7 + $0x8c] sm:$0xf]
        %v630 = vld [vmem:[#allocation7 + $0x90] sm:$0xff]
        %v631 = vld [vmem:[#allocation7 + $0x98] sm:$0xf]
        %v632 = vld [vmem:[#allocation7 + $0x9c] sm:$0xff]
        %v633 = vld [vmem:[#allocation7 + $0xa4] sm:$0xf]
        %v634 = vld [vmem:[#allocation7 + $0xa8] sm:$0xff]
        %v635 = vld [vmem:[#allocation7 + $0xb0] sm:$0xf]
        %v636 = vld [vmem:[#allocation7 + $0xb4] sm:$0xff]
        %v637 = vld [vmem:[#allocation7 + $0xbc] sm:$0xf]
        %v638 = vld [vmem:[#allocation8] sm:$0x7]
        %v640 = vperm.slane %v638, 0
        %v641 = vperm.slane %v638, 1
        %v642 = vperm.slane %v638, 2
        %v678 = vunpack.c.l.b16 %v606
        %v679 = vunpack.c.h.b16 %v606
        %v680 = vunpack.c.l.b16 %v607
        %v681 = vunpack.c.l.b16 %v608
        %v682 = vunpack.c.h.b16 %v608
        %v683 = vunpack.c.l.b16 %v609
        %v684 = vunpack.c.l.b16 %v610
        %v685 = vunpack.c.h.b16 %v610
        %v686 = vunpack.c.l.b16 %v611
        %v687 = vunpack.c.l.b16 %v612
        %v688 = vunpack.c.h.b16 %v612
        %v689 = vunpack.c.l.b16 %v613
        %v690 = vunpack.c.l.b16 %v614
        %v691 = vunpack.c.h.b16 %v614
        %v692 = vunpack.c.l.b16 %v615
        %v693 = vunpack.c.l.b16 %v616
        %v694 = vunpack.c.h.b16 %v616
        %v695 = vunpack.c.l.b16 %v617
        %v696 = vunpack.c.l.b16 %v618
        %v697 = vunpack.c.h.b16 %v618
        %v698 = vunpack.c.l.b16 %v619
        %v699 = vunpack.c.l.b16 %v620
        %v700 = vunpack.c.h.b16 %v620
        %v701 = vunpack.c.l.b16 %v621
        %v702 = vunpack.c.l.b16 %v622
        %v703 = vunpack.c.h.b16 %v622
        %v704 = vunpack.c.l.b16 %v623
        %v705 = vunpack.c.l.b16 %v624
        %v706 = vunpack.c.h.b16 %v624
        %v707 = vunpack.c.l.b16 %v625
        %v708 = vunpack.c.l.b16 %v626
        %v709 = vunpack.c.h.b16 %v626
        %v710 = vunpack.c.l.b16 %v627
        %v711 = vunpack.c.l.b16 %v628
        %v712 = vunpack.c.h.b16 %v628
        %v713 = vunpack.c.l.b16 %v629
        %v714 = vunpack.c.l.b16 %v630
        %v715 = vunpack.c.h.b16 %v630
        %v716 = vunpack.c.l.b16 %v631
        %v717 = vunpack.c.l.b16 %v632
        %v718 = vunpack.c.h.b16 %v632
        %v719 = vunpack.c.l.b16 %v633
        %v720 = vunpack.c.l.b16 %v634
        %v721 = vunpack.c.h.b16 %v634
        %v722 = vunpack.c.l.b16 %v635
        %v723 = vunpack.c.l.b16 %v636
        %v724 = vunpack.c.h.b16 %v636
        %v725 = vunpack.c.l.b16 %v637
        %v726 = vpack.c.b16 %v681, %v678
        %v727 = vpack.c.b16 %v682, %v679
        %v728 = vpack.c.b16 %v683, %v680
        %v729 = vpack.c.b16 %v687, %v684
        %v730 = vpack.c.b16 %v688, %v685
        %v731 = vpack.c.b16 %v689, %v686
        %v732 = vpack.c.b16 %v693, %v690
        %v733 = vpack.c.b16 %v694, %v691
        %v734 = vpack.c.b16 %v695, %v692
        %v735 = vpack.c.b16 %v699, %v696
        %v736 = vpack.c.b16 %v700, %v697
        %v737 = vpack.c.b16 %v701, %v698
        %v738 = vpack.c.b16 %v705, %v702
        %v739 = vpack.c.b16 %v706, %v703
        %v740 = vpack.c.b16 %v707, %v704
        %v741 = vpack.c.b16 %v711, %v708
        %v742 = vpack.c.b16 %v712, %v709
        %v743 = vpack.c.b16 %v713, %v710
        %v744 = vpack.c.b16 %v717, %v714
        %v745 = vpack.c.b16 %v718, %v715
        %v746 = vpack.c.b16 %v719, %v716
        %v747 = vpack.c.b16 %v723, %v720
        %v748 = vpack.c.b16 %v724, %v721
        %v749 = vpack.c.b16 %v725, %v722
        %774 = vmatpush.bf16.msra.mxu0 %v747
        %775 = vmatpush.bf16.msra.mxu0 %v744
        %776 = vmatpush.bf16.msra.mxu0 %v741
        %777 = vmatpush.bf16.msra.mxu0 %v738
        %778 = vmatpush.bf16.msra.mxu0 %v735
        %779 = vmatpush.bf16.msra.mxu0 %v732
        %780 = vmatpush.bf16.msra.mxu0 %v729
        %781 = vmatpush.bf16.msra.mxu0 %v726
        %782 = vmatmul.bf16.gmra.mxu0 %v605
        %v783 = vpop.f32.mrf.mxu0
        %v784 = vadd.f32 %v640, %v783
        %v785 = vpop.f32.mrf.mxu0
        %786 = vdwg.mxu0
        %787 = vmatpush.bf16.msra.mxu0 %v748
        %788 = vmatpush.bf16.msra.mxu0 %v745
        %789 = vmatpush.bf16.msra.mxu0 %v742
        %790 = vmatpush.bf16.msra.mxu0 %v739
        %791 = vmatpush.bf16.msra.mxu0 %v736
        %792 = vmatpush.bf16.msra.mxu0 %v733
        %793 = vmatpush.bf16.msra.mxu0 %v730
        %794 = vmatpush.bf16.msra.mxu0 %v727
        %795 = vmatmul.bf16.gmra.mxu0 %v605
        %v796 = vpop.f32.mrf.mxu0
        %v797 = vadd.f32 %v641, %v796
        %v798 = vpop.f32.mrf.mxu0
        %799 = vdwg.mxu0
        %800 = vmatpush.bf16.msra.mxu0 %v749
        %801 = vmatpush.bf16.msra.mxu0 %v746
        %802 = vmatpush.bf16.msra.mxu0 %v743
        %803 = vmatpush.bf16.msra.mxu0 %v740
        %804 = vmatpush.bf16.msra.mxu0 %v737
        %805 = vmatpush.bf16.msra.mxu0 %v734
        %806 = vmatpush.bf16.msra.mxu0 %v731
        %807 = vmatpush.bf16.msra.mxu0 %v728
        %808 = vmatmul.bf16.gmra.mxu0 %v605
        %v809 = vpop.f32.mrf.mxu0
        %v810 = vadd.f32 %v642, %v809
        %v811 = vpop.f32.mrf.mxu0
        %812 = vdwg.mxu0
        %v813 = vpack.c.bf16 %v797, %v784
        %v814 = vpack.c.bf16 %v810, %v810
        %v816 = vrot.slane %v813, 4
        %vm817 = vcmask 64512
        %v819 = vsel %vm817, %v813, 0
        %v822 = vsel %vm817, %v816, 0
        %824 = vmatpush.bf16.xpose.msra.mxu0 0
        %825 = vmatpush.bf16.xpose.msra.mxu0 0
        %826 = vmatpush.bf16.xpose.msra.mxu0 0
        %827 = vmatpush.bf16.xpose.msra.mxu0 0
        %828 = vmatpush.bf16.xpose.msra.mxu0 0
        %829 = vmatpush.bf16.xpose.msra.mxu0 0
        %830 = vmatpush.bf16.xpose.msra.mxu0 0
        %831 = vmatpush.bf16.xpose.msra.mxu0 %v822
        %832 = vmatmul.bf16.gmra.mxu0 %v819
        %v833 = vpop.f32.mrf.mxu0
        %v834 = vadd.f32 0.0, %v833
        %v835 = vpop.f32.mrf.mxu0
        %836 = vdwg.mxu0
        %v837 = vsel %vm817, %v834, -inf
        %838 = vmax.xlane.f32.xlu0 %v837
        %v839 = vpop.xlane.xlu0 %838
        %v840 = vsub.f32 %v834, %v839
        %v841 = vmul.f32 %v840, 1.442695
        %v842 = vpow.pop %v841
        %v843 = vsel %vm817, %v842, 0.0
        %844 = vadd.xlane.f32.xlu0 %v843
        %v845 = vpop.xlane.xlu0 %844
        %v846 = vrcp.pop %v845
        %v847 = vmul.f32 %v842, %v846
        %v848 = vpack.c.bf16 %v847, %v847
        %v850 = vsel %vm817, %v848, 0
        %vm852 = vcmask 1043456
        %v854 = vsel %vm852, %v814, 0
        %856 = vmatpush.bf16.msra.mxu0 0
        %857 = vmatpush.bf16.msra.mxu0 0
        %858 = vmatpush.bf16.msra.mxu0 0
        %859 = vmatpush.bf16.msra.mxu0 0
        %860 = vmatpush.bf16.msra.mxu0 0
        %861 = vmatpush.bf16.msra.mxu0 0
        %862 = vmatpush.bf16.msra.mxu0 0
        %863 = vmatpush.bf16.msra.mxu0 %v854
        %864 = vmatmul.bf16.gmra.mxu0 %v850
        %v865 = vpop.f32.mrf.mxu0
        %v866 = vadd.f32 0.0, %v865
        %v867 = vpop.f32.mrf.mxu0
        %868 = vdwg.mxu0
        %v869 = vunpack.c.l.b16 %v813
        %v870 = vpack.c.b16 %v869, %v869
        %871 = vrot.lane.b32.xlu0 %v870, 120
        %v872 = vpop.permute.xlu0 %871
        %v873 = vunpack.c.l.b16 %v816
        %v874 = vpack.c.b16 %v873, %v873
        %875 = vrot.lane.b32.xlu0 %v874, 120
        %v876 = vpop.permute.xlu0 %875
        %v878 = vsel %vm817, %v872, 0
        %v881 = vsel %vm817, %v876, 0
        %883 = vmatpush.bf16.xpose.msra.mxu0 0
        %884 = vmatpush.bf16.xpose.msra.mxu0 0
        %885 = vmatpush.bf16.xpose.msra.mxu0 0
        %886 = vmatpush.bf16.xpose.msra.mxu0 0
        %887 = vmatpush.bf16.xpose.msra.mxu0 0
        %888 = vmatpush.bf16.xpose.msra.mxu0 0
        %889 = vmatpush.bf16.xpose.msra.mxu0 0
        %890 = vmatpush.bf16.xpose.msra.mxu0 %v881
        %891 = vmatmul.bf16.gmra.mxu0 %v878
        %v892 = vpop.f32.mrf.mxu0
        %v893 = vadd.f32 0.0, %v892
        %v894 = vpop.f32.mrf.mxu0
        %895 = vdwg.mxu0
        %v896 = vsel %vm817, %v893, -inf
        %897 = vmax.xlane.f32.xlu0 %v896
        %v898 = vpop.xlane.xlu0 %897
        %v899 = vsub.f32 %v893, %v898
        %v900 = vmul.f32 %v899, 1.442695
        %v901 = vpow.pop %v900
        %v902 = vsel %vm817, %v901, 0.0
        %903 = vadd.xlane.f32.xlu0 %v902
        %v904 = vpop.xlane.xlu0 %903
        %v905 = vrcp.pop %v904
        %v906 = vmul.f32 %v901, %v905
        %v907 = vpack.c.bf16 %v906, %v906
        %v909 = vunpack.c.l.b16 %v814
        %v910 = vpack.c.b16 %v909, %v909
        %911 = vrot.lane.b32.xlu0 %v910, 120
        %v912 = vpop.permute.xlu0 %911
        %v914 = vsel %vm817, %v907, 0
        %v917 = vsel %vm852, %v912, 0
        %919 = vmatpush.bf16.msra.mxu0 0
        %920 = vmatpush.bf16.msra.mxu0 0
        %921 = vmatpush.bf16.msra.mxu0 0
        %922 = vmatpush.bf16.msra.mxu0 0
        %923 = vmatpush.bf16.msra.mxu0 0
        %924 = vmatpush.bf16.msra.mxu0 0
        %925 = vmatpush.bf16.msra.mxu0 0
        %926 = vmatpush.bf16.msra.mxu0 %v917
        %927 = vmatmul.bf16.gmra.mxu0 %v914
        %v928 = vpop.f32.mrf.mxu0
        %v929 = vadd.f32 0.0, %v928
        %v930 = vpop.f32.mrf.mxu0
        %931 = vdwg.mxu0
        %932 = vrot.lane.b32.xlu0 %v870, 112
        %v933 = vpop.permute.xlu0 %932
        %934 = vrot.lane.b32.xlu0 %v874, 112
        %v935 = vpop.permute.xlu0 %934
        %v937 = vsel %vm817, %v933, 0
        %v940 = vsel %vm817, %v935, 0
        %942 = vmatpush.bf16.xpose.msra.mxu0 0
        %943 = vmatpush.bf16.xpose.msra.mxu0 0
        %944 = vmatpush.bf16.xpose.msra.mxu0 0
        %945 = vmatpush.bf16.xpose.msra.mxu0 0
        %946 = vmatpush.bf16.xpose.msra.mxu0 0
        %947 = vmatpush.bf16.xpose.msra.mxu0 0
        %948 = vmatpush.bf16.xpose.msra.mxu0 0
        %949 = vmatpush.bf16.xpose.msra.mxu0 %v940
        %950 = vmatmul.bf16.gmra.mxu0 %v937
        %v951 = vpop.f32.mrf.mxu0
        %v952 = vadd.f32 0.0, %v951
        %v953 = vpop.f32.mrf.mxu0
        %954 = vdwg.mxu0
        %v955 = vsel %vm817, %v952, -inf
        %956 = vmax.xlane.f32.xlu0 %v955
        %v957 = vpop.xlane.xlu0 %956
        %v958 = vsub.f32 %v952, %v957
        %v959 = vmul.f32 %v958, 1.442695
        %v960 = vpow.pop %v959
        %v961 = vsel %vm817, %v960, 0.0
        %962 = vadd.xlane.f32.xlu0 %v961
        %v963 = vpop.xlane.xlu0 %962
        %v964 = vrcp.pop %v963
        %v965 = vmul.f32 %v960, %v964
        %v966 = vpack.c.bf16 %v965, %v965
        %967 = vrot.lane.b32.xlu0 %v910, 112
        %v968 = vpop.permute.xlu0 %967
        %v970 = vsel %vm817, %v966, 0
        %v973 = vsel %vm852, %v968, 0
        %975 = vmatpush.bf16.msra.mxu0 0
        %976 = vmatpush.bf16.msra.mxu0 0
        %977 = vmatpush.bf16.msra.mxu0 0
        %978 = vmatpush.bf16.msra.mxu0 0
        %979 = vmatpush.bf16.msra.mxu0 0
        %980 = vmatpush.bf16.msra.mxu0 0
        %981 = vmatpush.bf16.msra.mxu0 0
        %982 = vmatpush.bf16.msra.mxu0 %v973
        %983 = vmatmul.bf16.gmra.mxu0 %v970
        %v984 = vpop.f32.mrf.mxu0
        %v985 = vadd.f32 0.0, %v984
        %v986 = vpop.f32.mrf.mxu0
        %987 = vdwg.mxu0
        %988 = vrot.lane.b32.xlu0 %v870, 104
        %v989 = vpop.permute.xlu0 %988
        %990 = vrot.lane.b32.xlu0 %v874, 104
        %v991 = vpop.permute.xlu0 %990
        %v993 = vsel %vm817, %v989, 0
        %v996 = vsel %vm817, %v991, 0
        %998 = vmatpush.bf16.xpose.msra.mxu0 0
        %999 = vmatpush.bf16.xpose.msra.mxu0 0
        %1000 = vmatpush.bf16.xpose.msra.mxu0 0
        %1001 = vmatpush.bf16.xpose.msra.mxu0 0
        %1002 = vmatpush.bf16.xpose.msra.mxu0 0
        %1003 = vmatpush.bf16.xpose.msra.mxu0 0
        %1004 = vmatpush.bf16.xpose.msra.mxu0 0
        %1005 = vmatpush.bf16.xpose.msra.mxu0 %v996
        %1006 = vmatmul.bf16.gmra.mxu0 %v993
        %v1007 = vpop.f32.mrf.mxu0
        %v1008 = vadd.f32 0.0, %v1007
        %v1009 = vpop.f32.mrf.mxu0
        %1010 = vdwg.mxu0
        %v1011 = vsel %vm817, %v1008, -inf
        %1012 = vmax.xlane.f32.xlu0 %v1011
        %v1013 = vpop.xlane.xlu0 %1012
        %v1014 = vsub.f32 %v1008, %v1013
        %v1015 = vmul.f32 %v1014, 1.442695
        %v1016 = vpow.pop %v1015
        %v1017 = vsel %vm817, %v1016, 0.0
        %1018 = vadd.xlane.f32.xlu0 %v1017
        %v1019 = vpop.xlane.xlu0 %1018
        %v1020 = vrcp.pop %v1019
        %v1021 = vmul.f32 %v1016, %v1020
        %v1022 = vpack.c.bf16 %v1021, %v1021
        %1023 = vrot.lane.b32.xlu0 %v910, 104
        %v1024 = vpop.permute.xlu0 %1023
        %v1026 = vsel %vm817, %v1022, 0
        %v1029 = vsel %vm852, %v1024, 0
        %1031 = vmatpush.bf16.msra.mxu0 0
        %1032 = vmatpush.bf16.msra.mxu0 0
        %1033 = vmatpush.bf16.msra.mxu0 0
        %1034 = vmatpush.bf16.msra.mxu0 0
        %1035 = vmatpush.bf16.msra.mxu0 0
        %1036 = vmatpush.bf16.msra.mxu0 0
        %1037 = vmatpush.bf16.msra.mxu0 0
        %1038 = vmatpush.bf16.msra.mxu0 %v1029
        %1039 = vmatmul.bf16.gmra.mxu0 %v1026
        %v1040 = vpop.f32.mrf.mxu0
        %v1041 = vadd.f32 0.0, %v1040
        %v1042 = vpop.f32.mrf.mxu0
        %1043 = vdwg.mxu0
        %1045 = vrot.lane.b32.xlu0 %v929, 8
        %v1046 = vpop.permute.xlu0 %1045
        %1049 = vrot.lane.b32.xlu0 %v985, 16
        %v1050 = vpop.permute.xlu0 %1049
        %1053 = vrot.lane.b32.xlu0 %v1041, 24
        %v1054 = vpop.permute.xlu0 %1053
        %v1056 = vsel %vm817, %v866, %v1046
        %vm1057 = vcmask 130048
        %v1058 = vsel %vm1057, %v1056, %v1050
        %vm1059 = vcmask 195584
        %v1060 = vsel %vm1059, %v1058, %v1054
        %v1061 = vpack.c.bf16 %v1060, %v1060
        %v1062 = vld [vmem:[#allocation10] sm:$0xf]
        %v1063 = vld [vmem:[#allocation10 + $0x4] sm:$0xf]
        %v1064 = vld [vmem:[#allocation10 + $0x8] sm:$0xf]
        %v1065 = vld [vmem:[#allocation10 + $0xc] sm:$0xf]
        %v1066 = vld [vmem:[%s5] sm:$0x1]
        %v1068 = vperm.slane %v1066, 0
        %v1074 = vunpack.c.l.b16 %v1062
        %v1075 = vunpack.c.l.b16 %v1063
        %v1076 = vunpack.c.l.b16 %v1064
        %v1077 = vunpack.c.l.b16 %v1065
        %v1078 = vpack.c.b16 %v1075, %v1074
        %v1079 = vpack.c.b16 %v1077, %v1076
        %v1083 = vsel %vm603, %v1061, 0
        %1085 = vmatpush.bf16.msra.mxu0 0
        %1086 = vmatpush.bf16.msra.mxu0 0
        %1087 = vmatpush.bf16.msra.mxu0 0
        %1088 = vmatpush.bf16.msra.mxu0 0
        %1089 = vmatpush.bf16.msra.mxu0 0
        %1090 = vmatpush.bf16.msra.mxu0 0
        %1091 = vmatpush.bf16.msra.mxu0 %v1079
        %1092 = vmatpush.bf16.msra.mxu0 %v1078
        %1093 = vmatmul.bf16.gmra.mxu0 %v1083
        %v1094 = vpop.f32.mrf.mxu0
        %v1095 = vadd.f32 %v1068, %v1094
        %v1096 = vpop.f32.mrf.mxu0
        %1097 = vdwg.mxu0
        %v1098 = vadd.f32 %v604, %v1095
        %v1099 = vld [vmem:[%s10] sm:$0x1]
        %v1100 = vld [vmem:[%s11] sm:$0x1]
        %1101 = vadd.xlane.f32.xlu0 %v1098
        %v1102 = vpop.xlane.xlu0 %1101
        %v1103 = vmul.f32 %v1102, 0.03125
        %v1104 = vmul.f32 %v1098, %v1098
        %1105 = vadd.xlane.f32.xlu0 %v1104
        %v1106 = vpop.xlane.xlu0 %1105
        %v1107 = vmul.f32 %v1106, 0.03125
        %v1108 = vmul.f32 %v1103, %v1103
        %v1109 = vsub.f32 %v1107, %v1108
        %v1110 = vsub.f32 %v1098, %v1103
        %v1111 = vadd.f32 %v1109, 1e-05
        %v1112 = vrsqrt.pop %v1111
        %v1113 = vmul.f32 %v1112, %v1111
        %v1114 = vmul.f32 %v1113, %v1112
        %v1115 = vmul.f32 0.5, %v1114
        %v1116 = vsub.f32 1.5, %v1115
        %v1117 = vmul.f32 %v1112, %v1116
        %vm1118 = vweird.f32 %v1111
        %vm1119 = vweird.f32 %v1112
        %vm1120 = vmor %vm1118, %vm1119
        %v1121 = vsel %vm1120, %v1112, %v1117
        %v1122 = vmul.f32 %v1110, %v1121
        %v1124 = vperm.slane %v1099, 0
        %v1126 = vmul.f32 %v1122, %v1124
        %v1128 = vperm.slane %v1100, 0
        %v1130 = vadd.f32 %v1126, %v1128
        %v1131 = vpack.c.bf16 %v1130, %v1130
        %v1132 = vld [vmem:[#allocation11] sm:$0xf]
        %v1133 = vld [vmem:[#allocation11 + $0x4] sm:$0xf]
        %v1134 = vld [vmem:[#allocation11 + $0x8] sm:$0xf]
        %v1135 = vld [vmem:[#allocation11 + $0xc] sm:$0xf]
        %v1136 = vld [vmem:[#allocation11 + $0x10] sm:$0xf]
        %v1137 = vld [vmem:[#allocation11 + $0x14] sm:$0xf]
        %v1138 = vld [vmem:[#allocation11 + $0x18] sm:$0xf]
        %v1139 = vld [vmem:[#allocation11 + $0x1c] sm:$0xf]
        %v1140 = vld [vmem:[#allocation11 + $0x20] sm:$0xf]
        %v1141 = vld [vmem:[#allocation11 + $0x24] sm:$0xf]
        %v1142 = vld [vmem:[#allocation11 + $0x28] sm:$0xf]
        %v1143 = vld [vmem:[#allocation11 + $0x2c] sm:$0xf]
        %v1144 = vld [vmem:[#allocation11 + $0x30] sm:$0xf]
        %v1145 = vld [vmem:[#allocation11 + $0x34] sm:$0xf]
        %v1146 = vld [vmem:[#allocation11 + $0x38] sm:$0xf]
        %v1147 = vld [vmem:[#allocation11 + $0x3c] sm:$0xf]
        %v1148 = vld [vmem:[%s7] sm:$0x1]
        %v1150 = vperm.slane %v1148, 0
        %v1168 = vunpack.c.l.b16 %v1132
        %v1169 = vunpack.c.l.b16 %v1133
        %v1170 = vunpack.c.l.b16 %v1134
        %v1171 = vunpack.c.l.b16 %v1135
        %v1172 = vunpack.c.l.b16 %v1136
        %v1173 = vunpack.c.l.b16 %v1137
        %v1174 = vunpack.c.l.b16 %v1138
        %v1175 = vunpack.c.l.b16 %v1139
        %v1176 = vunpack.c.l.b16 %v1140
        %v1177 = vunpack.c.l.b16 %v1141
        %v1178 = vunpack.c.l.b16 %v1142
        %v1179 = vunpack.c.l.b16 %v1143
        %v1180 = vunpack.c.l.b16 %v1144
        %v1181 = vunpack.c.l.b16 %v1145
        %v1182 = vunpack.c.l.b16 %v1146
        %v1183 = vunpack.c.l.b16 %v1147
        %v1184 = vpack.c.b16 %v1169, %v1168
        %v1185 = vpack.c.b16 %v1171, %v1170
        %v1186 = vpack.c.b16 %v1173, %v1172
        %v1187 = vpack.c.b16 %v1175, %v1174
        %v1188 = vpack.c.b16 %v1177, %v1176
        %v1189 = vpack.c.b16 %v1179, %v1178
        %v1190 = vpack.c.b16 %v1181, %v1180
        %v1191 = vpack.c.b16 %v1183, %v1182
        %1200 = vmatpush.bf16.msra.mxu0 %v1191
        %1201 = vmatpush.bf16.msra.mxu0 %v1190
        %1202 = vmatpush.bf16.msra.mxu0 %v1189
        %1203 = vmatpush.bf16.msra.mxu0 %v1188
        %1204 = vmatpush.bf16.msra.mxu0 %v1187
        %1205 = vmatpush.bf16.msra.mxu0 %v1186
        %1206 = vmatpush.bf16.msra.mxu0 %v1185
        %1207 = vmatpush.bf16.msra.mxu0 %v1184
        %1208 = vmatmul.bf16.gmra.mxu0 %v1131
        %v1209 = vpop.f32.mrf.mxu0
        %v1210 = vadd.f32 %v1150, %v1209
        %v1211 = vpop.f32.mrf.mxu0
        %1212 = vdwg.mxu0
        %v1213 = vmax.f32 %v1210, 0.0
        %v1214 = vpack.c.bf16 %v1213, %v1213
        %v1215 = vld [vmem:[#allocation13] sm:$0xf]
        %v1216 = vld [vmem:[#allocation13 + $0x4] sm:$0xf]
        %v1217 = vld [vmem:[#allocation13 + $0x8] sm:$0xf]
        %v1218 = vld [vmem:[#allocation13 + $0xc] sm:$0xf]
        %v1219 = vld [vmem:[#allocation13 + $0x10] sm:$0xf]
        %v1220 = vld [vmem:[#allocation13 + $0x14] sm:$0xf]
        %v1221 = vld [vmem:[#allocation13 + $0x18] sm:$0xf]
        %v1222 = vld [vmem:[#allocation13 + $0x1c] sm:$0xf]
        %v1223 = vld [vmem:[#allocation13 + $0x20] sm:$0xf]
        %v1224 = vld [vmem:[#allocation13 + $0x24] sm:$0xf]
        %v1225 = vld [vmem:[#allocation13 + $0x28] sm:$0xf]
        %v1226 = vld [vmem:[#allocation13 + $0x2c] sm:$0xf]
        %v1227 = vld [vmem:[#allocation13 + $0x30] sm:$0xf]
        %v1228 = vld [vmem:[#allocation13 + $0x34] sm:$0xf]
        %v1229 = vld [vmem:[#allocation13 + $0x38] sm:$0xf]
        %v1230 = vld [vmem:[#allocation13 + $0x3c] sm:$0xf]
        %v1231 = vld [vmem:[%s9] sm:$0x1]
        %v1233 = vperm.slane %v1231, 0
        %v1251 = vunpack.c.l.b16 %v1215
        %v1252 = vunpack.c.l.b16 %v1216
        %v1253 = vunpack.c.l.b16 %v1217
        %v1254 = vunpack.c.l.b16 %v1218
        %v1255 = vunpack.c.l.b16 %v1219
        %v1256 = vunpack.c.l.b16 %v1220
        %v1257 = vunpack.c.l.b16 %v1221
        %v1258 = vunpack.c.l.b16 %v1222
        %v1259 = vunpack.c.l.b16 %v1223
        %v1260 = vunpack.c.l.b16 %v1224
        %v1261 = vunpack.c.l.b16 %v1225
        %v1262 = vunpack.c.l.b16 %v1226
        %v1263 = vunpack.c.l.b16 %v1227
        %v1264 = vunpack.c.l.b16 %v1228
        %v1265 = vunpack.c.l.b16 %v1229
        %v1266 = vunpack.c.l.b16 %v1230
        %v1267 = vpack.c.b16 %v1252, %v1251
        %v1268 = vpack.c.b16 %v1254, %v1253
        %v1269 = vpack.c.b16 %v1256, %v1255
        %v1270 = vpack.c.b16 %v1258, %v1257
        %v1271 = vpack.c.b16 %v1260, %v1259
        %v1272 = vpack.c.b16 %v1262, %v1261
        %v1273 = vpack.c.b16 %v1264, %v1263
        %v1274 = vpack.c.b16 %v1266, %v1265
        %1283 = vmatpush.bf16.msra.mxu0 %v1274
        %1284 = vmatpush.bf16.msra.mxu0 %v1273
        %1285 = vmatpush.bf16.msra.mxu0 %v1272
        %1286 = vmatpush.bf16.msra.mxu0 %v1271
        %1287 = vmatpush.bf16.msra.mxu0 %v1270
        %1288 = vmatpush.bf16.msra.mxu0 %v1269
        %1289 = vmatpush.bf16.msra.mxu0 %v1268
        %1290 = vmatpush.bf16.msra.mxu0 %v1267
        %1291 = vmatmul.bf16.gmra.mxu0 %v1214
        %v1292 = vpop.f32.mrf.mxu0
        %v1293 = vadd.f32 %v1233, %v1292
        %v1294 = vpop.f32.mrf.mxu0
        %1295 = vdwg.mxu0
        %v1296 = vadd.f32 %v1130, %v1293
        %v1297 = vld [vmem:[#allocation14] sm:$0x1]
        %v1298 = vld [vmem:[%s13] sm:$0x1]
        %1299 = vadd.xlane.f32.xlu0 %v1296
        %v1300 = vpop.xlane.xlu0 %1299
        %v1301 = vmul.f32 %v1300, 0.03125
        %v1302 = vmul.f32 %v1296, %v1296
        %1303 = vadd.xlane.f32.xlu0 %v1302
        %v1304 = vpop.xlane.xlu0 %1303
        %v1305 = vmul.f32 %v1304, 0.03125
        %v1306 = vmul.f32 %v1301, %v1301
        %v1307 = vsub.f32 %v1305, %v1306
        %v1308 = vsub.f32 %v1296, %v1301
        %v1309 = vadd.f32 %v1307, 1e-05
        %v1310 = vrsqrt.pop %v1309
        %v1311 = vmul.f32 %v1310, %v1309
        %v1312 = vmul.f32 %v1311, %v1310
        %v1313 = vmul.f32 0.5, %v1312
        %v1314 = vsub.f32 1.5, %v1313
        %v1315 = vmul.f32 %v1310, %v1314
        %vm1316 = vweird.f32 %v1309
        %vm1317 = vweird.f32 %v1310
        %vm1318 = vmor %vm1316, %vm1317
        %v1319 = vsel %vm1318, %v1310, %v1315
        %v1320 = vmul.f32 %v1308, %v1319
        %v1322 = vperm.slane %v1297, 0
        %v1324 = vmul.f32 %v1320, %v1322
        %v1326 = vperm.slane %v1298, 0
        %v1328 = vadd.f32 %v1324, %v1326
        %v1329 = vpack.c.bf16 %v1328, %v1328
        %s1330 = scalar_lea.vmem [#allocation7], 192
        %v1331 = vld [vmem:[%s1330] sm:$0xff]
        %v1332 = vld [vmem:[%s1330 + $0x8] sm:$0xf]
        %v1333 = vld [vmem:[%s1330 + $0xc] sm:$0xff]
        %v1334 = vld [vmem:[%s1330 + $0x14] sm:$0xf]
        %v1335 = vld [vmem:[%s1330 + $0x18] sm:$0xff]
        %v1336 = vld [vmem:[%s1330 + $0x20] sm:$0xf]
        %v1337 = vld [vmem:[%s1330 + $0x24] sm:$0xff]
        %v1338 = vld [vmem:[%s1330 + $0x2c] sm:$0xf]
        %v1339 = vld [vmem:[%s1330 + $0x30] sm:$0xff]
        %v1340 = vld [vmem:[%s1330 + $0x38] sm:$0xf]
        %v1341 = vld [vmem:[%s1330 + $0x3c] sm:$0xff]
        %v1342 = vld [vmem:[%s1330 + $0x44] sm:$0xf]
        %v1343 = vld [vmem:[%s1330 + $0x48] sm:$0xff]
        %v1344 = vld [vmem:[%s1330 + $0x50] sm:$0xf]
        %v1345 = vld [vmem:[%s1330 + $0x54] sm:$0xff]
        %v1346 = vld [vmem:[%s1330 + $0x5c] sm:$0xf]
        %v1347 = vld [vmem:[%s1330 + $0x60] sm:$0xff]
        %v1348 = vld [vmem:[%s1330 + $0x68] sm:$0xf]
        %v1349 = vld [vmem:[%s1330 + $0x6c] sm:$0xff]
        %v1350 = vld [vmem:[%s1330 + $0x74] sm:$0xf]
        %v1351 = vld [vmem:[%s1330 + $0x78] sm:$0xff]
        %v1352 = vld [vmem:[%s1330 + $0x80] sm:$0xf]
        %v1353 = vld [vmem:[%s1330 + $0x84] sm:$0xff]
        %v1354 = vld [vmem:[%s1330 + $0x8c] sm:$0xf]
        %v1355 = vld [vmem:[%s1330 + $0x90] sm:$0xff]
        %v1356 = vld [vmem:[%s1330 + $0x98] sm:$0xf]
        %v1357 = vld [vmem:[%s1330 + $0x9c] sm:$0xff]
        %v1358 = vld [vmem:[%s1330 + $0xa4] sm:$0xf]
        %v1359 = vld [vmem:[%s1330 + $0xa8] sm:$0xff]
        %v1360 = vld [vmem:[%s1330 + $0xb0] sm:$0xf]
        %v1361 = vld [vmem:[%s1330 + $0xb4] sm:$0xff]
        %v1362 = vld [vmem:[%s1330 + $0xbc] sm:$0xf]
        %s1363 = scalar_lea.vmem [#allocation8], 3
        %v1364 = vld [vmem:[%s1363] sm:$0x7]
        %v1366 = vperm.slane %v1364, 0
        %v1367 = vperm.slane %v1364, 1
        %v1368 = vperm.slane %v1364, 2
        %v1404 = vunpack.c.l.b16 %v1331
        %v1405 = vunpack.c.h.b16 %v1331
        %v1406 = vunpack.c.l.b16 %v1332
        %v1407 = vunpack.c.l.b16 %v1333
        %v1408 = vunpack.c.h.b16 %v1333
        %v1409 = vunpack.c.l.b16 %v1334
        %v1410 = vunpack.c.l.b16 %v1335
        %v1411 = vunpack.c.h.b16 %v1335
        %v1412 = vunpack.c.l.b16 %v1336
        %v1413 = vunpack.c.l.b16 %v1337
        %v1414 = vunpack.c.h.b16 %v1337
        %v1415 = vunpack.c.l.b16 %v1338
        %v1416 = vunpack.c.l.b16 %v1339
        %v1417 = vunpack.c.h.b16 %v1339
        %v1418 = vunpack.c.l.b16 %v1340
        %v1419 = vunpack.c.l.b16 %v1341
        %v1420 = vunpack.c.h.b16 %v1341
        %v1421 = vunpack.c.l.b16 %v1342
        %v1422 = vunpack.c.l.b16 %v1343
        %v1423 = vunpack.c.h.b16 %v1343
        %v1424 = vunpack.c.l.b16 %v1344
        %v1425 = vunpack.c.l.b16 %v1345
        %v1426 = vunpack.c.h.b16 %v1345
        %v1427 = vunpack.c.l.b16 %v1346
        %v1428 = vunpack.c.l.b16 %v1347
        %v1429 = vunpack.c.h.b16 %v1347
        %v1430 = vunpack.c.l.b16 %v1348
        %v1431 = vunpack.c.l.b16 %v1349
        %v1432 = vunpack.c.h.b16 %v1349
        %v1433 = vunpack.c.l.b16 %v1350
        %v1434 = vunpack.c.l.b16 %v1351
        %v1435 = vunpack.c.h.b16 %v1351
        %v1436 = vunpack.c.l.b16 %v1352
        %v1437 = vunpack.c.l.b16 %v1353
        %v1438 = vunpack.c.h.b16 %v1353
        %v1439 = vunpack.c.l.b16 %v1354
        %v1440 = vunpack.c.l.b16 %v1355
        %v1441 = vunpack.c.h.b16 %v1355
        %v1442 = vunpack.c.l.b16 %v1356
        %v1443 = vunpack.c.l.b16 %v1357
        %v1444 = vunpack.c.h.b16 %v1357
        %v1445 = vunpack.c.l.b16 %v1358
        %v1446 = vunpack.c.l.b16 %v1359
        %v1447 = vunpack.c.h.b16 %v1359
        %v1448 = vunpack.c.l.b16 %v1360
        %v1449 = vunpack.c.l.b16 %v1361
        %v1450 = vunpack.c.h.b16 %v1361
        %v1451 = vunpack.c.l.b16 %v1362
        %v1452 = vpack.c.b16 %v1407, %v1404
        %v1453 = vpack.c.b16 %v1408, %v1405
        %v1454 = vpack.c.b16 %v1409, %v1406
        %v1455 = vpack.c.b16 %v1413, %v1410
        %v1456 = vpack.c.b16 %v1414, %v1411
        %v1457 = vpack.c.b16 %v1415, %v1412
        %v1458 = vpack.c.b16 %v1419, %v1416
        %v1459 = vpack.c.b16 %v1420, %v1417
        %v1460 = vpack.c.b16 %v1421, %v1418
        %v1461 = vpack.c.b16 %v1425, %v1422
        %v1462 = vpack.c.b16 %v1426, %v1423
        %v1463 = vpack.c.b16 %v1427, %v1424
        %v1464 = vpack.c.b16 %v1431, %v1428
        %v1465 = vpack.c.b16 %v1432, %v1429
        %v1466 = vpack.c.b16 %v1433, %v1430
        %v1467 = vpack.c.b16 %v1437, %v1434
        %v1468 = vpack.c.b16 %v1438, %v1435
        %v1469 = vpack.c.b16 %v1439, %v1436
        %v1470 = vpack.c.b16 %v1443, %v1440
        %v1471 = vpack.c.b16 %v1444, %v1441
        %v1472 = vpack.c.b16 %v1445, %v1442
        %v1473 = vpack.c.b16 %v1449, %v1446
        %v1474 = vpack.c.b16 %v1450, %v1447
        %v1475 = vpack.c.b16 %v1451, %v1448
        %1500 = vmatpush.bf16.msra.mxu0 %v1473
        %1501 = vmatpush.bf16.msra.mxu0 %v1470
        %1502 = vmatpush.bf16.msra.mxu0 %v1467
        %1503 = vmatpush.bf16.msra.mxu0 %v1464
        %1504 = vmatpush.bf16.msra.mxu0 %v1461
        %1505 = vmatpush.bf16.msra.mxu0 %v1458
        %1506 = vmatpush.bf16.msra.mxu0 %v1455
        %1507 = vmatpush.bf16.msra.mxu0 %v1452
        %1508 = vmatmul.bf16.gmra.mxu0 %v1329
        %v1509 = vpop.f32.mrf.mxu0
        %v1510 = vadd.f32 %v1366, %v1509
        %v1511 = vpop.f32.mrf.mxu0
        %1512 = vdwg.mxu0
        %1513 = vmatpush.bf16.msra.mxu0 %v1474
        %1514 = vmatpush.bf16.msra.mxu0 %v1471
        %1515 = vmatpush.bf16.msra.mxu0 %v1468
        %1516 = vmatpush.bf16.msra.mxu0 %v1465
        %1517 = vmatpush.bf16.msra.mxu0 %v1462
        %1518 = vmatpush.bf16.msra.mxu0 %v1459
        %1519 = vmatpush.bf16.msra.mxu0 %v1456
        %1520 = vmatpush.bf16.msra.mxu0 %v1453
        %1521 = vmatmul.bf16.gmra.mxu0 %v1329
        %v1522 = vpop.f32.mrf.mxu0
        %v1523 = vadd.f32 %v1367, %v1522
        %v1524 = vpop.f32.mrf.mxu0
        %1525 = vdwg.mxu0
        %1526 = vmatpush.bf16.msra.mxu0 %v1475
        %1527 = vmatpush.bf16.msra.mxu0 %v1472
        %1528 = vmatpush.bf16.msra.mxu0 %v1469
        %1529 = vmatpush.bf16.msra.mxu0 %v1466
        %1530 = vmatpush.bf16.msra.mxu0 %v1463
        %1531 = vmatpush.bf16.msra.mxu0 %v1460
        %1532 = vmatpush.bf16.msra.mxu0 %v1457
        %1533 = vmatpush.bf16.msra.mxu0 %v1454
        %1534 = vmatmul.bf16.gmra.mxu0 %v1329
        %v1535 = vpop.f32.mrf.mxu0
        %v1536 = vadd.f32 %v1368, %v1535
        %v1537 = vpop.f32.mrf.mxu0
        %1538 = vdwg.mxu0
        %v1539 = vpack.c.bf16 %v1523, %v1510
        %v1540 = vpack.c.bf16 %v1536, %v1536
        %v1542 = vrot.slane %v1539, 4
        %v1544 = vsel %vm817, %v1539, 0
        %v1547 = vsel %vm817, %v1542, 0
        %1549 = vmatpush.bf16.xpose.msra.mxu0 0
        %1550 = vmatpush.bf16.xpose.msra.mxu0 0
        %1551 = vmatpush.bf16.xpose.msra.mxu0 0
        %1552 = vmatpush.bf16.xpose.msra.mxu0 0
        %1553 = vmatpush.bf16.xpose.msra.mxu0 0
        %1554 = vmatpush.bf16.xpose.msra.mxu0 0
        %1555 = vmatpush.bf16.xpose.msra.mxu0 0
        %1556 = vmatpush.bf16.xpose.msra.mxu0 %v1547
        %1557 = vmatmul.bf16.gmra.mxu0 %v1544
        %v1558 = vpop.f32.mrf.mxu0
        %v1559 = vadd.f32 0.0, %v1558
        %v1560 = vpop.f32.mrf.mxu0
        %1561 = vdwg.mxu0
        %v1562 = vsel %vm817, %v1559, -inf
        %1563 = vmax.xlane.f32.xlu0 %v1562
        %v1564 = vpop.xlane.xlu0 %1563
        %v1565 = vsub.f32 %v1559, %v1564
        %v1566 = vmul.f32 %v1565, 1.442695
        %v1567 = vpow.pop %v1566
        %v1568 = vsel %vm817, %v1567, 0.0
        %1569 = vadd.xlane.f32.xlu0 %v1568
        %v1570 = vpop.xlane.xlu0 %1569
        %v1571 = vrcp.pop %v1570
        %v1572 = vmul.f32 %v1567, %v1571
        %v1573 = vpack.c.bf16 %v1572, %v1572
        %v1575 = vsel %vm817, %v1573, 0
        %v1578 = vsel %vm852, %v1540, 0
        %1580 = vmatpush.bf16.msra.mxu0 0
        %1581 = vmatpush.bf16.msra.mxu0 0
        %1582 = vmatpush.bf16.msra.mxu0 0
        %1583 = vmatpush.bf16.msra.mxu0 0
        %1584 = vmatpush.bf16.msra.mxu0 0
        %1585 = vmatpush.bf16.msra.mxu0 0
        %1586 = vmatpush.bf16.msra.mxu0 0
        %1587 = vmatpush.bf16.msra.mxu0 %v1578
        %1588 = vmatmul.bf16.gmra.mxu0 %v1575
        %v1589 = vpop.f32.mrf.mxu0
        %v1590 = vadd.f32 0.0, %v1589
        %v1591 = vpop.f32.mrf.mxu0
        %1592 = vdwg.mxu0
        %v1593 = vunpack.c.l.b16 %v1539
        %v1594 = vpack.c.b16 %v1593, %v1593
        %1595 = vrot.lane.b32.xlu0 %v1594, 120
        %v1596 = vpop.permute.xlu0 %1595
        %v1597 = vunpack.c.l.b16 %v1542
        %v1598 = vpack.c.b16 %v1597, %v1597
        %1599 = vrot.lane.b32.xlu0 %v1598, 120
        %v1600 = vpop.permute.xlu0 %1599
        %v1602 = vsel %vm817, %v1596, 0
        %v1605 = vsel %vm817, %v1600, 0
        %1607 = vmatpush.bf16.xpose.msra.mxu0 0
        %1608 = vmatpush.bf16.xpose.msra.mxu0 0
        %1609 = vmatpush.bf16.xpose.msra.mxu0 0
        %1610 = vmatpush.bf16.xpose.msra.mxu0 0
        %1611 = vmatpush.bf16.xpose.msra.mxu0 0
        %1612 = vmatpush.bf16.xpose.msra.mxu0 0
        %1613 = vmatpush.bf16.xpose.msra.mxu0 0
        %1614 = vmatpush.bf16.xpose.msra.mxu0 %v1605
        %1615 = vmatmul.bf16.gmra.mxu0 %v1602
        %v1616 = vpop.f32.mrf.mxu0
        %v1617 = vadd.f32 0.0, %v1616
        %v1618 = vpop.f32.mrf.mxu0
        %1619 = vdwg.mxu0
        %v1620 = vsel %vm817, %v1617, -inf
        %1621 = vmax.xlane.f32.xlu0 %v1620
        %v1622 = vpop.xlane.xlu0 %1621
        %v1623 = vsub.f32 %v1617, %v1622
        %v1624 = vmul.f32 %v1623, 1.442695
        %v1625 = vpow.pop %v1624
        %v1626 = vsel %vm817, %v1625, 0.0
        %1627 = vadd.xlane.f32.xlu0 %v1626
        %v1628 = vpop.xlane.xlu0 %1627
        %v1629 = vrcp.pop %v1628
        %v1630 = vmul.f32 %v1625, %v1629
        %v1631 = vpack.c.bf16 %v1630, %v1630
        %v1633 = vunpack.c.l.b16 %v1540
        %v1634 = vpack.c.b16 %v1633, %v1633
        %1635 = vrot.lane.b32.xlu0 %v1634, 120
        %v1636 = vpop.permute.xlu0 %1635
        %v1638 = vsel %vm817, %v1631, 0
        %v1641 = vsel %vm852, %v1636, 0
        %1643 = vmatpush.bf16.msra.mxu0 0
        %1644 = vmatpush.bf16.msra.mxu0 0
        %1645 = vmatpush.bf16.msra.mxu0 0
        %1646 = vmatpush.bf16.msra.mxu0 0
        %1647 = vmatpush.bf16.msra.mxu0 0
        %1648 = vmatpush.bf16.msra.mxu0 0
        %1649 = vmatpush.bf16.msra.mxu0 0
        %1650 = vmatpush.bf16.msra.mxu0 %v1641
        %1651 = vmatmul.bf16.gmra.mxu0 %v1638
        %v1652 = vpop.f32.mrf.mxu0
        %v1653 = vadd.f32 0.0, %v1652
        %v1654 = vpop.f32.mrf.mxu0
        %1655 = vdwg.mxu0
        %1656 = vrot.lane.b32.xlu0 %v1594, 112
        %v1657 = vpop.permute.xlu0 %1656
        %1658 = vrot.lane.b32.xlu0 %v1598, 112
        %v1659 = vpop.permute.xlu0 %1658
        %v1661 = vsel %vm817, %v1657, 0
        %v1664 = vsel %vm817, %v1659, 0
        %1666 = vmatpush.bf16.xpose.msra.mxu0 0
        %1667 = vmatpush.bf16.xpose.msra.mxu0 0
        %1668 = vmatpush.bf16.xpose.msra.mxu0 0
        %1669 = vmatpush.bf16.xpose.msra.mxu0 0
        %1670 = vmatpush.bf16.xpose.msra.mxu0 0
        %1671 = vmatpush.bf16.xpose.msra.mxu0 0
        %1672 = vmatpush.bf16.xpose.msra.mxu0 0
        %1673 = vmatpush.bf16.xpose.msra.mxu0 %v1664
        %1674 = vmatmul.bf16.gmra.mxu0 %v1661
        %v1675 = vpop.f32.mrf.mxu0
        %v1676 = vadd.f32 0.0, %v1675
        %v1677 = vpop.f32.mrf.mxu0
        %1678 = vdwg.mxu0
        %v1679 = vsel %vm817, %v1676, -inf
        %1680 = vmax.xlane.f32.xlu0 %v1679
        %v1681 = vpop.xlane.xlu0 %1680
        %v1682 = vsub.f32 %v1676, %v1681
        %v1683 = vmul.f32 %v1682, 1.442695
        %v1684 = vpow.pop %v1683
        %v1685 = vsel %vm817, %v1684, 0.0
        %1686 = vadd.xlane.f32.xlu0 %v1685
        %v1687 = vpop.xlane.xlu0 %1686
        %v1688 = vrcp.pop %v1687
        %v1689 = vmul.f32 %v1684, %v1688
        %v1690 = vpack.c.bf16 %v1689, %v1689
        %1691 = vrot.lane.b32.xlu0 %v1634, 112
        %v1692 = vpop.permute.xlu0 %1691
        %v1694 = vsel %vm817, %v1690, 0
        %v1697 = vsel %vm852, %v1692, 0
        %1699 = vmatpush.bf16.msra.mxu0 0
        %1700 = vmatpush.bf16.msra.mxu0 0
        %1701 = vmatpush.bf16.msra.mxu0 0
        %1702 = vmatpush.bf16.msra.mxu0 0
        %1703 = vmatpush.bf16.msra.mxu0 0
        %1704 = vmatpush.bf16.msra.mxu0 0
        %1705 = vmatpush.bf16.msra.mxu0 0
        %1706 = vmatpush.bf16.msra.mxu0 %v1697
        %1707 = vmatmul.bf16.gmra.mxu0 %v1694
        %v1708 = vpop.f32.mrf.mxu0
        %v1709 = vadd.f32 0.0, %v1708
        %v1710 = vpop.f32.mrf.mxu0
        %1711 = vdwg.mxu0
        %1712 = vrot.lane.b32.xlu0 %v1594, 104
        %v1713 = vpop.permute.xlu0 %1712
        %1714 = vrot.lane.b32.xlu0 %v1598, 104
        %v1715 = vpop.permute.xlu0 %1714
        %v1717 = vsel %vm817, %v1713, 0
        %v1720 = vsel %vm817, %v1715, 0
        %1722 = vmatpush.bf16.xpose.msra.mxu0 0
        %1723 = vmatpush.bf16.xpose.msra.mxu0 0
        %1724 = vmatpush.bf16.xpose.msra.mxu0 0
        %1725 = vmatpush.bf16.xpose.msra.mxu0 0
        %1726 = vmatpush.bf16.xpose.msra.mxu0 0
        %1727 = vmatpush.bf16.xpose.msra.mxu0 0
        %1728 = vmatpush.bf16.xpose.msra.mxu0 0
        %1729 = vmatpush.bf16.xpose.msra.mxu0 %v1720
        %1730 = vmatmul.bf16.gmra.mxu0 %v1717
        %v1731 = vpop.f32.mrf.mxu0
        %v1732 = vadd.f32 0.0, %v1731
        %v1733 = vpop.f32.mrf.mxu0
        %1734 = vdwg.mxu0
        %v1735 = vsel %vm817, %v1732, -inf
        %1736 = vmax.xlane.f32.xlu0 %v1735
        %v1737 = vpop.xlane.xlu0 %1736
        %v1738 = vsub.f32 %v1732, %v1737
        %v1739 = vmul.f32 %v1738, 1.442695
        %v1740 = vpow.pop %v1739
        %v1741 = vsel %vm817, %v1740, 0.0
        %1742 = vadd.xlane.f32.xlu0 %v1741
        %v1743 = vpop.xlane.xlu0 %1742
        %v1744 = vrcp.pop %v1743
        %v1745 = vmul.f32 %v1740, %v1744
        %v1746 = vpack.c.bf16 %v1745, %v1745
        %1747 = vrot.lane.b32.xlu0 %v1634, 104
        %v1748 = vpop.permute.xlu0 %1747
        %v1750 = vsel %vm817, %v1746, 0
        %v1753 = vsel %vm852, %v1748, 0
        %1755 = vmatpush.bf16.msra.mxu0 0
        %1756 = vmatpush.bf16.msra.mxu0 0
        %1757 = vmatpush.bf16.msra.mxu0 0
        %1758 = vmatpush.bf16.msra.mxu0 0
        %1759 = vmatpush.bf16.msra.mxu0 0
        %1760 = vmatpush.bf16.msra.mxu0 0
        %1761 = vmatpush.bf16.msra.mxu0 0
        %1762 = vmatpush.bf16.msra.mxu0 %v1753
        %1763 = vmatmul.bf16.gmra.mxu0 %v1750
        %v1764 = vpop.f32.mrf.mxu0
        %v1765 = vadd.f32 0.0, %v1764
        %v1766 = vpop.f32.mrf.mxu0
        %1767 = vdwg.mxu0
        %1769 = vrot.lane.b32.xlu0 %v1653, 8
        %v1770 = vpop.permute.xlu0 %1769
        %1773 = vrot.lane.b32.xlu0 %v1709, 16
        %v1774 = vpop.permute.xlu0 %1773
        %1777 = vrot.lane.b32.xlu0 %v1765, 24
        %v1778 = vpop.permute.xlu0 %1777
        %v1780 = vsel %vm817, %v1590, %v1770
        %v1781 = vsel %vm1057, %v1780, %v1774
        %v1782 = vsel %vm1059, %v1781, %v1778
        %v1783 = vpack.c.bf16 %v1782, %v1782
        %s1784 = scalar_lea.vmem [#allocation10], 16
        %v1785 = vld [vmem:[%s1784] sm:$0xf]
        %v1786 = vld [vmem:[%s1784 + $0x4] sm:$0xf]
        %v1787 = vld [vmem:[%s1784 + $0x8] sm:$0xf]
        %v1788 = vld [vmem:[%s1784 + $0xc] sm:$0xf]
        %s1789 = scalar_lea.vmem %s5, 1
        %v1790 = vld [vmem:[%s1789] sm:$0x1]
        %v1792 = vperm.slane %v1790, 0
        %v1798 = vunpack.c.l.b16 %v1785
        %v1799 = vunpack.c.l.b16 %v1786
        %v1800 = vunpack.c.l.b16 %v1787
        %v1801 = vunpack.c.l.b16 %v1788
        %v1802 = vpack.c.b16 %v1799, %v1798
        %v1803 = vpack.c.b16 %v1801, %v1800
        %v1807 = vsel %vm603, %v1783, 0
        %1809 = vmatpush.bf16.msra.mxu0 0
        %1810 = vmatpush.bf16.msra.mxu0 0
        %1811 = vmatpush.bf16.msra.mxu0 0
        %1812 = vmatpush.bf16.msra.mxu0 0
        %1813 = vmatpush.bf16.msra.mxu0 0
        %1814 = vmatpush.bf16.msra.mxu0 0
        %1815 = vmatpush.bf16.msra.mxu0 %v1803
        %1816 = vmatpush.bf16.msra.mxu0 %v1802
        %1817 = vmatmul.bf16.gmra.mxu0 %v1807
        %v1818 = vpop.f32.mrf.mxu0
        %v1819 = vadd.f32 %v1792, %v1818
        %v1820 = vpop.f32.mrf.mxu0
        %1821 = vdwg.mxu0
        %v1822 = vadd.f32 %v1328, %v1819
        %s1823 = scalar_lea.vmem %s10, 1
        %v1824 = vld [vmem:[%s1823] sm:$0x1]
        %s1825 = scalar_lea.vmem %s11, 1
        %v1826 = vld [vmem:[%s1825] sm:$0x1]
        %1827 = vadd.xlane.f32.xlu0 %v1822
        %v1828 = vpop.xlane.xlu0 %1827
        %v1829 = vmul.f32 %v1828, 0.03125
        %v1830 = vmul.f32 %v1822, %v1822
        %1831 = vadd.xlane.f32.xlu0 %v1830
        %v1832 = vpop.xlane.xlu0 %1831
        %v1833 = vmul.f32 %v1832, 0.03125
        %v1834 = vmul.f32 %v1829, %v1829
        %v1835 = vsub.f32 %v1833, %v1834
        %v1836 = vsub.f32 %v1822, %v1829
        %v1837 = vadd.f32 %v1835, 1e-05
        %v1838 = vrsqrt.pop %v1837
        %v1839 = vmul.f32 %v1838, %v1837
        %v1840 = vmul.f32 %v1839, %v1838
        %v1841 = vmul.f32 0.5, %v1840
        %v1842 = vsub.f32 1.5, %v1841
        %v1843 = vmul.f32 %v1838, %v1842
        %vm1844 = vweird.f32 %v1837
        %vm1845 = vweird.f32 %v1838
        %vm1846 = vmor %vm1844, %vm1845
        %v1847 = vsel %vm1846, %v1838, %v1843
        %v1848 = vmul.f32 %v1836, %v1847
        %v1850 = vperm.slane %v1824, 0
        %v1852 = vmul.f32 %v1848, %v1850
        %v1854 = vperm.slane %v1826, 0
        %v1856 = vadd.f32 %v1852, %v1854
        %v1857 = vpack.c.bf16 %v1856, %v1856
        %s1858 = scalar_lea.vmem [#allocation11], 64
        %v1859 = vld [vmem:[%s1858] sm:$0xf]
        %v1860 = vld [vmem:[%s1858 + $0x4] sm:$0xf]
        %v1861 = vld [vmem:[%s1858 + $0x8] sm:$0xf]
        %v1862 = vld [vmem:[%s1858 + $0xc] sm:$0xf]
        %v1863 = vld [vmem:[%s1858 + $0x10] sm:$0xf]
        %v1864 = vld [vmem:[%s1858 + $0x14] sm:$0xf]
        %v1865 = vld [vmem:[%s1858 + $0x18] sm:$0xf]
        %v1866 = vld [vmem:[%s1858 + $0x1c] sm:$0xf]
        %v1867 = vld [vmem:[%s1858 + $0x20] sm:$0xf]
        %v1868 = vld [vmem:[%s1858 + $0x24] sm:$0xf]
        %v1869 = vld [vmem:[%s1858 + $0x28] sm:$0xf]
        %v1870 = vld [vmem:[%s1858 + $0x2c] sm:$0xf]
        %v1871 = vld [vmem:[%s1858 + $0x30] sm:$0xf]
        %v1872 = vld [vmem:[%s1858 + $0x34] sm:$0xf]
        %v1873 = vld [vmem:[%s1858 + $0x38] sm:$0xf]
        %v1874 = vld [vmem:[%s1858 + $0x3c] sm:$0xf]
        %s1875 = scalar_lea.vmem %s7, 1
        %v1876 = vld [vmem:[%s1875] sm:$0x1]
        %v1878 = vperm.slane %v1876, 0
        %v1896 = vunpack.c.l.b16 %v1859
        %v1897 = vunpack.c.l.b16 %v1860
        %v1898 = vunpack.c.l.b16 %v1861
        %v1899 = vunpack.c.l.b16 %v1862
        %v1900 = vunpack.c.l.b16 %v1863
        %v1901 = vunpack.c.l.b16 %v1864
        %v1902 = vunpack.c.l.b16 %v1865
        %v1903 = vunpack.c.l.b16 %v1866
        %v1904 = vunpack.c.l.b16 %v1867
        %v1905 = vunpack.c.l.b16 %v1868
        %v1906 = vunpack.c.l.b16 %v1869
        %v1907 = vunpack.c.l.b16 %v1870
        %v1908 = vunpack.c.l.b16 %v1871
        %v1909 = vunpack.c.l.b16 %v1872
        %v1910 = vunpack.c.l.b16 %v1873
        %v1911 = vunpack.c.l.b16 %v1874
        %v1912 = vpack.c.b16 %v1897, %v1896
        %v1913 = vpack.c.b16 %v1899, %v1898
        %v1914 = vpack.c.b16 %v1901, %v1900
        %v1915 = vpack.c.b16 %v1903, %v1902
        %v1916 = vpack.c.b16 %v1905, %v1904
        %v1917 = vpack.c.b16 %v1907, %v1906
        %v1918 = vpack.c.b16 %v1909, %v1908
        %v1919 = vpack.c.b16 %v1911, %v1910
        %1928 = vmatpush.bf16.msra.mxu0 %v1919
        %1929 = vmatpush.bf16.msra.mxu0 %v1918
        %1930 = vmatpush.bf16.msra.mxu0 %v1917
        %1931 = vmatpush.bf16.msra.mxu0 %v1916
        %1932 = vmatpush.bf16.msra.mxu0 %v1915
        %1933 = vmatpush.bf16.msra.mxu0 %v1914
        %1934 = vmatpush.bf16.msra.mxu0 %v1913
        %1935 = vmatpush.bf16.msra.mxu0 %v1912
        %1936 = vmatmul.bf16.gmra.mxu0 %v1857
        %v1937 = vpop.f32.mrf.mxu0
        %v1938 = vadd.f32 %v1878, %v1937
        %v1939 = vpop.f32.mrf.mxu0
        %1940 = vdwg.mxu0
        %v1941 = vmax.f32 %v1938, 0.0
        %v1942 = vpack.c.bf16 %v1941, %v1941
        %s1943 = scalar_lea.vmem [#allocation13], 64
        %v1944 = vld [vmem:[%s1943] sm:$0xf]
        %v1945 = vld [vmem:[%s1943 + $0x4] sm:$0xf]
        %v1946 = vld [vmem:[%s1943 + $0x8] sm:$0xf]
        %v1947 = vld [vmem:[%s1943 + $0xc] sm:$0xf]
        %v1948 = vld [vmem:[%s1943 + $0x10] sm:$0xf]
        %v1949 = vld [vmem:[%s1943 + $0x14] sm:$0xf]
        %v1950 = vld [vmem:[%s1943 + $0x18] sm:$0xf]
        %v1951 = vld [vmem:[%s1943 + $0x1c] sm:$0xf]
        %v1952 = vld [vmem:[%s1943 + $0x20] sm:$0xf]
        %v1953 = vld [vmem:[%s1943 + $0x24] sm:$0xf]
        %v1954 = vld [vmem:[%s1943 + $0x28] sm:$0xf]
        %v1955 = vld [vmem:[%s1943 + $0x2c] sm:$0xf]
        %v1956 = vld [vmem:[%s1943 + $0x30] sm:$0xf]
        %v1957 = vld [vmem:[%s1943 + $0x34] sm:$0xf]
        %v1958 = vld [vmem:[%s1943 + $0x38] sm:$0xf]
        %v1959 = vld [vmem:[%s1943 + $0x3c] sm:$0xf]
        %s1960 = scalar_lea.vmem %s9, 1
        %v1961 = vld [vmem:[%s1960] sm:$0x1]
        %v1963 = vperm.slane %v1961, 0
        %v1981 = vunpack.c.l.b16 %v1944
        %v1982 = vunpack.c.l.b16 %v1945
        %v1983 = vunpack.c.l.b16 %v1946
        %v1984 = vunpack.c.l.b16 %v1947
        %v1985 = vunpack.c.l.b16 %v1948
        %v1986 = vunpack.c.l.b16 %v1949
        %v1987 = vunpack.c.l.b16 %v1950
        %v1988 = vunpack.c.l.b16 %v1951
        %v1989 = vunpack.c.l.b16 %v1952
        %v1990 = vunpack.c.l.b16 %v1953
        %v1991 = vunpack.c.l.b16 %v1954
        %v1992 = vunpack.c.l.b16 %v1955
        %v1993 = vunpack.c.l.b16 %v1956
        %v1994 = vunpack.c.l.b16 %v1957
        %v1995 = vunpack.c.l.b16 %v1958
        %v1996 = vunpack.c.l.b16 %v1959
        %v1997 = vpack.c.b16 %v1982, %v1981
        %v1998 = vpack.c.b16 %v1984, %v1983
        %v1999 = vpack.c.b16 %v1986, %v1985
        %v2000 = vpack.c.b16 %v1988, %v1987
        %v2001 = vpack.c.b16 %v1990, %v1989
        %v2002 = vpack.c.b16 %v1992, %v1991
        %v2003 = vpack.c.b16 %v1994, %v1993
        %v2004 = vpack.c.b16 %v1996, %v1995
        %2013 = vmatpush.bf16.msra.mxu0 %v2004
        %2014 = vmatpush.bf16.msra.mxu0 %v2003
        %2015 = vmatpush.bf16.msra.mxu0 %v2002
        %2016 = vmatpush.bf16.msra.mxu0 %v2001
        %2017 = vmatpush.bf16.msra.mxu0 %v2000
        %2018 = vmatpush.bf16.msra.mxu0 %v1999
        %2019 = vmatpush.bf16.msra.mxu0 %v1998
        %2020 = vmatpush.bf16.msra.mxu0 %v1997
        %2021 = vmatmul.bf16.gmra.mxu0 %v1942
        %v2022 = vpop.f32.mrf.mxu0
        %v2023 = vadd.f32 %v1963, %v2022
        %v2024 = vpop.f32.mrf.mxu0
        %2025 = vdwg.mxu0
        %v2026 = vadd.f32 %v1856, %v2023
        %s2027 = scalar_lea.vmem [#allocation14], 1
        %v2028 = vld [vmem:[%s2027] sm:$0x1]
        %s2029 = scalar_lea.vmem %s13, 1
        %v2030 = vld [vmem:[%s2029] sm:$0x1]
        %2031 = vadd.xlane.f32.xlu0 %v2026
        %v2032 = vpop.xlane.xlu0 %2031
        %v2033 = vmul.f32 %v2032, 0.03125
        %v2034 = vmul.f32 %v2026, %v2026
        %2035 = vadd.xlane.f32.xlu0 %v2034
        %v2036 = vpop.xlane.xlu0 %2035
        %v2037 = vmul.f32 %v2036, 0.03125
        %v2038 = vmul.f32 %v2033, %v2033
        %v2039 = vsub.f32 %v2037, %v2038
        %v2040 = vsub.f32 %v2026, %v2033
        %v2041 = vadd.f32 %v2039, 1e-05
        %v2042 = vrsqrt.pop %v2041
        %v2043 = vmul.f32 %v2042, %v2041
        %v2044 = vmul.f32 %v2043, %v2042
        %v2045 = vmul.f32 0.5, %v2044
        %v2046 = vsub.f32 1.5, %v2045
        %v2047 = vmul.f32 %v2042, %v2046
        %vm2048 = vweird.f32 %v2041
        %vm2049 = vweird.f32 %v2042
        %vm2050 = vmor %vm2048, %vm2049
        %v2051 = vsel %vm2050, %v2042, %v2047
        %v2052 = vmul.f32 %v2040, %v2051
        %v2054 = vperm.slane %v2028, 0
        %v2056 = vmul.f32 %v2052, %v2054
        %v2058 = vperm.slane %v2030, 0
        %v2060 = vadd.f32 %v2056, %v2058
        %v2061 = vpack.c.bf16 %v2060, %v2060
        %2062 = vst [vmem:[%s598] sm:$0xf] %v2061
        %s2063 = sand.u32 %s342, 1
        %s2064 = scalar_lea.sflag [#allocation4], %s2063
        %s2065 = sand.u32 %s342, 1
        %s2066 = smul.addr %s2065, 4
        %s2067 = scalar_lea.vmem [#allocation16], %s2066
        // Predicated region
        $region109: #{tpu_custom_call.1} parent=75 // pred_check
          %p2068 = pneg %p352
        $region110: #{tpu_custom_call.1} parent=75 // pred_check_branch
          %2070 = sbr.rel (%p2068) target = $region112
        $region111: #{tpu_custom_call.1} parent=75 // pred_region
          %2072 = vsyncadd %s2064, 0
          %s2073 = smul.addr %s35, 4
          %s2074 = scalar_lea.hbm %s14, %s2073
          %s2076 = sshll.u32 %s2067, 4
          %s2077 = int_to_ptr.vmem [resolvable:$true] %s2076
          %s2078 = sshll.u32 %s2074, 4
          %s2079 = int_to_ptr.hbm [resolvable:$true] %s2078
          %2081 = dma.vmem_to_hbm [thread:$0]  %s2077, 64, %s2079, %s2064
        $region112: #{tpu_custom_call.1} parent=75 // pred_fallthru
          _
      $region76: #{tpu_custom_call.1} parent=5 // pred_fallthru
        _
      %p2082 = scmp.le.s32.totalorder 2, %s30
      // Predicated region
      $region113: #{tpu_custom_call.1} parent=5 // pred_check
        %p2083 = pneg %p2082
      $region114: #{tpu_custom_call.1} parent=5 // pred_check_branch
        %2085 = sbr.rel (%p2083) target = $region116
      $region115: #{tpu_custom_call.1} parent=5 // pred_region
        %s2086 = ssub.s32 %s30, 2
        // Predicated region
        $region117: #{tpu_custom_call.1} parent=115 // pred_check
          %p2087 = pneg %p358
        $region118: #{tpu_custom_call.1} parent=115 // pred_check_branch
          %2089 = sbr.rel (%p2087) target = $region120
        $region119: #{tpu_custom_call.1} parent=115 // pred_region
          %s2090 = sand.u32 %s343, 1
          %s2091 = scalar_lea.sflag [#allocation4], %s2090
          %s2092 = sand.u32 %s343, 1
          %s2093 = smul.addr %s2092, 4
          %s2094 = scalar_lea.vmem [#allocation16], %s2093
          %2096 = dma.done %s2091, 64
        $region120: #{tpu_custom_call.1} parent=115 // pred_fallthru
          _
      $region116: #{tpu_custom_call.1} parent=5 // pred_fallthru
        _
    $region6: #{tpu_custom_call.1} parent=1 // loop_footer
      %s34 = sadd.s32 1, %s30
    $region7: #{tpu_custom_call.1} parent=1 // loop_footer_branch
      %29 = sbr.rel target = $region3
    $region8: #{tpu_custom_call.1} parent=1 // loop_exit
      _
    %2097 = vsyncpa [#allocation3], 1
    %s2098 = scalar_lea.sflag [#allocation3], 1
    %2099 = vsyncpa %s2098, 1
    %2100 = vsyncpa [#allocation6], 1
    %2101 = vsyncpa [#allocation9], 1
    %2102 = vsyncpa [#allocation12], 1
    %2103 = vsyncpa [#allocation15], 1
    %2104 = vsyncpa [#allocation4], 1
    %s2105 = scalar_lea.sflag [#allocation4], 1
    %2106 = vsyncpa %s2105, 1

</llo_original>
